<compile_context>
chip_gen: v5e
topology: v5e:2x2
jax: 0.10.0
libtpu: 0.0.40
codegen_flags: <defaults>
</compile_context>

<pallas_src>
import functools

import jax
import jax.numpy as jnp
from jax import lax
from jax.experimental import pallas as pl
from jax.experimental.pallas import tpu as pltpu

_PADL = 8      # left zero-pad columns in the VMEM scratch (keeps interior stores 8-aligned)
_EPS = 1e-5    # nn.InstanceNorm2d default eps


def _resblocks_kernel(x_ref, w_ref, b_ref, o_ref, pad_ref, resid_ref, *, H, W, C):
    """One grid step = one (sample, conv-stage) pair.

    Stage 2*i   = first  Conv2dBlock of ResBlock i  (InstanceNorm + ReLU)
    Stage 2*i+1 = second Conv2dBlock of ResBlock i  (InstanceNorm, no act) + residual add
    """
    s = pl.program_id(1)
    n_stages = pl.num_programs(1)
    is_first_conv = (s % 2) == 0

    # ---- per-sample init (first stage of every sample) ---------------------
    @pl.when(s == 0)
    def _init():
        pad_ref[...] = jnp.zeros_like(pad_ref)          # zero border == conv zero padding
        x = x_ref[0]                                    # (H, W, C) f32
        resid_ref[...] = x
        pad_ref[1:1 + H, _PADL:_PADL + W, :] = x

    # ---- 3x3 / stride-1 conv as 9 shifted MXU matmuls -----------------------
    acc = jnp.zeros((H * W, C), jnp.float32)
    for ky in range(3):
        for kx in range(3):
            win = pad_ref[ky:ky + H, _PADL - 1 + kx:_PADL - 1 + kx + W, :]
            win = win.reshape(H * W, C).astype(jnp.bfloat16)   # free reshape (W % 8 == 0)
            acc = acc + jnp.dot(win, w_ref[0, ky, kx],          # (C, C) bf16 tap weight
                                preferred_element_type=jnp.float32)
    acc = acc + b_ref[0]                                        # bias (1, C), f32

    # ---- InstanceNorm2d(affine=False): per-channel stats over H*W ----------
    mean = jnp.mean(acc, axis=0, keepdims=True)
    cen = acc - mean
    var = jnp.mean(cen * cen, axis=0, keepdims=True)            # biased variance
    y = cen * lax.rsqrt(var + _EPS)

    # ReLU only after the first conv of each ResBlock.
    y = jnp.where(is_first_conv, jnp.maximum(y, 0.0), y)
    y_hwc = y.reshape(H, W, C)

    # ---- stage epilogue ------------------------------------------------------
    @pl.when(is_first_conv)
    def _feed_second_conv():
        pad_ref[1:1 + H, _PADL:_PADL + W, :] = y_hwc

    @pl.when(jnp.logical_not(is_first_conv))
    def _end_of_resblock():
        out = resid_ref[...] + y_hwc                    # residual add (f32)
        resid_ref[...] = out                            # residual for the next block
        pad_ref[1:1 + H, _PADL:_PADL + W, :] = out      # input of the next block

        @pl.when(s == n_stages - 1)
        def _final_store():
            o_ref[0] = out.astype(o_ref.dtype)


def resblocks_forward(x_nhwc, conv_weights, conv_biases, *, num_blocks):
    """Forward of ResBlocks(num_blocks, dim=C, norm='in', activation='relu', pad_type='zero').

    x_nhwc:       (N, H, W, C) f32  (PyTorch NCHW input transposed to channels-last)
    conv_weights: (2*num_blocks, C, C, 3, 3) f32, PyTorch Conv2d layout (Cout, Cin, kh, kw)
    conv_biases:  (2*num_blocks, C) f32
    """
    N, H, W, C = x_nhwc.shape
    S = 2 * num_blocks
    assert conv_weights.shape == (S, C, C, 3, 3)
    assert conv_biases.shape == (S, C)
    # TODO(synk): pad C up to a multiple of 128 (and W to a multiple of 8) in the wrapper
    # for arbitrary model dims; demo shapes already satisfy this.
    assert C % 128 == 0 and W % 8 == 0, "use lane-dense channels (C % 128 == 0, W % 8 == 0)"

    # One-time parameter layout prep (lives at init time in a real model):
    # (stage, Cout, Cin, kh, kw) -> (stage, kh, kw, Cin, Cout), bf16 for the MXU.
    w_taps = jnp.transpose(conv_weights, (0, 3, 4, 2, 1)).astype(jnp.bfloat16)
    b2d = conv_biases.reshape(S, 1, C).astype(jnp.float32)

    kernel = functools.partial(_resblocks_kernel, H=H, W=W, C=C)

    flops = 2 * N * S * H * W * 9 * C * C
    bytes_accessed = int(2 * x_nhwc.size * x_nhwc.dtype.itemsize
                         + w_taps.size * 2 + b2d.size * 4)

    return pl.pallas_call(
        kernel,
        out_shape=jax.ShapeDtypeStruct((N, H, W, C), x_nhwc.dtype),
        grid_spec=pltpu.PrefetchScalarGridSpec(
            num_scalar_prefetch=0,
            grid=(N, S),                                             # (samples, conv stages)
            in_specs=[
                pl.BlockSpec((1, H, W, C), lambda n, s: (n, 0, 0, 0)),        # x
                pl.BlockSpec((1, 3, 3, C, C), lambda n, s: (s, 0, 0, 0, 0)),  # stage weights
                pl.BlockSpec((1, 1, C), lambda n, s: (s, 0, 0)),              # stage bias
            ],
            out_specs=pl.BlockSpec((1, H, W, C), lambda n, s: (n, 0, 0, 0)),
            scratch_shapes=[
                pltpu.VMEM((H + 2, W + 2 * _PADL, C), jnp.float32),  # zero-padded activation
                pltpu.VMEM((H, W, C), jnp.float32),                  # residual carry
            ],
        ),
        compiler_params=pltpu.CompilerParams(
            dimension_semantics=("parallel", "arbitrary"),  # samples across cores, stages sequential
            vmem_limit_bytes=32 * 1024 * 1024,
        ),
        cost_estimate=pl.CostEstimate(
            flops=flops, transcendentals=N * S * C, bytes_accessed=bytes_accessed),
    )(x_nhwc, w_taps, b2d)


def resblocks_reference(x, weights, biases, *, num_blocks, eps=_EPS):
    """Pure-JAX (XLA) reference with f32-exact matmuls, mirroring the PyTorch forward."""
    def conv3x3(h, w_oihw, b):
        w_hwio = jnp.transpose(w_oihw, (2, 3, 1, 0))
        y = lax.conv_general_dilated(
            h, w_hwio, window_strides=(1, 1), padding=((1, 1), (1, 1)),
            dimension_numbers=("NHWC", "HWIO", "NHWC"),
            precision=lax.Precision.HIGHEST)
        return y + b[None, None, None, :]

    def instance_norm(y):
        mean = jnp.mean(y, axis=(1, 2), keepdims=True)
        var = jnp.mean(jnp.square(y - mean), axis=(1, 2), keepdims=True)
        return (y - mean) * lax.rsqrt(var + eps)

    h = x
    for i in range(num_blocks):
        res = h
        y = jnp.maximum(instance_norm(conv3x3(h, weights[2 * i], biases[2 * i])), 0.0)
        z = instance_norm(conv3x3(y, weights[2 * i + 1], biases[2 * i + 1]))
        h = res + z
    return h


if __name__ == "__main__":
    key = jax.random.PRNGKey(0)
    k_x, k_w, k_b = jax.random.split(key, 3)

    num_blocks = 2
    N, H, W, C = 2, 16, 16, 128          # small but lane-dense demo shapes (NHWC)
    S = 2 * num_blocks

    x = jax.random.normal(k_x, (N, H, W, C), dtype=jnp.float32)
    bound = 1.0 / (C * 9) ** 0.5         # nn.Conv2d-like init scale (fan_in = C*3*3)
    weights = jax.random.uniform(k_w, (S, C, C, 3, 3), minval=-bound, maxval=bound,
                                 dtype=jnp.float32)
    biases = jax.random.uniform(k_b, (S, C), minval=-bound, maxval=bound,
                                dtype=jnp.float32)

    out = resblocks_forward(x, weights, biases, num_blocks=num_blocks)
    out = jax.block_until_ready(out)
    assert out.shape == (N, H, W, C)

    ref = resblocks_reference(x, weights, biases, num_blocks=num_blocks)
    diff = jnp.abs(out - ref)
    # Kernel feeds the MXU bf16 inputs (f32 accumulation / epilogue); reference is f32-exact,
    # so allow bf16-level slack. Semantic bugs (missing residual / wrong norm) are O(1) errors.
    assert float(jnp.max(diff)) < 7.5e-2, f"max abs err {float(jnp.max(diff))}"
    assert float(jnp.mean(diff)) < 1e-2, f"mean abs err {float(jnp.mean(diff))}"

    print("KERNEL_OK")
</pallas_src>

<mosaic_0001>
module attributes {stable_mosaic.version = 11 : i64} {
  func.func @_resblocks_kernel(%arg0: i32, %arg1: i32, %arg2: memref<1x16x16x128xf32, #tpu.memory_space<vmem>>, %arg3: memref<1x3x3x128x128xbf16, #tpu.memory_space<vmem>>, %arg4: memref<1x1x128xf32, #tpu.memory_space<vmem>>, %arg5: memref<1x16x16x128xf32, #tpu.memory_space<vmem>>, %arg6: memref<18x32x128xf32, #tpu.memory_space<vmem>>, %arg7: memref<16x16x128xf32, #tpu.memory_space<vmem>>) attributes {dimension_semantics = [#tpu.dimension_semantics<parallel>, #tpu.dimension_semantics<arbitrary>], iteration_bounds = array<i64: 2, 4>, scalar_prefetch = 0 : i64, scratch_operands = 2 : i64, tpu.core_type = #tpu.core_type<tc>, window_params = [{transform_indices = @transform_0, window_bounds = array<i64: 1, 16, 16, 128>}, {transform_indices = @transform_1, window_bounds = array<i64: 1, 3, 3, 128, 128>}, {transform_indices = @transform_2, window_bounds = array<i64: 1, 1, 128>}, {transform_indices = @transform_3, window_bounds = array<i64: 1, 16, 16, 128>}]} {
    %c2_i32 = arith.constant 2 : i32
    %c0_i32 = arith.constant 0 : i32
    %0 = arith.cmpi eq, %c2_i32, %c0_i32 : i32
    %c1_i32 = arith.constant 1 : i32
    %1 = arith.select %0, %c1_i32, %c2_i32 : i32
    %2 = arith.remsi %arg1, %1 : i32
    %c0_i32_0 = arith.constant 0 : i32
    %3 = arith.cmpi ne, %2, %c0_i32_0 : i32
    %c0_i32_1 = arith.constant 0 : i32
    %4 = arith.cmpi slt, %2, %c0_i32_1 : i32
    %c0_i32_2 = arith.constant 0 : i32
    %5 = arith.cmpi slt, %1, %c0_i32_2 : i32
    %6 = arith.xori %4, %5 : i1
    %7 = arith.andi %6, %3 : i1
    %8 = arith.addi %2, %1 : i32
    %9 = arith.select %7, %8, %2 : i32
    %c0_i32_3 = arith.constant 0 : i32
    %10 = arith.cmpi eq, %9, %c0_i32_3 : i32
    %c0_i32_4 = arith.constant 0 : i32
    %11 = arith.cmpi eq, %arg1, %c0_i32_4 : i32
    %12 = arith.extui %11 : i1 to i32
    %c0_i32_5 = arith.constant 0 : i32
    %13 = arith.cmpi ne, %12, %c0_i32_5 : i32
    scf.if %13 {
      %cst_92 = arith.constant 0.000000e+00 : f32
      %107 = vector.broadcast %cst_92 : f32 to vector<18x32x128xf32>
      %c0_93 = arith.constant 0 : index
      %c0_94 = arith.constant 0 : index
      %c0_95 = arith.constant 0 : index
      %108 = vector.load %arg6[%c0_93, %c0_94, %c0_95] : memref<18x32x128xf32, #tpu.memory_space<vmem>>, vector<18x32x128xf32>
      tpu.vector_store %arg6[%c0_93, %c0_94, %c0_95], %107 {strides = array<i32>} : memref<18x32x128xf32, #tpu.memory_space<vmem>>, vector<18x32x128xf32>,
      %c0_96 = arith.constant 0 : index
      %c0_97 = arith.constant 0 : index
      %c0_98 = arith.constant 0 : index
      %c0_99 = arith.constant 0 : index
      %109 = vector.load %arg2[%c0_96, %c0_97, %c0_98, %c0_99] : memref<1x16x16x128xf32, #tpu.memory_space<vmem>>, vector<1x16x16x128xf32>
      %110 = vector.shape_cast %109 : vector<1x16x16x128xf32> to vector<16x16x128xf32>
      %c0_100 = arith.constant 0 : index
      %c0_101 = arith.constant 0 : index
      %c0_102 = arith.constant 0 : index
      %111 = vector.load %arg7[%c0_100, %c0_101, %c0_102] : memref<16x16x128xf32, #tpu.memory_space<vmem>>, vector<16x16x128xf32>
      tpu.vector_store %arg7[%c0_100, %c0_101, %c0_102], %110 {strides = array<i32>} : memref<16x16x128xf32, #tpu.memory_space<vmem>>, vector<16x16x128xf32>,
      %c1_103 = arith.constant 1 : index
      %c8_104 = arith.constant 8 : index
      %c0_105 = arith.constant 0 : index
      %112 = vector.load %arg6[%c1_103, %c8_104, %c0_105] : memref<18x32x128xf32, #tpu.memory_space<vmem>>, vector<16x16x128xf32>
      tpu.vector_store %arg6[%c1_103, %c8_104, %c0_105], %110 {strides = array<i32>} : memref<18x32x128xf32, #tpu.memory_space<vmem>>, vector<16x16x128xf32>,
    } else {
    }
    %cst = arith.constant 0.000000e+00 : f32
    %14 = vector.broadcast %cst : f32 to vector<256x128xf32>
    %c0 = arith.constant 0 : index
    %c7 = arith.constant 7 : index
    %c0_6 = arith.constant 0 : index
    %15 = vector.load %arg6[%c0, %c7, %c0_6] : memref<18x32x128xf32, #tpu.memory_space<vmem>>, vector<16x16x128xf32>
    %16 = vector.shape_cast %15 : vector<16x16x128xf32> to vector<256x128xf32>
    %17 = arith.truncf %16 : vector<256x128xf32> to vector<256x128xbf16>
    %c0_7 = arith.constant 0 : index
    %c0_8 = arith.constant 0 : index
    %c0_9 = arith.constant 0 : index
    %c0_10 = arith.constant 0 : index
    %c0_11 = arith.constant 0 : index
    %18 = vector.load %arg3[%c0_7, %c0_8, %c0_9, %c0_10, %c0_11] : memref<1x3x3x128x128xbf16, #tpu.memory_space<vmem>>, vector<1x1x1x128x128xbf16>
    %19 = vector.shape_cast %18 : vector<1x1x1x128x128xbf16> to vector<128x128xbf16>
    %cst_12 = arith.constant dense<0.000000e+00> : vector<256x128xf32>
    %20 = tpu.matmul %17, %19, %cst_12 {dimension_numbers = #tpu.dot_dimension_numbers<[1], [0], [0], [1], [0, 0, 1, 1], [], []>} : vector<256x128xbf16>, vector<128x128xbf16>, vector<256x128xf32> -> vector<256x128xf32>
    %21 = arith.addf %14, %20 : vector<256x128xf32>
    %c0_13 = arith.constant 0 : index
    %c8 = arith.constant 8 : index
    %c0_14 = arith.constant 0 : index
    %22 = vector.load %arg6[%c0_13, %c8, %c0_14] : memref<18x32x128xf32, #tpu.memory_space<vmem>>, vector<16x16x128xf32>
    %23 = vector.shape_cast %22 : vector<16x16x128xf32> to vector<256x128xf32>
    %24 = arith.truncf %23 : vector<256x128xf32> to vector<256x128xbf16>
    %c0_15 = arith.constant 0 : index
    %c0_16 = arith.constant 0 : index
    %c1 = arith.constant 1 : index
    %c0_17 = arith.constant 0 : index
    %c0_18 = arith.constant 0 : index
    %25 = vector.load %arg3[%c0_15, %c0_16, %c1, %c0_17, %c0_18] : memref<1x3x3x128x128xbf16, #tpu.memory_space<vmem>>, vector<1x1x1x128x128xbf16>
    %26 = vector.shape_cast %25 : vector<1x1x1x128x128xbf16> to vector<128x128xbf16>
    %cst_19 = arith.constant dense<0.000000e+00> : vector<256x128xf32>
    %27 = tpu.matmul %24, %26, %cst_19 {dimension_numbers = #tpu.dot_dimension_numbers<[1], [0], [0], [1], [0, 0, 1, 1], [], []>} : vector<256x128xbf16>, vector<128x128xbf16>, vector<256x128xf32> -> vector<256x128xf32>
    %28 = arith.addf %21, %27 : vector<256x128xf32>
    %c0_20 = arith.constant 0 : index
    %c9 = arith.constant 9 : index
    %c0_21 = arith.constant 0 : index
    %29 = vector.load %arg6[%c0_20, %c9, %c0_21] : memref<18x32x128xf32, #tpu.memory_space<vmem>>, vector<16x16x128xf32>
    %30 = vector.shape_cast %29 : vector<16x16x128xf32> to vector<256x128xf32>
    %31 = arith.truncf %30 : vector<256x128xf32> to vector<256x128xbf16>
    %c0_22 = arith.constant 0 : index
    %c0_23 = arith.constant 0 : index
    %c2 = arith.constant 2 : index
    %c0_24 = arith.constant 0 : index
    %c0_25 = arith.constant 0 : index
    %32 = vector.load %arg3[%c0_22, %c0_23, %c2, %c0_24, %c0_25] : memref<1x3x3x128x128xbf16, #tpu.memory_space<vmem>>, vector<1x1x1x128x128xbf16>
    %33 = vector.shape_cast %32 : vector<1x1x1x128x128xbf16> to vector<128x128xbf16>
    %cst_26 = arith.constant dense<0.000000e+00> : vector<256x128xf32>
    %34 = tpu.matmul %31, %33, %cst_26 {dimension_numbers = #tpu.dot_dimension_numbers<[1], [0], [0], [1], [0, 0, 1, 1], [], []>} : vector<256x128xbf16>, vector<128x128xbf16>, vector<256x128xf32> -> vector<256x128xf32>
    %35 = arith.addf %28, %34 : vector<256x128xf32>
    %c1_27 = arith.constant 1 : index
    %c7_28 = arith.constant 7 : index
    %c0_29 = arith.constant 0 : index
    %36 = vector.load %arg6[%c1_27, %c7_28, %c0_29] : memref<18x32x128xf32, #tpu.memory_space<vmem>>, vector<16x16x128xf32>
    %37 = vector.shape_cast %36 : vector<16x16x128xf32> to vector<256x128xf32>
    %38 = arith.truncf %37 : vector<256x128xf32> to vector<256x128xbf16>
    %c0_30 = arith.constant 0 : index
    %c1_31 = arith.constant 1 : index
    %c0_32 = arith.constant 0 : index
    %c0_33 = arith.constant 0 : index
    %c0_34 = arith.constant 0 : index
    %39 = vector.load %arg3[%c0_30, %c1_31, %c0_32, %c0_33, %c0_34] : memref<1x3x3x128x128xbf16, #tpu.memory_space<vmem>>, vector<1x1x1x128x128xbf16>
    %40 = vector.shape_cast %39 : vector<1x1x1x128x128xbf16> to vector<128x128xbf16>
    %cst_35 = arith.constant dense<0.000000e+00> : vector<256x128xf32>
    %41 = tpu.matmul %38, %40, %cst_35 {dimension_numbers = #tpu.dot_dimension_numbers<[1], [0], [0], [1], [0, 0, 1, 1], [], []>} : vector<256x128xbf16>, vector<128x128xbf16>, vector<256x128xf32> -> vector<256x128xf32>
    %42 = arith.addf %35, %41 : vector<256x128xf32>
    %c1_36 = arith.constant 1 : index
    %c8_37 = arith.constant 8 : index
    %c0_38 = arith.constant 0 : index
    %43 = vector.load %arg6[%c1_36, %c8_37, %c0_38] : memref<18x32x128xf32, #tpu.memory_space<vmem>>, vector<16x16x128xf32>
    %44 = vector.shape_cast %43 : vector<16x16x128xf32> to vector<256x128xf32>
    %45 = arith.truncf %44 : vector<256x128xf32> to vector<256x128xbf16>
    %c0_39 = arith.constant 0 : index
    %c1_40 = arith.constant 1 : index
    %c1_41 = arith.constant 1 : index
    %c0_42 = arith.constant 0 : index
    %c0_43 = arith.constant 0 : index
    %46 = vector.load %arg3[%c0_39, %c1_40, %c1_41, %c0_42, %c0_43] : memref<1x3x3x128x128xbf16, #tpu.memory_space<vmem>>, vector<1x1x1x128x128xbf16>
    %47 = vector.shape_cast %46 : vector<1x1x1x128x128xbf16> to vector<128x128xbf16>
    %cst_44 = arith.constant dense<0.000000e+00> : vector<256x128xf32>
    %48 = tpu.matmul %45, %47, %cst_44 {dimension_numbers = #tpu.dot_dimension_numbers<[1], [0], [0], [1], [0, 0, 1, 1], [], []>} : vector<256x128xbf16>, vector<128x128xbf16>, vector<256x128xf32> -> vector<256x128xf32>
    %49 = arith.addf %42, %48 : vector<256x128xf32>
    %c1_45 = arith.constant 1 : index
    %c9_46 = arith.constant 9 : index
    %c0_47 = arith.constant 0 : index
    %50 = vector.load %arg6[%c1_45, %c9_46, %c0_47] : memref<18x32x128xf32, #tpu.memory_space<vmem>>, vector<16x16x128xf32>
    %51 = vector.shape_cast %50 : vector<16x16x128xf32> to vector<256x128xf32>
    %52 = arith.truncf %51 : vector<256x128xf32> to vector<256x128xbf16>
    %c0_48 = arith.constant 0 : index
    %c1_49 = arith.constant 1 : index
    %c2_50 = arith.constant 2 : index
    %c0_51 = arith.constant 0 : index
    %c0_52 = arith.constant 0 : index
    %53 = vector.load %arg3[%c0_48, %c1_49, %c2_50, %c0_51, %c0_52] : memref<1x3x3x128x128xbf16, #tpu.memory_space<vmem>>, vector<1x1x1x128x128xbf16>
    %54 = vector.shape_cast %53 : vector<1x1x1x128x128xbf16> to vector<128x128xbf16>
    %cst_53 = arith.constant dense<0.000000e+00> : vector<256x128xf32>
    %55 = tpu.matmul %52, %54, %cst_53 {dimension_numbers = #tpu.dot_dimension_numbers<[1], [0], [0], [1], [0, 0, 1, 1], [], []>} : vector<256x128xbf16>, vector<128x128xbf16>, vector<256x128xf32> -> vector<256x128xf32>
    %56 = arith.addf %49, %55 : vector<256x128xf32>
    %c2_54 = arith.constant 2 : index
    %c7_55 = arith.constant 7 : index
    %c0_56 = arith.constant 0 : index
    %57 = vector.load %arg6[%c2_54, %c7_55, %c0_56] : memref<18x32x128xf32, #tpu.memory_space<vmem>>, vector<16x16x128xf32>
    %58 = vector.shape_cast %57 : vector<16x16x128xf32> to vector<256x128xf32>
    %59 = arith.truncf %58 : vector<256x128xf32> to vector<256x128xbf16>
    %c0_57 = arith.constant 0 : index
    %c2_58 = arith.constant 2 : index
    %c0_59 = arith.constant 0 : index
    %c0_60 = arith.constant 0 : index
    %c0_61 = arith.constant 0 : index
    %60 = vector.load %arg3[%c0_57, %c2_58, %c0_59, %c0_60, %c0_61] : memref<1x3x3x128x128xbf16, #tpu.memory_space<vmem>>, vector<1x1x1x128x128xbf16>
    %61 = vector.shape_cast %60 : vector<1x1x1x128x128xbf16> to vector<128x128xbf16>
    %cst_62 = arith.constant dense<0.000000e+00> : vector<256x128xf32>
    %62 = tpu.matmul %59, %61, %cst_62 {dimension_numbers = #tpu.dot_dimension_numbers<[1], [0], [0], [1], [0, 0, 1, 1], [], []>} : vector<256x128xbf16>, vector<128x128xbf16>, vector<256x128xf32> -> vector<256x128xf32>
    %63 = arith.addf %56, %62 : vector<256x128xf32>
    %c2_63 = arith.constant 2 : index
    %c8_64 = arith.constant 8 : index
    %c0_65 = arith.constant 0 : index
    %64 = vector.load %arg6[%c2_63, %c8_64, %c0_65] : memref<18x32x128xf32, #tpu.memory_space<vmem>>, vector<16x16x128xf32>
    %65 = vector.shape_cast %64 : vector<16x16x128xf32> to vector<256x128xf32>
    %66 = arith.truncf %65 : vector<256x128xf32> to vector<256x128xbf16>
    %c0_66 = arith.constant 0 : index
    %c2_67 = arith.constant 2 : index
    %c1_68 = arith.constant 1 : index
    %c0_69 = arith.constant 0 : index
    %c0_70 = arith.constant 0 : index
    %67 = vector.load %arg3[%c0_66, %c2_67, %c1_68, %c0_69, %c0_70] : memref<1x3x3x128x128xbf16, #tpu.memory_space<vmem>>, vector<1x1x1x128x128xbf16>
    %68 = vector.shape_cast %67 : vector<1x1x1x128x128xbf16> to vector<128x128xbf16>
    %cst_71 = arith.constant dense<0.000000e+00> : vector<256x128xf32>
    %69 = tpu.matmul %66, %68, %cst_71 {dimension_numbers = #tpu.dot_dimension_numbers<[1], [0], [0], [1], [0, 0, 1, 1], [], []>} : vector<256x128xbf16>, vector<128x128xbf16>, vector<256x128xf32> -> vector<256x128xf32>
    %70 = arith.addf %63, %69 : vector<256x128xf32>
    %c2_72 = arith.constant 2 : index
    %c9_73 = arith.constant 9 : index
    %c0_74 = arith.constant 0 : index
    %71 = vector.load %arg6[%c2_72, %c9_73, %c0_74] : memref<18x32x128xf32, #tpu.memory_space<vmem>>, vector<16x16x128xf32>
    %72 = vector.shape_cast %71 : vector<16x16x128xf32> to vector<256x128xf32>
    %73 = arith.truncf %72 : vector<256x128xf32> to vector<256x128xbf16>
    %c0_75 = arith.constant 0 : index
    %c2_76 = arith.constant 2 : index
    %c2_77 = arith.constant 2 : index
    %c0_78 = arith.constant 0 : index
    %c0_79 = arith.constant 0 : index
    %74 = vector.load %arg3[%c0_75, %c2_76, %c2_77, %c0_78, %c0_79] : memref<1x3x3x128x128xbf16, #tpu.memory_space<vmem>>, vector<1x1x1x128x128xbf16>
    %75 = vector.shape_cast %74 : vector<1x1x1x128x128xbf16> to vector<128x128xbf16>
    %cst_80 = arith.constant dense<0.000000e+00> : vector<256x128xf32>
    %76 = tpu.matmul %73, %75, %cst_80 {dimension_numbers = #tpu.dot_dimension_numbers<[1], [0], [0], [1], [0, 0, 1, 1], [], []>} : vector<256x128xbf16>, vector<128x128xbf16>, vector<256x128xf32> -> vector<256x128xf32>
    %77 = arith.addf %70, %76 : vector<256x128xf32>
    %c0_81 = arith.constant 0 : index
    %c0_82 = arith.constant 0 : index
    %c0_83 = arith.constant 0 : index
    %78 = vector.load %arg4[%c0_81, %c0_82, %c0_83] : memref<1x1x128xf32, #tpu.memory_space<vmem>>, vector<1x1x128xf32>
    %79 = vector.shape_cast %78 : vector<1x1x128xf32> to vector<1x128xf32>
    %80 = vector.broadcast %79 : vector<1x128xf32> to vector<256x128xf32>
    %81 = arith.addf %77, %80 : vector<256x128xf32>
    %cst_84 = arith.constant dense<0.000000e+00> : vector<128xf32>
    %82 = vector.multi_reduction <add>, %81, %cst_84 [0] : vector<256x128xf32> to vector<128xf32>
    %83 = vector.shape_cast %82 : vector<128xf32> to vector<1x128xf32>
    %cst_85 = arith.constant 2.560000e+02 : f32
    %84 = vector.broadcast %cst_85 : f32 to vector<1x128xf32>
    %85 = arith.divf %83, %84 : vector<1x128xf32>
    %86 = vector.broadcast %85 : vector<1x128xf32> to vector<256x128xf32>
    %87 = arith.subf %81, %86 : vector<256x128xf32>
    %88 = arith.mulf %87, %87 : vector<256x128xf32>
    %cst_86 = arith.constant dense<0.000000e+00> : vector<128xf32>
    %89 = vector.multi_reduction <add>, %88, %cst_86 [0] : vector<256x128xf32> to vector<128xf32>
    %90 = vector.shape_cast %89 : vector<128xf32> to vector<1x128xf32>
    %cst_87 = arith.constant 2.560000e+02 : f32
    %91 = vector.broadcast %cst_87 : f32 to vector<1x128xf32>
    %92 = arith.divf %90, %91 : vector<1x128xf32>
    %cst_88 = arith.constant 9.99999974E-6 : f32
    %93 = vector.broadcast %cst_88 : f32 to vector<1x128xf32>
    %94 = arith.addf %92, %93 : vector<1x128xf32>
    %95 = math.rsqrt %94 : vector<1x128xf32>
    %96 = vector.broadcast %95 : vector<1x128xf32> to vector<256x128xf32>
    %97 = arith.mulf %87, %96 : vector<256x128xf32>
    %cst_89 = arith.constant 0.000000e+00 : f32
    %98 = vector.broadcast %cst_89 : f32 to vector<256x128xf32>
    %99 = arith.maximumf %97, %98 : vector<256x128xf32>
    %100 = arith.select %10, %99, %97 : vector<256x128xf32>
    %101 = vector.shape_cast %100 : vector<256x128xf32> to vector<16x16x128xf32>
    %102 = arith.extui %10 : i1 to i32
    %c0_i32_90 = arith.constant 0 : i32
    %103 = arith.cmpi ne, %102, %c0_i32_90 : i32
    scf.if %103 {
      %c1_92 = arith.constant 1 : index
      %c8_93 = arith.constant 8 : index
      %c0_94 = arith.constant 0 : index
      %107 = vector.load %arg6[%c1_92, %c8_93, %c0_94] : memref<18x32x128xf32, #tpu.memory_space<vmem>>, vector<16x16x128xf32>
      tpu.vector_store %arg6[%c1_92, %c8_93, %c0_94], %101 {strides = array<i32>} : memref<18x32x128xf32, #tpu.memory_space<vmem>>, vector<16x16x128xf32>,
    } else {
    }
    %true = arith.constant true
    %104 = arith.xori %10, %true : i1
    %105 = arith.extui %104 : i1 to i32
    %c0_i32_91 = arith.constant 0 : i32
    %106 = arith.cmpi ne, %105, %c0_i32_91 : i32
    scf.if %106 {
      %c0_92 = arith.constant 0 : index
      %c0_93 = arith.constant 0 : index
      %c0_94 = arith.constant 0 : index
      %107 = vector.load %arg7[%c0_92, %c0_93, %c0_94] : memref<16x16x128xf32, #tpu.memory_space<vmem>>, vector<16x16x128xf32>
      %108 = arith.addf %107, %101 : vector<16x16x128xf32>
      %c0_95 = arith.constant 0 : index
      %c0_96 = arith.constant 0 : index
      %c0_97 = arith.constant 0 : index
      %109 = vector.load %arg7[%c0_95, %c0_96, %c0_97] : memref<16x16x128xf32, #tpu.memory_space<vmem>>, vector<16x16x128xf32>
      tpu.vector_store %arg7[%c0_95, %c0_96, %c0_97], %108 {strides = array<i32>} : memref<16x16x128xf32, #tpu.memory_space<vmem>>, vector<16x16x128xf32>,
      %c1_98 = arith.constant 1 : index
      %c8_99 = arith.constant 8 : index
      %c0_100 = arith.constant 0 : index
      %110 = vector.load %arg6[%c1_98, %c8_99, %c0_100] : memref<18x32x128xf32, #tpu.memory_space<vmem>>, vector<16x16x128xf32>
      tpu.vector_store %arg6[%c1_98, %c8_99, %c0_100], %108 {strides = array<i32>} : memref<18x32x128xf32, #tpu.memory_space<vmem>>, vector<16x16x128xf32>,
      %c3_i32 = arith.constant 3 : i32
      %111 = arith.cmpi eq, %arg1, %c3_i32 : i32
      %112 = arith.extui %111 : i1 to i32
      %c0_i32_101 = arith.constant 0 : i32
      %113 = arith.cmpi ne, %112, %c0_i32_101 : i32
      scf.if %113 {
        %c0_102 = arith.constant 0 : index
        %c0_103 = arith.constant 0 : index
        %c0_104 = arith.constant 0 : index
        %c0_105 = arith.constant 0 : index
        %114 = vector.load %arg5[%c0_102, %c0_103, %c0_104, %c0_105] : memref<1x16x16x128xf32, #tpu.memory_space<vmem>>, vector<1x16x16x128xf32>
        %115 = vector.shape_cast %114 : vector<1x16x16x128xf32> to vector<16x16x128xf32>
        %116 = vector.shape_cast %108 : vector<16x16x128xf32> to vector<1x16x16x128xf32>
        tpu.vector_store %arg5[%c0_102, %c0_103, %c0_104, %c0_105], %116 {strides = array<i32>} : memref<1x16x16x128xf32, #tpu.memory_space<vmem>>, vector<1x16x16x128xf32>,
      } else {
      }
    } else {
    }
    return
  }
  func.func @transform_0(%arg0: i32, %arg1: i32) -> (i32, i32, i32, i32) {
    %c0_i32 = arith.constant 0 : i32
    %c0_i32_0 = arith.constant 0 : i32
    %c0_i32_1 = arith.constant 0 : i32
    %c0_i32_2 = arith.constant 0 : i32
    return %arg0, %c0_i32, %c0_i32_0, %c0_i32_1 : i32, i32, i32, i32
  }
  func.func @transform_1(%arg0: i32, %arg1: i32) -> (i32, i32, i32, i32, i32) {
    %c0_i32 = arith.constant 0 : i32
    %c0_i32_0 = arith.constant 0 : i32
    %c0_i32_1 = arith.constant 0 : i32
    %c0_i32_2 = arith.constant 0 : i32
    %c0_i32_3 = arith.constant 0 : i32
    return %arg1, %c0_i32, %c0_i32_0, %c0_i32_1, %c0_i32_2 : i32, i32, i32, i32, i32
  }
  func.func @transform_2(%arg0: i32, %arg1: i32) -> (i32, i32, i32) {
    %c0_i32 = arith.constant 0 : i32
    %c0_i32_0 = arith.constant 0 : i32
    %c0_i32_1 = arith.constant 0 : i32
    return %arg1, %c0_i32, %c0_i32_0 : i32, i32, i32
  }
  func.func @transform_3(%arg0: i32, %arg1: i32) -> (i32, i32, i32, i32) {
    %c0_i32 = arith.constant 0 : i32
    %c0_i32_0 = arith.constant 0 : i32
    %c0_i32_1 = arith.constant 0 : i32
    %c0_i32_2 = arith.constant 0 : i32
    return %arg0, %c0_i32, %c0_i32_0, %c0_i32_1 : i32, i32, i32, i32
  }
}

</mosaic_0001>

<llo_original>
// kernel: tpu_custom_call.1
$region0: #{tpu_custom_call.1}
  #allocation0 [shape = 'u32[]', space=smem, size = 0x4, offset = 0x4, fixed_abs, tag = 'smem constant byte address 0x4 - core index']
  #allocation1 [shape = 'u32[72,128]{1,0:T(1,128)}', space=vmem, size = 0x9000, scoped, tag = 'internal scratch']
  #allocation2 [shape = 'f32[18,32,128]{2,1,0:T(8,128)}', space=vmem, size = 0x48000, scoped, tag = 'scratch operand']
  #allocation3 [shape = 'f32[16,16,128]{2,1,0:T(8,128)}', space=vmem, size = 0x20000, scoped, tag = 'scratch operand']
  %s0 = inlined_call_operand.hbm [shape: f32[2,16,16,128], index: 0, kind: input, shape index: {}]
  %s1 = inlined_call_operand.hbm [shape: bf16[4,3,3,128,128], index: 1, kind: input, shape index: {}]
  %s2 = inlined_call_operand.hbm [shape: f32[4,1,128], index: 2, kind: input, shape index: {}]
  %s3 = inlined_call_operand.hbm [shape: f32[2,16,16,128], index: 3, kind: output, shape index: {}]
  %s4 = sld [smem:[#allocation0]]
  $region73: #{tpu_custom_call.1} parent=0
    _
  %s6 = ssub.s32 1, %s4
  %s7 = scalar_select 0, %s6, %s4
  $region1: #{tpu_custom_call.1} parent=0
    #allocation4 [shape = 'u8[262144]{0}', space=vmem, size = 0x40000, scoped, tag = 'input window, operand 0']
    #allocation5 [shape = 's32[2]{0}', space=sflag, size = 0x8, scoped, tag = 'scoped memory for tpu_custom_call.1']
    #allocation6 [shape = 's32[2]{0}', space=sflag, size = 0x8, scoped, tag = 'scoped memory for tpu_custom_call.1']
    #allocation7 [shape = 'u8[589824]{0}', space=vmem, size = 0x90000, scoped, tag = 'input window, operand 1']
    #allocation8 [shape = 's32[2]{0}', space=sflag, size = 0x8, scoped, tag = 'scoped memory for tpu_custom_call.1']
    #allocation9 [shape = 'u8[1024]{0}', space=vmem, size = 0x400, scoped, tag = 'input window, operand 2']
    #allocation10 [shape = 'u8[262144]{0}', space=vmem, size = 0x40000, scoped, tag = 'output window, operand 0']
    %8 = vsyncpa [#allocation5], 0
    %s9 = scalar_lea.sflag [#allocation5], 1
    %10 = vsyncpa %s9, 0
    %11 = vsyncpa [#allocation8], 0
    %s12 = scalar_lea.sflag [#allocation8], 1
    %13 = vsyncpa %s12, 0
    %14 = vsyncpa [#allocation6], 0
    %s15 = scalar_lea.sflag [#allocation6], 1
    %16 = vsyncpa %s15, 0
    loop: start=0, step=1, limit=10
    $region2: #{tpu_custom_call.1} parent=1 // loop_pre_header
      _
    $region3: #{tpu_custom_call.1} parent=1 // loop_header
      %s18 = sphi 0, %s22
      %p19 = scmp.ge.s32.totalorder %s18, 10
      %s25 = sphi 0, %s37
      %s26 = sphi 0, %s33
      %s27 = sphi 0, %s25
      %s28 = sphi 0, %s26
      %s29 = sphi 0, %s27
      %s30 = sphi 0, %s28
      %s40 = sphi 0, %s42
      %s43 = sphi 0, %s40
      %s44 = sphi 0, %s43
      %s60 = sphi 0, %s44
      %s66 = sphi 0, %s68
      %s69 = sphi 0, %s66
      %s70 = sphi 0, %s69
      %s86 = sphi 0, %s70
      %s92 = sphi 0, %s94
      %s95 = sphi 0, %s92
      %s96 = sphi 0, %s95
      %s112 = sphi 0, %s96
      %s118 = sphi 0, %s120
      %s121 = sphi 0, %s118
      %s122 = sphi 0, %s121
      %s138 = sphi 0, %s122
    $region4: #{tpu_custom_call.1} parent=1 // loop_header_branch
      %21 = sbr.rel (%p19) target = $region8
    $region5: #{tpu_custom_call.1} parent=1 // loop_body
      %s23 = ssub.s32 %s18, 1
      %s24 = ssub.s32 %s18, 2
      %s31 = sadd.s32 1, %s26
      %p32 = scmp.ge.s32.totalorder %s31, 4
      %s33 = scalar_select %p32, 0, %s31
      %s34 = sadd.s32 1, %s25
      %s35 = scalar_select %p32, %s34, %s25
      %p36 = scmp.ge.s32.totalorder %s35, 2
      %s37 = scalar_select %p36, 0, %s35
      %s38 = ssub.s32 %s25, %s37
      %p39 = scmp.eq.s32.totalorder %s38, 0
      %s41 = sadd.s32 %s40, 1
      %s42 = scalar_select %p39, %s40, %s41
      %p45 = pneg %p39
      %p46 = scmp.eq.s32.totalorder %s18, 7
      %p47 = por %p45, %p46
      %p48 = scmp.ne.s32.totalorder %s40, %s43
      %p49 = scmp.eq.s32.totalorder %s18, 0
      %p50 = por %p48, %p49
      %p51 = scmp.ne.s32.totalorder %s40, %s43
      %p52 = scmp.eq.s32.totalorder %s23, 7
      %p53 = por %p51, %p52
      %p54 = scmp.ne.s32.totalorder %s43, %s44
      %p55 = scmp.eq.s32.totalorder %s23, 0
      %p56 = por %p54, %p55
      %p57 = scmp.ne.s32.totalorder %s43, %s44
      %p58 = scmp.eq.s32.totalorder %s24, 7
      %p59 = por %p57, %p58
      %p61 = scmp.ne.s32.totalorder %s44, %s60
      %p62 = scmp.eq.s32.totalorder %s24, 0
      %p63 = por %p61, %p62
      %s64 = ssub.s32 %s26, %s33
      %p65 = scmp.eq.s32.totalorder %s64, 0
      %s67 = sadd.s32 %s66, 1
      %s68 = scalar_select %p65, %s66, %s67
      %p71 = pneg %p65
      %p72 = scmp.eq.s32.totalorder %s18, 7
      %p73 = por %p71, %p72
      %p74 = scmp.ne.s32.totalorder %s66, %s69
      %p75 = scmp.eq.s32.totalorder %s18, 0
      %p76 = por %p74, %p75
      %p77 = scmp.ne.s32.totalorder %s66, %s69
      %p78 = scmp.eq.s32.totalorder %s23, 7
      %p79 = por %p77, %p78
      %p80 = scmp.ne.s32.totalorder %s69, %s70
      %p81 = scmp.eq.s32.totalorder %s23, 0
      %p82 = por %p80, %p81
      %p83 = scmp.ne.s32.totalorder %s69, %s70
      %p84 = scmp.eq.s32.totalorder %s24, 7
      %p85 = por %p83, %p84
      %p87 = scmp.ne.s32.totalorder %s70, %s86
      %p88 = scmp.eq.s32.totalorder %s24, 0
      %p89 = por %p87, %p88
      %s90 = ssub.s32 %s26, %s33
      %p91 = scmp.eq.s32.totalorder %s90, 0
      %s93 = sadd.s32 %s92, 1
      %s94 = scalar_select %p91, %s92, %s93
      %p97 = pneg %p91
      %p98 = scmp.eq.s32.totalorder %s18, 7
      %p99 = por %p97, %p98
      %p100 = scmp.ne.s32.totalorder %s92, %s95
      %p101 = scmp.eq.s32.totalorder %s18, 0
      %p102 = por %p100, %p101
      %p103 = scmp.ne.s32.totalorder %s92, %s95
      %p104 = scmp.eq.s32.totalorder %s23, 7
      %p105 = por %p103, %p104
      %p106 = scmp.ne.s32.totalorder %s95, %s96
      %p107 = scmp.eq.s32.totalorder %s23, 0
      %p108 = por %p106, %p107
      %p109 = scmp.ne.s32.totalorder %s95, %s96
      %p110 = scmp.eq.s32.totalorder %s24, 7
      %p111 = por %p109, %p110
      %p113 = scmp.ne.s32.totalorder %s96, %s112
      %p114 = scmp.eq.s32.totalorder %s24, 0
      %p115 = por %p113, %p114
      %s116 = ssub.s32 %s25, %s37
      %p117 = scmp.eq.s32.totalorder %s116, 0
      %s119 = sadd.s32 %s118, 1
      %s120 = scalar_select %p117, %s118, %s119
      %p123 = pneg %p117
      %p124 = scmp.eq.s32.totalorder %s18, 7
      %p125 = por %p123, %p124
      %p126 = scmp.ne.s32.totalorder %s118, %s121
      %p127 = scmp.eq.s32.totalorder %s18, 0
      %p128 = por %p126, %p127
      %p129 = scmp.ne.s32.totalorder %s118, %s121
      %p130 = scmp.eq.s32.totalorder %s23, 7
      %p131 = por %p129, %p130
      %p132 = scmp.ne.s32.totalorder %s121, %s122
      %p133 = scmp.eq.s32.totalorder %s23, 0
      %p134 = por %p132, %p133
      %p135 = scmp.ne.s32.totalorder %s121, %s122
      %p136 = scmp.eq.s32.totalorder %s24, 7
      %p137 = por %p135, %p136
      %p139 = scmp.ne.s32.totalorder %s122, %s138
      %p140 = scmp.eq.s32.totalorder %s24, 0
      %p141 = por %p139, %p140
      %p142 = scmp.le.s32.totalorder 1, %s18
      %p143 = scmp.lt.s32.totalorder %s18, 9
      %p144 = pnand %p142, %p143
      %p145 = pneg %p144
      // Predicated region
      $region9: #{tpu_custom_call.1} parent=5 // pred_check
        _
      $region10: #{tpu_custom_call.1} parent=5 // pred_check_branch
        %147 = sbr.rel (%p144) target = $region12
      $region11: #{tpu_custom_call.1} parent=5 // pred_region
        %s148 = ssub.s32 %s18, 1
      $region12: #{tpu_custom_call.1} parent=5 // pred_fallthru
        _
      %p149 = scmp.lt.s32.totalorder %s18, 8
      // Predicated region
      $region13: #{tpu_custom_call.1} parent=5 // pred_check
        %p150 = pneg %p149
      $region14: #{tpu_custom_call.1} parent=5 // pred_check_branch
        %152 = sbr.rel (%p150) target = $region16
      $region15: #{tpu_custom_call.1} parent=5 // pred_region
        // Predicated region
        $region17: #{tpu_custom_call.1} parent=15 // pred_check
          %p153 = pneg %p50
        $region18: #{tpu_custom_call.1} parent=15 // pred_check_branch
          %155 = sbr.rel (%p153) target = $region20
        $region19: #{tpu_custom_call.1} parent=15 // pred_region
          %s156 = sand.u32 %s40, 1
          %s157 = scalar_lea.sflag [#allocation5], %s156
          %s158 = sand.u32 %s40, 1
          %s159 = smul.addr %s158, 256
          %s160 = scalar_lea.vmem [#allocation4], %s159
          %162 = vsyncadd %s157, 0
          %s163 = smul.addr %s25, 32
          %s164 = smul.addr %s163, 8
          %s165 = scalar_lea.hbm %s0, %s164
          %s166 = sshll.u32 %s165, 4
          %s167 = int_to_ptr.hbm [resolvable:$true] %s166
          %s168 = sshll.u32 %s160, 4
          %s169 = int_to_ptr.vmem [resolvable:$true] %s168
          %174 = dma.hbm_to_vmem [thread:$0]  %s167, 4096, %s169, %s157, 128, 128, 8
        $region20: #{tpu_custom_call.1} parent=15 // pred_fallthru
          _
        // Predicated region
        $region21: #{tpu_custom_call.1} parent=15 // pred_check
          %p175 = pneg %p76
        $region22: #{tpu_custom_call.1} parent=15 // pred_check_branch
          %177 = sbr.rel (%p175) target = $region24
        $region23: #{tpu_custom_call.1} parent=15 // pred_region
          %s178 = sand.u32 %s18, 1
          %s179 = scalar_lea.sflag [#allocation8], %s178
          %s180 = sand.u32 %s66, 1
          %s181 = smul.addr %s180, 576
          %s182 = scalar_lea.vmem [#allocation7], %s181
          %184 = vsyncadd %s179, 0
          %s185 = smul.addr %s26, 144
          %s186 = smul.addr %s185, 4
          %s187 = scalar_lea.hbm %s1, %s186
          %s188 = sshll.u32 %s187, 4
          %s189 = int_to_ptr.hbm [resolvable:$true] %s188
          %s190 = sshll.u32 %s182, 4
          %s191 = int_to_ptr.vmem [resolvable:$true] %s190
          %196 = dma.hbm_to_vmem [thread:$0]  %s189, 9216, %s191, %s179, 64, 64, 4
        $region24: #{tpu_custom_call.1} parent=15 // pred_fallthru
          _
        // Predicated region
        $region25: #{tpu_custom_call.1} parent=15 // pred_check
          %p197 = pneg %p102
        $region26: #{tpu_custom_call.1} parent=15 // pred_check_branch
          %199 = sbr.rel (%p197) target = $region28
        $region27: #{tpu_custom_call.1} parent=15 // pred_region
          %s200 = sand.u32 %s18, 1
          %s201 = scalar_lea.sflag [#allocation8], %s200
          %s202 = sand.u32 %s92, 1
          %s203 = scalar_lea.vmem [#allocation9], %s202
          %205 = vsyncadd %s201, 0
          %s206 = scalar_lea.hbm %s2, %s26
          %s208 = sshll.u32 %s206, 4
          %s209 = int_to_ptr.hbm [resolvable:$true] %s208
          %s210 = sshll.u32 %s203, 4
          %s211 = int_to_ptr.vmem [resolvable:$true] %s210
          %213 = dma.hbm_to_vmem [thread:$0]  %s209, 16, %s211, %s201
        $region28: #{tpu_custom_call.1} parent=15 // pred_fallthru
          _
      $region16: #{tpu_custom_call.1} parent=5 // pred_fallthru
        _
      %p214 = scmp.le.s32.totalorder 1, %s18
      %p215 = scmp.lt.s32.totalorder %s18, 9
      %p216 = pnand %p214, %p215
      %p217 = pneg %p216
      // Predicated region
      $region29: #{tpu_custom_call.1} parent=5 // pred_check
        _
      $region30: #{tpu_custom_call.1} parent=5 // pred_check_branch
        %219 = sbr.rel (%p216) target = $region32
      $region31: #{tpu_custom_call.1} parent=5 // pred_region
        %s220 = ssub.s32 %s18, 1
        %s221 = sand.u32 %s43, 1
        %s222 = scalar_lea.sflag [#allocation5], %s221
        %s223 = sand.u32 %s43, 1
        %s224 = smul.addr %s223, 256
        %s225 = scalar_lea.vmem [#allocation4], %s224
        // Predicated region
        $region33: #{tpu_custom_call.1} parent=31 // pred_check
          %p226 = pneg %p56
        $region34: #{tpu_custom_call.1} parent=31 // pred_check_branch
          %228 = sbr.rel (%p226) target = $region36
        $region35: #{tpu_custom_call.1} parent=31 // pred_region
          %230 = dma.done %s222, 4096
        $region36: #{tpu_custom_call.1} parent=31 // pred_fallthru
          _
        %s231 = sand.u32 %s23, 1
        %s232 = scalar_lea.sflag [#allocation8], %s231
        %s233 = sand.u32 %s69, 1
        %s234 = smul.addr %s233, 576
        %s235 = scalar_lea.vmem [#allocation7], %s234
        // Predicated region
        $region37: #{tpu_custom_call.1} parent=31 // pred_check
          %p236 = pneg %p82
        $region38: #{tpu_custom_call.1} parent=31 // pred_check_branch
          %238 = sbr.rel (%p236) target = $region40
        $region39: #{tpu_custom_call.1} parent=31 // pred_region
          %240 = dma.done %s232, 9216
        $region40: #{tpu_custom_call.1} parent=31 // pred_fallthru
          _
        %s241 = sand.u32 %s23, 1
        %s242 = scalar_lea.sflag [#allocation8], %s241
        %s243 = sand.u32 %s95, 1
        %s244 = scalar_lea.vmem [#allocation9], %s243
        // Predicated region
        $region41: #{tpu_custom_call.1} parent=31 // pred_check
          %p245 = pneg %p108
        $region42: #{tpu_custom_call.1} parent=31 // pred_check_branch
          %247 = sbr.rel (%p245) target = $region44
        $region43: #{tpu_custom_call.1} parent=31 // pred_region
          %249 = dma.done %s242, 16
        $region44: #{tpu_custom_call.1} parent=31 // pred_fallthru
          _
        %s250 = sand.u32 %s43, 1
        %s251 = scalar_lea.sflag [#allocation5], %s250
        %s252 = sand.u32 %s43, 1
        %s253 = smul.addr %s252, 256
        %s254 = scalar_lea.vmem [#allocation4], %s253
        %p255 = pneg %p56
        %p256 = pneg %p53
        %s257 = sand.u32 %s23, 1
        %s258 = scalar_lea.sflag [#allocation8], %s257
        %s259 = sand.u32 %s69, 1
        %s260 = smul.addr %s259, 576
        %s261 = scalar_lea.vmem [#allocation7], %s260
        %p262 = pneg %p82
        %p263 = pneg %p79
        %s264 = sand.u32 %s23, 1
        %s265 = scalar_lea.sflag [#allocation8], %s264
        %s266 = sand.u32 %s95, 1
        %s267 = scalar_lea.vmem [#allocation9], %s266
        %p268 = pneg %p108
        %p269 = pneg %p105
        %p270 = pneg %p134
        %p271 = pneg %p131
        %s272 = sand.u32 %s121, 1
        %s273 = scalar_lea.sflag [#allocation6], %s272
        %s274 = sand.u32 %s121, 1
        %s275 = smul.addr %s274, 256
        %s276 = scalar_lea.vmem [#allocation10], %s275
        %p277 = scmp.lt.s32.totalorder %s28, 0
        %s278 = ssub.s32 0, %s28
        %s279 = scalar_select %p277, %s278, %s28
        %s280 = sand.u32 %s279, 1
        %s281 = ssub.s32 0, %s280
        %s282 = scalar_select %p277, %s281, %s280
        %p283 = scmp.ne.s32.totalorder %s282, 0
        %p284 = scmp.lt.s32.totalorder %s282, 0
        %p285 = pnand %p284, %p283
        %p286 = pneg %p285
        %s287 = sadd.s32 %s282, 2
        %s288 = scalar_select %p286, %s287, %s282
        %p289 = scmp.eq.s32.totalorder %s288, 0
        %p290 = scmp.eq.s32.totalorder %s28, 0
        // Predicated region
        $region45: #{tpu_custom_call.1} parent=31 // pred_check
          %p291 = pneg %p290
        $region46: #{tpu_custom_call.1} parent=31 // pred_check_branch
          %293 = sbr.rel (%p291) target = $region48
        $region47: #{tpu_custom_call.1} parent=31 // pred_region
          %294 = vst [vmem:[#allocation2] sm:$0xff] 0.0
          %295 = vst [vmem:[#allocation2 + $0x8] sm:$0xff] 0.0
          %296 = vst [vmem:[#allocation2 + $0x10] sm:$0xff] 0.0
          %297 = vst [vmem:[#allocation2 + $0x18] sm:$0xff] 0.0
          %298 = vst [vmem:[#allocation2 + $0x20] sm:$0xff] 0.0
          %299 = vst [vmem:[#allocation2 + $0x28] sm:$0xff] 0.0
          %300 = vst [vmem:[#allocation2 + $0x30] sm:$0xff] 0.0
          %301 = vst [vmem:[#allocation2 + $0x38] sm:$0xff] 0.0
          %302 = vst [vmem:[#allocation2 + $0x40] sm:$0xff] 0.0
          %303 = vst [vmem:[#allocation2 + $0x48] sm:$0xff] 0.0
          %304 = vst [vmem:[#allocation2 + $0x50] sm:$0xff] 0.0
          %305 = vst [vmem:[#allocation2 + $0x58] sm:$0xff] 0.0
          %306 = vst [vmem:[#allocation2 + $0x60] sm:$0xff] 0.0
          %307 = vst [vmem:[#allocation2 + $0x68] sm:$0xff] 0.0
          %308 = vst [vmem:[#allocation2 + $0x70] sm:$0xff] 0.0
          %309 = vst [vmem:[#allocation2 + $0x78] sm:$0xff] 0.0
          %310 = vst [vmem:[#allocation2 + $0x80] sm:$0xff] 0.0
          %311 = vst [vmem:[#allocation2 + $0x88] sm:$0xff] 0.0
          %312 = vst [vmem:[#allocation2 + $0x90] sm:$0xff] 0.0
          %313 = vst [vmem:[#allocation2 + $0x98] sm:$0xff] 0.0
          %314 = vst [vmem:[#allocation2 + $0xa0] sm:$0xff] 0.0
          %315 = vst [vmem:[#allocation2 + $0xa8] sm:$0xff] 0.0
          %316 = vst [vmem:[#allocation2 + $0xb0] sm:$0xff] 0.0
          %317 = vst [vmem:[#allocation2 + $0xb8] sm:$0xff] 0.0
          %318 = vst [vmem:[#allocation2 + $0xc0] sm:$0xff] 0.0
          %319 = vst [vmem:[#allocation2 + $0xc8] sm:$0xff] 0.0
          %320 = vst [vmem:[#allocation2 + $0xd0] sm:$0xff] 0.0
          %321 = vst [vmem:[#allocation2 + $0xd8] sm:$0xff] 0.0
          %322 = vst [vmem:[#allocation2 + $0xe0] sm:$0xff] 0.0
          %323 = vst [vmem:[#allocation2 + $0xe8] sm:$0xff] 0.0
          %324 = vst [vmem:[#allocation2 + $0xf0] sm:$0xff] 0.0
          %325 = vst [vmem:[#allocation2 + $0xf8] sm:$0xff] 0.0
          %326 = vst [vmem:[#allocation2 + $0x100] sm:$0xff] 0.0
          %327 = vst [vmem:[#allocation2 + $0x108] sm:$0xff] 0.0
          %328 = vst [vmem:[#allocation2 + $0x110] sm:$0xff] 0.0
          %329 = vst [vmem:[#allocation2 + $0x118] sm:$0xff] 0.0
          %330 = vst [vmem:[#allocation2 + $0x120] sm:$0xff] 0.0
          %331 = vst [vmem:[#allocation2 + $0x128] sm:$0xff] 0.0
          %332 = vst [vmem:[#allocation2 + $0x130] sm:$0xff] 0.0
          %333 = vst [vmem:[#allocation2 + $0x138] sm:$0xff] 0.0
          %334 = vst [vmem:[#allocation2 + $0x140] sm:$0xff] 0.0
          %335 = vst [vmem:[#allocation2 + $0x148] sm:$0xff] 0.0
          %336 = vst [vmem:[#allocation2 + $0x150] sm:$0xff] 0.0
          %337 = vst [vmem:[#allocation2 + $0x158] sm:$0xff] 0.0
          %338 = vst [vmem:[#allocation2 + $0x160] sm:$0xff] 0.0
          %339 = vst [vmem:[#allocation2 + $0x168] sm:$0xff] 0.0
          %340 = vst [vmem:[#allocation2 + $0x170] sm:$0xff] 0.0
          %341 = vst [vmem:[#allocation2 + $0x178] sm:$0xff] 0.0
          %342 = vst [vmem:[#allocation2 + $0x180] sm:$0xff] 0.0
          %343 = vst [vmem:[#allocation2 + $0x188] sm:$0xff] 0.0
          %344 = vst [vmem:[#allocation2 + $0x190] sm:$0xff] 0.0
          %345 = vst [vmem:[#allocation2 + $0x198] sm:$0xff] 0.0
          %346 = vst [vmem:[#allocation2 + $0x1a0] sm:$0xff] 0.0
          %347 = vst [vmem:[#allocation2 + $0x1a8] sm:$0xff] 0.0
          %348 = vst [vmem:[#allocation2 + $0x1b0] sm:$0xff] 0.0
          %349 = vst [vmem:[#allocation2 + $0x1b8] sm:$0xff] 0.0
          %350 = vst [vmem:[#allocation2 + $0x1c0] sm:$0xff] 0.0
          %351 = vst [vmem:[#allocation2 + $0x1c8] sm:$0xff] 0.0
          %352 = vst [vmem:[#allocation2 + $0x1d0] sm:$0xff] 0.0
          %353 = vst [vmem:[#allocation2 + $0x1d8] sm:$0xff] 0.0
          %354 = vst [vmem:[#allocation2 + $0x1e0] sm:$0xff] 0.0
          %355 = vst [vmem:[#allocation2 + $0x1e8] sm:$0xff] 0.0
          %356 = vst [vmem:[#allocation2 + $0x1f0] sm:$0xff] 0.0
          %357 = vst [vmem:[#allocation2 + $0x1f8] sm:$0xff] 0.0
          %358 = vst [vmem:[#allocation2 + $0x200] sm:$0xff] 0.0
          %359 = vst [vmem:[#allocation2 + $0x208] sm:$0xff] 0.0
          %360 = vst [vmem:[#allocation2 + $0x210] sm:$0xff] 0.0
          %361 = vst [vmem:[#allocation2 + $0x218] sm:$0xff] 0.0
          %362 = vst [vmem:[#allocation2 + $0x220] sm:$0xff] 0.0
          %363 = vst [vmem:[#allocation2 + $0x228] sm:$0xff] 0.0
          %364 = vst [vmem:[#allocation2 + $0x230] sm:$0xff] 0.0
          %365 = vst [vmem:[#allocation2 + $0x238] sm:$0xff] 0.0
          %v366 = vld [vmem:[%s225] sm:$0xff]
          %v367 = vld [vmem:[%s225 + $0x8] sm:$0xff]
          %v368 = vld [vmem:[%s225 + $0x10] sm:$0xff]
          %v369 = vld [vmem:[%s225 + $0x18] sm:$0xff]
          %v370 = vld [vmem:[%s225 + $0x20] sm:$0xff]
          %v371 = vld [vmem:[%s225 + $0x28] sm:$0xff]
          %v372 = vld [vmem:[%s225 + $0x30] sm:$0xff]
          %v373 = vld [vmem:[%s225 + $0x38] sm:$0xff]
          %v374 = vld [vmem:[%s225 + $0x40] sm:$0xff]
          %v375 = vld [vmem:[%s225 + $0x48] sm:$0xff]
          %v376 = vld [vmem:[%s225 + $0x50] sm:$0xff]
          %v377 = vld [vmem:[%s225 + $0x58] sm:$0xff]
          %v378 = vld [vmem:[%s225 + $0x60] sm:$0xff]
          %v379 = vld [vmem:[%s225 + $0x68] sm:$0xff]
          %v380 = vld [vmem:[%s225 + $0x70] sm:$0xff]
          %v381 = vld [vmem:[%s225 + $0x78] sm:$0xff]
          %v382 = vld [vmem:[%s225 + $0x80] sm:$0xff]
          %v383 = vld [vmem:[%s225 + $0x88] sm:$0xff]
          %v384 = vld [vmem:[%s225 + $0x90] sm:$0xff]
          %v385 = vld [vmem:[%s225 + $0x98] sm:$0xff]
          %v386 = vld [vmem:[%s225 + $0xa0] sm:$0xff]
          %v387 = vld [vmem:[%s225 + $0xa8] sm:$0xff]
          %v388 = vld [vmem:[%s225 + $0xb0] sm:$0xff]
          %v389 = vld [vmem:[%s225 + $0xb8] sm:$0xff]
          %v390 = vld [vmem:[%s225 + $0xc0] sm:$0xff]
          %v391 = vld [vmem:[%s225 + $0xc8] sm:$0xff]
          %v392 = vld [vmem:[%s225 + $0xd0] sm:$0xff]
          %v393 = vld [vmem:[%s225 + $0xd8] sm:$0xff]
          %v394 = vld [vmem:[%s225 + $0xe0] sm:$0xff]
          %v395 = vld [vmem:[%s225 + $0xe8] sm:$0xff]
          %v396 = vld [vmem:[%s225 + $0xf0] sm:$0xff]
          %v397 = vld [vmem:[%s225 + $0xf8] sm:$0xff]
          %398 = vst [vmem:[#allocation3] sm:$0xff] %v366
          %399 = vst [vmem:[#allocation3 + $0x8] sm:$0xff] %v367
          %400 = vst [vmem:[#allocation3 + $0x10] sm:$0xff] %v368
          %401 = vst [vmem:[#allocation3 + $0x18] sm:$0xff] %v369
          %402 = vst [vmem:[#allocation3 + $0x20] sm:$0xff] %v370
          %403 = vst [vmem:[#allocation3 + $0x28] sm:$0xff] %v371
          %404 = vst [vmem:[#allocation3 + $0x30] sm:$0xff] %v372
          %405 = vst [vmem:[#allocation3 + $0x38] sm:$0xff] %v373
          %406 = vst [vmem:[#allocation3 + $0x40] sm:$0xff] %v374
          %407 = vst [vmem:[#allocation3 + $0x48] sm:$0xff] %v375
          %408 = vst [vmem:[#allocation3 + $0x50] sm:$0xff] %v376
          %409 = vst [vmem:[#allocation3 + $0x58] sm:$0xff] %v377
          %410 = vst [vmem:[#allocation3 + $0x60] sm:$0xff] %v378
          %411 = vst [vmem:[#allocation3 + $0x68] sm:$0xff] %v379
          %412 = vst [vmem:[#allocation3 + $0x70] sm:$0xff] %v380
          %413 = vst [vmem:[#allocation3 + $0x78] sm:$0xff] %v381
          %414 = vst [vmem:[#allocation3 + $0x80] sm:$0xff] %v382
          %415 = vst [vmem:[#allocation3 + $0x88] sm:$0xff] %v383
          %416 = vst [vmem:[#allocation3 + $0x90] sm:$0xff] %v384
          %417 = vst [vmem:[#allocation3 + $0x98] sm:$0xff] %v385
          %418 = vst [vmem:[#allocation3 + $0xa0] sm:$0xff] %v386
          %419 = vst [vmem:[#allocation3 + $0xa8] sm:$0xff] %v387
          %420 = vst [vmem:[#allocation3 + $0xb0] sm:$0xff] %v388
          %421 = vst [vmem:[#allocation3 + $0xb8] sm:$0xff] %v389
          %422 = vst [vmem:[#allocation3 + $0xc0] sm:$0xff] %v390
          %423 = vst [vmem:[#allocation3 + $0xc8] sm:$0xff] %v391
          %424 = vst [vmem:[#allocation3 + $0xd0] sm:$0xff] %v392
          %425 = vst [vmem:[#allocation3 + $0xd8] sm:$0xff] %v393
          %426 = vst [vmem:[#allocation3 + $0xe0] sm:$0xff] %v394
          %427 = vst [vmem:[#allocation3 + $0xe8] sm:$0xff] %v395
          %428 = vst [vmem:[#allocation3 + $0xf0] sm:$0xff] %v396
          %429 = vst [vmem:[#allocation3 + $0xf8] sm:$0xff] %v397
          %s430 = scalar_lea.vmem [#allocation2], 32
          %431 = vst [vmem:[%s430 + $0x8] sm:$0xff] %v366
          %432 = vst [vmem:[%s430 + $0x10] sm:$0xff] %v367
          %433 = vst [vmem:[%s430 + $0x28] sm:$0xff] %v368
          %434 = vst [vmem:[%s430 + $0x30] sm:$0xff] %v369
          %435 = vst [vmem:[%s430 + $0x48] sm:$0xff] %v370
          %436 = vst [vmem:[%s430 + $0x50] sm:$0xff] %v371
          %437 = vst [vmem:[%s430 + $0x68] sm:$0xff] %v372
          %438 = vst [vmem:[%s430 + $0x70] sm:$0xff] %v373
          %439 = vst [vmem:[%s430 + $0x88] sm:$0xff] %v374
          %440 = vst [vmem:[%s430 + $0x90] sm:$0xff] %v375
          %441 = vst [vmem:[%s430 + $0xa8] sm:$0xff] %v376
          %442 = vst [vmem:[%s430 + $0xb0] sm:$0xff] %v377
          %443 = vst [vmem:[%s430 + $0xc8] sm:$0xff] %v378
          %444 = vst [vmem:[%s430 + $0xd0] sm:$0xff] %v379
          %445 = vst [vmem:[%s430 + $0xe8] sm:$0xff] %v380
          %446 = vst [vmem:[%s430 + $0xf0] sm:$0xff] %v381
          %447 = vst [vmem:[%s430 + $0x108] sm:$0xff] %v382
          %448 = vst [vmem:[%s430 + $0x110] sm:$0xff] %v383
          %449 = vst [vmem:[%s430 + $0x128] sm:$0xff] %v384
          %450 = vst [vmem:[%s430 + $0x130] sm:$0xff] %v385
          %451 = vst [vmem:[%s430 + $0x148] sm:$0xff] %v386
          %452 = vst [vmem:[%s430 + $0x150] sm:$0xff] %v387
          %453 = vst [vmem:[%s430 + $0x168] sm:$0xff] %v388
          %454 = vst [vmem:[%s430 + $0x170] sm:$0xff] %v389
          %455 = vst [vmem:[%s430 + $0x188] sm:$0xff] %v390
          %456 = vst [vmem:[%s430 + $0x190] sm:$0xff] %v391
          %457 = vst [vmem:[%s430 + $0x1a8] sm:$0xff] %v392
          %458 = vst [vmem:[%s430 + $0x1b0] sm:$0xff] %v393
          %459 = vst [vmem:[%s430 + $0x1c8] sm:$0xff] %v394
          %460 = vst [vmem:[%s430 + $0x1d0] sm:$0xff] %v395
          %461 = vst [vmem:[%s430 + $0x1e8] sm:$0xff] %v396
          %462 = vst [vmem:[%s430 + $0x1f0] sm:$0xff] %v397
        $region48: #{tpu_custom_call.1} parent=31 // pred_fallthru
          _
        %v463 = vld [vmem:[#allocation2 + $0x7] sm:$0xff]
        %v464 = vld [vmem:[#allocation2 + $0xf] sm:$0xff]
        %v465 = vld [vmem:[#allocation2 + $0x27] sm:$0xff]
        %v466 = vld [vmem:[#allocation2 + $0x2f] sm:$0xff]
        %v467 = vld [vmem:[#allocation2 + $0x47] sm:$0xff]
        %v468 = vld [vmem:[#allocation2 + $0x4f] sm:$0xff]
        %v469 = vld [vmem:[#allocation2 + $0x67] sm:$0xff]
        %v470 = vld [vmem:[#allocation2 + $0x6f] sm:$0xff]
        %v471 = vld [vmem:[#allocation2 + $0x87] sm:$0xff]
        %v472 = vld [vmem:[#allocation2 + $0x8f] sm:$0xff]
        %v473 = vld [vmem:[#allocation2 + $0xa7] sm:$0xff]
        %v474 = vld [vmem:[#allocation2 + $0xaf] sm:$0xff]
        %v475 = vld [vmem:[#allocation2 + $0xc7] sm:$0xff]
        %v476 = vld [vmem:[#allocation2 + $0xcf] sm:$0xff]
        %v477 = vld [vmem:[#allocation2 + $0xe7] sm:$0xff]
        %v478 = vld [vmem:[#allocation2 + $0xef] sm:$0xff]
        %v479 = vld [vmem:[#allocation2 + $0x107] sm:$0xff]
        %v480 = vld [vmem:[#allocation2 + $0x10f] sm:$0xff]
        %v481 = vld [vmem:[#allocation2 + $0x127] sm:$0xff]
        %v482 = vld [vmem:[#allocation2 + $0x12f] sm:$0xff]
        %v483 = vld [vmem:[#allocation2 + $0x147] sm:$0xff]
        %v484 = vld [vmem:[#allocation2 + $0x14f] sm:$0xff]
        %v485 = vld [vmem:[#allocation2 + $0x167] sm:$0xff]
        %v486 = vld [vmem:[#allocation2 + $0x16f] sm:$0xff]
        %v487 = vld [vmem:[#allocation2 + $0x187] sm:$0xff]
        %v488 = vld [vmem:[#allocation2 + $0x18f] sm:$0xff]
        %v489 = vld [vmem:[#allocation2 + $0x1a7] sm:$0xff]
        %v490 = vld [vmem:[#allocation2 + $0x1af] sm:$0xff]
        %v491 = vld [vmem:[#allocation2 + $0x1c7] sm:$0xff]
        %v492 = vld [vmem:[#allocation2 + $0x1cf] sm:$0xff]
        %v493 = vld [vmem:[#allocation2 + $0x1e7] sm:$0xff]
        %v494 = vld [vmem:[#allocation2 + $0x1ef] sm:$0xff]
        %v495 = vpack.c.bf16 %v464, %v463
        %v496 = vpack.c.bf16 %v466, %v465
        %v497 = vpack.c.bf16 %v468, %v467
        %v498 = vpack.c.bf16 %v470, %v469
        %v499 = vpack.c.bf16 %v472, %v471
        %v500 = vpack.c.bf16 %v474, %v473
        %v501 = vpack.c.bf16 %v476, %v475
        %v502 = vpack.c.bf16 %v478, %v477
        %v503 = vpack.c.bf16 %v480, %v479
        %v504 = vpack.c.bf16 %v482, %v481
        %v505 = vpack.c.bf16 %v484, %v483
        %v506 = vpack.c.bf16 %v486, %v485
        %v507 = vpack.c.bf16 %v488, %v487
        %v508 = vpack.c.bf16 %v490, %v489
        %v509 = vpack.c.bf16 %v492, %v491
        %v510 = vpack.c.bf16 %v494, %v493
        %v511 = vld [vmem:[%s235] sm:$0xf]
        %v512 = vld [vmem:[%s235 + $0x4] sm:$0xf]
        %v513 = vld [vmem:[%s235 + $0x8] sm:$0xf]
        %v514 = vld [vmem:[%s235 + $0xc] sm:$0xf]
        %v515 = vld [vmem:[%s235 + $0x10] sm:$0xf]
        %v516 = vld [vmem:[%s235 + $0x14] sm:$0xf]
        %v517 = vld [vmem:[%s235 + $0x18] sm:$0xf]
        %v518 = vld [vmem:[%s235 + $0x1c] sm:$0xf]
        %v519 = vld [vmem:[%s235 + $0x20] sm:$0xf]
        %v520 = vld [vmem:[%s235 + $0x24] sm:$0xf]
        %v521 = vld [vmem:[%s235 + $0x28] sm:$0xf]
        %v522 = vld [vmem:[%s235 + $0x2c] sm:$0xf]
        %v523 = vld [vmem:[%s235 + $0x30] sm:$0xf]
        %v524 = vld [vmem:[%s235 + $0x34] sm:$0xf]
        %v525 = vld [vmem:[%s235 + $0x38] sm:$0xf]
        %v526 = vld [vmem:[%s235 + $0x3c] sm:$0xf]
        %v527 = vld [vmem:[#allocation2 + $0x8] sm:$0xff]
        %v528 = vld [vmem:[#allocation2 + $0x10] sm:$0xff]
        %v529 = vld [vmem:[#allocation2 + $0x28] sm:$0xff]
        %v530 = vld [vmem:[#allocation2 + $0x30] sm:$0xff]
        %v531 = vld [vmem:[#allocation2 + $0x48] sm:$0xff]
        %v532 = vld [vmem:[#allocation2 + $0x50] sm:$0xff]
        %v533 = vld [vmem:[#allocation2 + $0x68] sm:$0xff]
        %v534 = vld [vmem:[#allocation2 + $0x70] sm:$0xff]
        %v535 = vld [vmem:[#allocation2 + $0x88] sm:$0xff]
        %v536 = vld [vmem:[#allocation2 + $0x90] sm:$0xff]
        %v537 = vld [vmem:[#allocation2 + $0xa8] sm:$0xff]
        %v538 = vld [vmem:[#allocation2 + $0xb0] sm:$0xff]
        %v539 = vld [vmem:[#allocation2 + $0xc8] sm:$0xff]
        %v540 = vld [vmem:[#allocation2 + $0xd0] sm:$0xff]
        %v541 = vld [vmem:[#allocation2 + $0xe8] sm:$0xff]
        %v542 = vld [vmem:[#allocation2 + $0xf0] sm:$0xff]
        %v543 = vld [vmem:[#allocation2 + $0x108] sm:$0xff]
        %v544 = vld [vmem:[#allocation2 + $0x110] sm:$0xff]
        %v545 = vld [vmem:[#allocation2 + $0x128] sm:$0xff]
        %v546 = vld [vmem:[#allocation2 + $0x130] sm:$0xff]
        %v547 = vld [vmem:[#allocation2 + $0x148] sm:$0xff]
        %v548 = vld [vmem:[#allocation2 + $0x150] sm:$0xff]
        %v549 = vld [vmem:[#allocation2 + $0x168] sm:$0xff]
        %v550 = vld [vmem:[#allocation2 + $0x170] sm:$0xff]
        %v551 = vld [vmem:[#allocation2 + $0x188] sm:$0xff]
        %v552 = vld [vmem:[#allocation2 + $0x190] sm:$0xff]
        %v553 = vld [vmem:[#allocation2 + $0x1a8] sm:$0xff]
        %v554 = vld [vmem:[#allocation2 + $0x1b0] sm:$0xff]
        %v555 = vld [vmem:[#allocation2 + $0x1c8] sm:$0xff]
        %v556 = vld [vmem:[#allocation2 + $0x1d0] sm:$0xff]
        %v557 = vld [vmem:[#allocation2 + $0x1e8] sm:$0xff]
        %v558 = vld [vmem:[#allocation2 + $0x1f0] sm:$0xff]
        %v559 = vpack.c.bf16 %v528, %v527
        %v560 = vpack.c.bf16 %v530, %v529
        %v561 = vpack.c.bf16 %v532, %v531
        %v562 = vpack.c.bf16 %v534, %v533
        %v563 = vpack.c.bf16 %v536, %v535
        %v564 = vpack.c.bf16 %v538, %v537
        %v565 = vpack.c.bf16 %v540, %v539
        %v566 = vpack.c.bf16 %v542, %v541
        %v567 = vpack.c.bf16 %v544, %v543
        %v568 = vpack.c.bf16 %v546, %v545
        %v569 = vpack.c.bf16 %v548, %v547
        %v570 = vpack.c.bf16 %v550, %v549
        %v571 = vpack.c.bf16 %v552, %v551
        %v572 = vpack.c.bf16 %v554, %v553
        %v573 = vpack.c.bf16 %v556, %v555
        %v574 = vpack.c.bf16 %v558, %v557
        %s575 = scalar_lea.vmem %s235, 64 [#allocation7]
        %v576 = vld [vmem:[%s575] sm:$0xf]
        %v577 = vld [vmem:[%s575 + $0x4] sm:$0xf]
        %v578 = vld [vmem:[%s575 + $0x8] sm:$0xf]
        %v579 = vld [vmem:[%s575 + $0xc] sm:$0xf]
        %v580 = vld [vmem:[%s575 + $0x10] sm:$0xf]
        %v581 = vld [vmem:[%s575 + $0x14] sm:$0xf]
        %v582 = vld [vmem:[%s575 + $0x18] sm:$0xf]
        %v583 = vld [vmem:[%s575 + $0x1c] sm:$0xf]
        %v584 = vld [vmem:[%s575 + $0x20] sm:$0xf]
        %v585 = vld [vmem:[%s575 + $0x24] sm:$0xf]
        %v586 = vld [vmem:[%s575 + $0x28] sm:$0xf]
        %v587 = vld [vmem:[%s575 + $0x2c] sm:$0xf]
        %v588 = vld [vmem:[%s575 + $0x30] sm:$0xf]
        %v589 = vld [vmem:[%s575 + $0x34] sm:$0xf]
        %v590 = vld [vmem:[%s575 + $0x38] sm:$0xf]
        %v591 = vld [vmem:[%s575 + $0x3c] sm:$0xf]
        %v608 = vunpack.c.l.b16 %v576
        %v609 = vunpack.c.l.b16 %v577
        %v610 = vunpack.c.l.b16 %v578
        %v611 = vunpack.c.l.b16 %v579
        %v612 = vunpack.c.l.b16 %v580
        %v613 = vunpack.c.l.b16 %v581
        %v614 = vunpack.c.l.b16 %v582
        %v615 = vunpack.c.l.b16 %v583
        %v616 = vunpack.c.l.b16 %v584
        %v617 = vunpack.c.l.b16 %v585
        %v618 = vunpack.c.l.b16 %v586
        %v619 = vunpack.c.l.b16 %v587
        %v620 = vunpack.c.l.b16 %v588
        %v621 = vunpack.c.l.b16 %v589
        %v622 = vunpack.c.l.b16 %v590
        %v623 = vunpack.c.l.b16 %v591
        %v624 = vpack.c.b16 %v609, %v608
        %v625 = vpack.c.b16 %v611, %v610
        %v626 = vpack.c.b16 %v613, %v612
        %v627 = vpack.c.b16 %v615, %v614
        %v628 = vpack.c.b16 %v617, %v616
        %v629 = vpack.c.b16 %v619, %v618
        %v630 = vpack.c.b16 %v621, %v620
        %v631 = vpack.c.b16 %v623, %v622
        %640 = vmatpush.bf16.msra.mxu0 %v631
        %641 = vmatpush.bf16.msra.mxu0 %v630
        %642 = vmatpush.bf16.msra.mxu0 %v629
        %643 = vmatpush.bf16.msra.mxu0 %v628
        %644 = vmatpush.bf16.msra.mxu0 %v627
        %645 = vmatpush.bf16.msra.mxu0 %v626
        %646 = vmatpush.bf16.msra.mxu0 %v625
        %647 = vmatpush.bf16.msra.mxu0 %v624
        %648 = vmatmul.bf16.gmra.mxu0 %v559
        %v649 = vpop.f32.mrf.mxu0
        %v650 = vadd.f32 0.0, %v649
        %v651 = vpop.f32.mrf.mxu0
        %v652 = vadd.f32 0.0, %v651
        %653 = vmatmul.bf16.gmra.mxu0 %v560
        %v654 = vpop.f32.mrf.mxu0
        %v655 = vadd.f32 0.0, %v654
        %v656 = vpop.f32.mrf.mxu0
        %v657 = vadd.f32 0.0, %v656
        %658 = vmatmul.bf16.gmra.mxu0 %v561
        %v659 = vpop.f32.mrf.mxu0
        %v660 = vadd.f32 0.0, %v659
        %v661 = vpop.f32.mrf.mxu0
        %v662 = vadd.f32 0.0, %v661
        %663 = vmatmul.bf16.gmra.mxu0 %v562
        %v664 = vpop.f32.mrf.mxu0
        %v665 = vadd.f32 0.0, %v664
        %v666 = vpop.f32.mrf.mxu0
        %v667 = vadd.f32 0.0, %v666
        %668 = vmatmul.bf16.gmra.mxu0 %v563
        %v669 = vpop.f32.mrf.mxu0
        %v670 = vadd.f32 0.0, %v669
        %v671 = vpop.f32.mrf.mxu0
        %v672 = vadd.f32 0.0, %v671
        %673 = vmatmul.bf16.gmra.mxu0 %v564
        %v674 = vpop.f32.mrf.mxu0
        %v675 = vadd.f32 0.0, %v674
        %v676 = vpop.f32.mrf.mxu0
        %v677 = vadd.f32 0.0, %v676
        %678 = vmatmul.bf16.gmra.mxu0 %v565
        %v679 = vpop.f32.mrf.mxu0
        %v680 = vadd.f32 0.0, %v679
        %v681 = vpop.f32.mrf.mxu0
        %v682 = vadd.f32 0.0, %v681
        %683 = vmatmul.bf16.gmra.mxu0 %v566
        %v684 = vpop.f32.mrf.mxu0
        %v685 = vadd.f32 0.0, %v684
        %v686 = vpop.f32.mrf.mxu0
        %v687 = vadd.f32 0.0, %v686
        %688 = vmatmul.bf16.gmra.mxu0 %v567
        %v689 = vpop.f32.mrf.mxu0
        %v690 = vadd.f32 0.0, %v689
        %v691 = vpop.f32.mrf.mxu0
        %v692 = vadd.f32 0.0, %v691
        %693 = vmatmul.bf16.gmra.mxu0 %v568
        %v694 = vpop.f32.mrf.mxu0
        %v695 = vadd.f32 0.0, %v694
        %v696 = vpop.f32.mrf.mxu0
        %v697 = vadd.f32 0.0, %v696
        %698 = vmatmul.bf16.gmra.mxu0 %v569
        %v699 = vpop.f32.mrf.mxu0
        %v700 = vadd.f32 0.0, %v699
        %v701 = vpop.f32.mrf.mxu0
        %v702 = vadd.f32 0.0, %v701
        %703 = vmatmul.bf16.gmra.mxu0 %v570
        %v704 = vpop.f32.mrf.mxu0
        %v705 = vadd.f32 0.0, %v704
        %v706 = vpop.f32.mrf.mxu0
        %v707 = vadd.f32 0.0, %v706
        %708 = vmatmul.bf16.gmra.mxu0 %v571
        %v709 = vpop.f32.mrf.mxu0
        %v710 = vadd.f32 0.0, %v709
        %v711 = vpop.f32.mrf.mxu0
        %v712 = vadd.f32 0.0, %v711
        %713 = vmatmul.bf16.gmra.mxu0 %v572
        %v714 = vpop.f32.mrf.mxu0
        %v715 = vadd.f32 0.0, %v714
        %v716 = vpop.f32.mrf.mxu0
        %v717 = vadd.f32 0.0, %v716
        %718 = vmatmul.bf16.gmra.mxu0 %v573
        %v719 = vpop.f32.mrf.mxu0
        %v720 = vadd.f32 0.0, %v719
        %v721 = vpop.f32.mrf.mxu0
        %v722 = vadd.f32 0.0, %v721
        %723 = vmatmul.bf16.gmra.mxu0 %v574
        %v724 = vpop.f32.mrf.mxu0
        %v725 = vadd.f32 0.0, %v724
        %v726 = vpop.f32.mrf.mxu0
        %v727 = vadd.f32 0.0, %v726
        %728 = vdwg.mxu0
        %v745 = vunpack.c.l.b16 %v511
        %v746 = vunpack.c.l.b16 %v512
        %v747 = vunpack.c.l.b16 %v513
        %v748 = vunpack.c.l.b16 %v514
        %v749 = vunpack.c.l.b16 %v515
        %v750 = vunpack.c.l.b16 %v516
        %v751 = vunpack.c.l.b16 %v517
        %v752 = vunpack.c.l.b16 %v518
        %v753 = vunpack.c.l.b16 %v519
        %v754 = vunpack.c.l.b16 %v520
        %v755 = vunpack.c.l.b16 %v521
        %v756 = vunpack.c.l.b16 %v522
        %v757 = vunpack.c.l.b16 %v523
        %v758 = vunpack.c.l.b16 %v524
        %v759 = vunpack.c.l.b16 %v525
        %v760 = vunpack.c.l.b16 %v526
        %v761 = vpack.c.b16 %v746, %v745
        %v762 = vpack.c.b16 %v748, %v747
        %v763 = vpack.c.b16 %v750, %v749
        %v764 = vpack.c.b16 %v752, %v751
        %v765 = vpack.c.b16 %v754, %v753
        %v766 = vpack.c.b16 %v756, %v755
        %v767 = vpack.c.b16 %v758, %v757
        %v768 = vpack.c.b16 %v760, %v759
        %777 = vmatpush.bf16.msra.mxu0 %v768
        %778 = vmatpush.bf16.msra.mxu0 %v767
        %779 = vmatpush.bf16.msra.mxu0 %v766
        %780 = vmatpush.bf16.msra.mxu0 %v765
        %781 = vmatpush.bf16.msra.mxu0 %v764
        %782 = vmatpush.bf16.msra.mxu0 %v763
        %783 = vmatpush.bf16.msra.mxu0 %v762
        %784 = vmatpush.bf16.msra.mxu0 %v761
        %785 = vmatmul.bf16.gmra.mxu0 %v495
        %v786 = vpop.f32.mrf.mxu0
        %v787 = vadd.f32 %v650, %v786
        %v788 = vpop.f32.mrf.mxu0
        %v789 = vadd.f32 %v652, %v788
        %790 = vmatmul.bf16.gmra.mxu0 %v496
        %v791 = vpop.f32.mrf.mxu0
        %v792 = vadd.f32 %v655, %v791
        %v793 = vpop.f32.mrf.mxu0
        %v794 = vadd.f32 %v657, %v793
        %795 = vmatmul.bf16.gmra.mxu0 %v497
        %v796 = vpop.f32.mrf.mxu0
        %v797 = vadd.f32 %v660, %v796
        %v798 = vpop.f32.mrf.mxu0
        %v799 = vadd.f32 %v662, %v798
        %800 = vmatmul.bf16.gmra.mxu0 %v498
        %v801 = vpop.f32.mrf.mxu0
        %v802 = vadd.f32 %v665, %v801
        %v803 = vpop.f32.mrf.mxu0
        %v804 = vadd.f32 %v667, %v803
        %805 = vmatmul.bf16.gmra.mxu0 %v499
        %v806 = vpop.f32.mrf.mxu0
        %v807 = vadd.f32 %v670, %v806
        %v808 = vpop.f32.mrf.mxu0
        %v809 = vadd.f32 %v672, %v808
        %810 = vmatmul.bf16.gmra.mxu0 %v500
        %v811 = vpop.f32.mrf.mxu0
        %v812 = vadd.f32 %v675, %v811
        %v813 = vpop.f32.mrf.mxu0
        %v814 = vadd.f32 %v677, %v813
        %815 = vmatmul.bf16.gmra.mxu0 %v501
        %v816 = vpop.f32.mrf.mxu0
        %v817 = vadd.f32 %v680, %v816
        %v818 = vpop.f32.mrf.mxu0
        %v819 = vadd.f32 %v682, %v818
        %820 = vmatmul.bf16.gmra.mxu0 %v502
        %v821 = vpop.f32.mrf.mxu0
        %v822 = vadd.f32 %v685, %v821
        %v823 = vpop.f32.mrf.mxu0
        %v824 = vadd.f32 %v687, %v823
        %825 = vmatmul.bf16.gmra.mxu0 %v503
        %v826 = vpop.f32.mrf.mxu0
        %v827 = vadd.f32 %v690, %v826
        %v828 = vpop.f32.mrf.mxu0
        %v829 = vadd.f32 %v692, %v828
        %830 = vmatmul.bf16.gmra.mxu0 %v504
        %v831 = vpop.f32.mrf.mxu0
        %v832 = vadd.f32 %v695, %v831
        %v833 = vpop.f32.mrf.mxu0
        %v834 = vadd.f32 %v697, %v833
        %835 = vmatmul.bf16.gmra.mxu0 %v505
        %v836 = vpop.f32.mrf.mxu0
        %v837 = vadd.f32 %v700, %v836
        %v838 = vpop.f32.mrf.mxu0
        %v839 = vadd.f32 %v702, %v838
        %840 = vmatmul.bf16.gmra.mxu0 %v506
        %v841 = vpop.f32.mrf.mxu0
        %v842 = vadd.f32 %v705, %v841
        %v843 = vpop.f32.mrf.mxu0
        %v844 = vadd.f32 %v707, %v843
        %845 = vmatmul.bf16.gmra.mxu0 %v507
        %v846 = vpop.f32.mrf.mxu0
        %v847 = vadd.f32 %v710, %v846
        %v848 = vpop.f32.mrf.mxu0
        %v849 = vadd.f32 %v712, %v848
        %850 = vmatmul.bf16.gmra.mxu0 %v508
        %v851 = vpop.f32.mrf.mxu0
        %v852 = vadd.f32 %v715, %v851
        %v853 = vpop.f32.mrf.mxu0
        %v854 = vadd.f32 %v717, %v853
        %855 = vmatmul.bf16.gmra.mxu0 %v509
        %v856 = vpop.f32.mrf.mxu0
        %v857 = vadd.f32 %v720, %v856
        %v858 = vpop.f32.mrf.mxu0
        %v859 = vadd.f32 %v722, %v858
        %860 = vmatmul.bf16.gmra.mxu0 %v510
        %v861 = vpop.f32.mrf.mxu0
        %v862 = vadd.f32 %v725, %v861
        %v863 = vpop.f32.mrf.mxu0
        %v864 = vadd.f32 %v727, %v863
        %865 = vdwg.mxu0
        %v866 = vld [vmem:[#allocation2 + $0x9] sm:$0xff]
        %v867 = vld [vmem:[#allocation2 + $0x11] sm:$0xff]
        %v868 = vld [vmem:[#allocation2 + $0x29] sm:$0xff]
        %v869 = vld [vmem:[#allocation2 + $0x31] sm:$0xff]
        %v870 = vld [vmem:[#allocation2 + $0x49] sm:$0xff]
        %v871 = vld [vmem:[#allocation2 + $0x51] sm:$0xff]
        %v872 = vld [vmem:[#allocation2 + $0x69] sm:$0xff]
        %v873 = vld [vmem:[#allocation2 + $0x71] sm:$0xff]
        %v874 = vld [vmem:[#allocation2 + $0x89] sm:$0xff]
        %v875 = vld [vmem:[#allocation2 + $0x91] sm:$0xff]
        %v876 = vld [vmem:[#allocation2 + $0xa9] sm:$0xff]
        %v877 = vld [vmem:[#allocation2 + $0xb1] sm:$0xff]
        %v878 = vld [vmem:[#allocation2 + $0xc9] sm:$0xff]
        %v879 = vld [vmem:[#allocation2 + $0xd1] sm:$0xff]
        %v880 = vld [vmem:[#allocation2 + $0xe9] sm:$0xff]
        %v881 = vld [vmem:[#allocation2 + $0xf1] sm:$0xff]
        %v882 = vld [vmem:[#allocation2 + $0x109] sm:$0xff]
        %v883 = vld [vmem:[#allocation2 + $0x111] sm:$0xff]
        %v884 = vld [vmem:[#allocation2 + $0x129] sm:$0xff]
        %v885 = vld [vmem:[#allocation2 + $0x131] sm:$0xff]
        %v886 = vld [vmem:[#allocation2 + $0x149] sm:$0xff]
        %v887 = vld [vmem:[#allocation2 + $0x151] sm:$0xff]
        %v888 = vld [vmem:[#allocation2 + $0x169] sm:$0xff]
        %v889 = vld [vmem:[#allocation2 + $0x171] sm:$0xff]
        %v890 = vld [vmem:[#allocation2 + $0x189] sm:$0xff]
        %v891 = vld [vmem:[#allocation2 + $0x191] sm:$0xff]
        %v892 = vld [vmem:[#allocation2 + $0x1a9] sm:$0xff]
        %v893 = vld [vmem:[#allocation2 + $0x1b1] sm:$0xff]
        %v894 = vld [vmem:[#allocation2 + $0x1c9] sm:$0xff]
        %v895 = vld [vmem:[#allocation2 + $0x1d1] sm:$0xff]
        %v896 = vld [vmem:[#allocation2 + $0x1e9] sm:$0xff]
        %v897 = vld [vmem:[#allocation2 + $0x1f1] sm:$0xff]
        %v898 = vpack.c.bf16 %v867, %v866
        %v899 = vpack.c.bf16 %v869, %v868
        %v900 = vpack.c.bf16 %v871, %v870
        %v901 = vpack.c.bf16 %v873, %v872
        %v902 = vpack.c.bf16 %v875, %v874
        %v903 = vpack.c.bf16 %v877, %v876
        %v904 = vpack.c.bf16 %v879, %v878
        %v905 = vpack.c.bf16 %v881, %v880
        %v906 = vpack.c.bf16 %v883, %v882
        %v907 = vpack.c.bf16 %v885, %v884
        %v908 = vpack.c.bf16 %v887, %v886
        %v909 = vpack.c.bf16 %v889, %v888
        %v910 = vpack.c.bf16 %v891, %v890
        %v911 = vpack.c.bf16 %v893, %v892
        %v912 = vpack.c.bf16 %v895, %v894
        %v913 = vpack.c.bf16 %v897, %v896
        %s914 = scalar_lea.vmem %s235, 128 [#allocation7]
        %v915 = vld [vmem:[%s914] sm:$0xf]
        %v916 = vld [vmem:[%s914 + $0x4] sm:$0xf]
        %v917 = vld [vmem:[%s914 + $0x8] sm:$0xf]
        %v918 = vld [vmem:[%s914 + $0xc] sm:$0xf]
        %v919 = vld [vmem:[%s914 + $0x10] sm:$0xf]
        %v920 = vld [vmem:[%s914 + $0x14] sm:$0xf]
        %v921 = vld [vmem:[%s914 + $0x18] sm:$0xf]
        %v922 = vld [vmem:[%s914 + $0x1c] sm:$0xf]
        %v923 = vld [vmem:[%s914 + $0x20] sm:$0xf]
        %v924 = vld [vmem:[%s914 + $0x24] sm:$0xf]
        %v925 = vld [vmem:[%s914 + $0x28] sm:$0xf]
        %v926 = vld [vmem:[%s914 + $0x2c] sm:$0xf]
        %v927 = vld [vmem:[%s914 + $0x30] sm:$0xf]
        %v928 = vld [vmem:[%s914 + $0x34] sm:$0xf]
        %v929 = vld [vmem:[%s914 + $0x38] sm:$0xf]
        %v930 = vld [vmem:[%s914 + $0x3c] sm:$0xf]
        %v947 = vunpack.c.l.b16 %v915
        %v948 = vunpack.c.l.b16 %v916
        %v949 = vunpack.c.l.b16 %v917
        %v950 = vunpack.c.l.b16 %v918
        %v951 = vunpack.c.l.b16 %v919
        %v952 = vunpack.c.l.b16 %v920
        %v953 = vunpack.c.l.b16 %v921
        %v954 = vunpack.c.l.b16 %v922
        %v955 = vunpack.c.l.b16 %v923
        %v956 = vunpack.c.l.b16 %v924
        %v957 = vunpack.c.l.b16 %v925
        %v958 = vunpack.c.l.b16 %v926
        %v959 = vunpack.c.l.b16 %v927
        %v960 = vunpack.c.l.b16 %v928
        %v961 = vunpack.c.l.b16 %v929
        %v962 = vunpack.c.l.b16 %v930
        %v963 = vpack.c.b16 %v948, %v947
        %v964 = vpack.c.b16 %v950, %v949
        %v965 = vpack.c.b16 %v952, %v951
        %v966 = vpack.c.b16 %v954, %v953
        %v967 = vpack.c.b16 %v956, %v955
        %v968 = vpack.c.b16 %v958, %v957
        %v969 = vpack.c.b16 %v960, %v959
        %v970 = vpack.c.b16 %v962, %v961
        %979 = vmatpush.bf16.msra.mxu0 %v970
        %980 = vmatpush.bf16.msra.mxu0 %v969
        %981 = vmatpush.bf16.msra.mxu0 %v968
        %982 = vmatpush.bf16.msra.mxu0 %v967
        %983 = vmatpush.bf16.msra.mxu0 %v966
        %984 = vmatpush.bf16.msra.mxu0 %v965
        %985 = vmatpush.bf16.msra.mxu0 %v964
        %986 = vmatpush.bf16.msra.mxu0 %v963
        %987 = vmatmul.bf16.gmra.mxu0 %v898
        %v988 = vpop.f32.mrf.mxu0
        %v989 = vadd.f32 0.0, %v988
        %v990 = vpop.f32.mrf.mxu0
        %v991 = vadd.f32 0.0, %v990
        %992 = vmatmul.bf16.gmra.mxu0 %v899
        %v993 = vpop.f32.mrf.mxu0
        %v994 = vadd.f32 0.0, %v993
        %v995 = vpop.f32.mrf.mxu0
        %v996 = vadd.f32 0.0, %v995
        %997 = vmatmul.bf16.gmra.mxu0 %v900
        %v998 = vpop.f32.mrf.mxu0
        %v999 = vadd.f32 0.0, %v998
        %v1000 = vpop.f32.mrf.mxu0
        %v1001 = vadd.f32 0.0, %v1000
        %1002 = vmatmul.bf16.gmra.mxu0 %v901
        %v1003 = vpop.f32.mrf.mxu0
        %v1004 = vadd.f32 0.0, %v1003
        %v1005 = vpop.f32.mrf.mxu0
        %v1006 = vadd.f32 0.0, %v1005
        %1007 = vmatmul.bf16.gmra.mxu0 %v902
        %v1008 = vpop.f32.mrf.mxu0
        %v1009 = vadd.f32 0.0, %v1008
        %v1010 = vpop.f32.mrf.mxu0
        %v1011 = vadd.f32 0.0, %v1010
        %1012 = vmatmul.bf16.gmra.mxu0 %v903
        %v1013 = vpop.f32.mrf.mxu0
        %v1014 = vadd.f32 0.0, %v1013
        %v1015 = vpop.f32.mrf.mxu0
        %v1016 = vadd.f32 0.0, %v1015
        %1017 = vmatmul.bf16.gmra.mxu0 %v904
        %v1018 = vpop.f32.mrf.mxu0
        %v1019 = vadd.f32 0.0, %v1018
        %v1020 = vpop.f32.mrf.mxu0
        %v1021 = vadd.f32 0.0, %v1020
        %1022 = vmatmul.bf16.gmra.mxu0 %v905
        %v1023 = vpop.f32.mrf.mxu0
        %v1024 = vadd.f32 0.0, %v1023
        %v1025 = vpop.f32.mrf.mxu0
        %v1026 = vadd.f32 0.0, %v1025
        %1027 = vmatmul.bf16.gmra.mxu0 %v906
        %v1028 = vpop.f32.mrf.mxu0
        %v1029 = vadd.f32 0.0, %v1028
        %v1030 = vpop.f32.mrf.mxu0
        %v1031 = vadd.f32 0.0, %v1030
        %1032 = vmatmul.bf16.gmra.mxu0 %v907
        %v1033 = vpop.f32.mrf.mxu0
        %v1034 = vadd.f32 0.0, %v1033
        %v1035 = vpop.f32.mrf.mxu0
        %v1036 = vadd.f32 0.0, %v1035
        %1037 = vmatmul.bf16.gmra.mxu0 %v908
        %v1038 = vpop.f32.mrf.mxu0
        %v1039 = vadd.f32 0.0, %v1038
        %v1040 = vpop.f32.mrf.mxu0
        %v1041 = vadd.f32 0.0, %v1040
        %1042 = vmatmul.bf16.gmra.mxu0 %v909
        %v1043 = vpop.f32.mrf.mxu0
        %v1044 = vadd.f32 0.0, %v1043
        %v1045 = vpop.f32.mrf.mxu0
        %v1046 = vadd.f32 0.0, %v1045
        %1047 = vmatmul.bf16.gmra.mxu0 %v910
        %v1048 = vpop.f32.mrf.mxu0
        %v1049 = vadd.f32 0.0, %v1048
        %v1050 = vpop.f32.mrf.mxu0
        %v1051 = vadd.f32 0.0, %v1050
        %1052 = vmatmul.bf16.gmra.mxu0 %v911
        %v1053 = vpop.f32.mrf.mxu0
        %v1054 = vadd.f32 0.0, %v1053
        %v1055 = vpop.f32.mrf.mxu0
        %v1056 = vadd.f32 0.0, %v1055
        %1057 = vmatmul.bf16.gmra.mxu0 %v912
        %v1058 = vpop.f32.mrf.mxu0
        %v1059 = vadd.f32 0.0, %v1058
        %v1060 = vpop.f32.mrf.mxu0
        %v1061 = vadd.f32 0.0, %v1060
        %1062 = vmatmul.bf16.gmra.mxu0 %v913
        %v1063 = vpop.f32.mrf.mxu0
        %v1064 = vadd.f32 0.0, %v1063
        %v1065 = vpop.f32.mrf.mxu0
        %v1066 = vadd.f32 0.0, %v1065
        %1067 = vdwg.mxu0
        %v1068 = vadd.f32 %v787, %v989
        %v1069 = vadd.f32 %v789, %v991
        %v1070 = vadd.f32 %v792, %v994
        %v1071 = vadd.f32 %v794, %v996
        %v1072 = vadd.f32 %v797, %v999
        %v1073 = vadd.f32 %v799, %v1001
        %v1074 = vadd.f32 %v802, %v1004
        %v1075 = vadd.f32 %v804, %v1006
        %v1076 = vadd.f32 %v807, %v1009
        %v1077 = vadd.f32 %v809, %v1011
        %v1078 = vadd.f32 %v812, %v1014
        %v1079 = vadd.f32 %v814, %v1016
        %v1080 = vadd.f32 %v817, %v1019
        %v1081 = vadd.f32 %v819, %v1021
        %v1082 = vadd.f32 %v822, %v1024
        %v1083 = vadd.f32 %v824, %v1026
        %v1084 = vadd.f32 %v827, %v1029
        %v1085 = vadd.f32 %v829, %v1031
        %v1086 = vadd.f32 %v832, %v1034
        %v1087 = vadd.f32 %v834, %v1036
        %v1088 = vadd.f32 %v837, %v1039
        %v1089 = vadd.f32 %v839, %v1041
        %v1090 = vadd.f32 %v842, %v1044
        %v1091 = vadd.f32 %v844, %v1046
        %v1092 = vadd.f32 %v847, %v1049
        %v1093 = vadd.f32 %v849, %v1051
        %v1094 = vadd.f32 %v852, %v1054
        %v1095 = vadd.f32 %v854, %v1056
        %v1096 = vadd.f32 %v857, %v1059
        %v1097 = vadd.f32 %v859, %v1061
        %v1098 = vadd.f32 %v862, %v1064
        %v1099 = vadd.f32 %v864, %v1066
        %s1100 = scalar_lea.vmem [#allocation2], 32
        %v1101 = vld [vmem:[%s1100 + $0x7] sm:$0xff]
        %v1102 = vld [vmem:[%s1100 + $0xf] sm:$0xff]
        %v1103 = vld [vmem:[%s1100 + $0x27] sm:$0xff]
        %v1104 = vld [vmem:[%s1100 + $0x2f] sm:$0xff]
        %v1105 = vld [vmem:[%s1100 + $0x47] sm:$0xff]
        %v1106 = vld [vmem:[%s1100 + $0x4f] sm:$0xff]
        %v1107 = vld [vmem:[%s1100 + $0x67] sm:$0xff]
        %v1108 = vld [vmem:[%s1100 + $0x6f] sm:$0xff]
        %v1109 = vld [vmem:[%s1100 + $0x87] sm:$0xff]
        %v1110 = vld [vmem:[%s1100 + $0x8f] sm:$0xff]
        %v1111 = vld [vmem:[%s1100 + $0xa7] sm:$0xff]
        %v1112 = vld [vmem:[%s1100 + $0xaf] sm:$0xff]
        %v1113 = vld [vmem:[%s1100 + $0xc7] sm:$0xff]
        %v1114 = vld [vmem:[%s1100 + $0xcf] sm:$0xff]
        %v1115 = vld [vmem:[%s1100 + $0xe7] sm:$0xff]
        %v1116 = vld [vmem:[%s1100 + $0xef] sm:$0xff]
        %v1117 = vld [vmem:[%s1100 + $0x107] sm:$0xff]
        %v1118 = vld [vmem:[%s1100 + $0x10f] sm:$0xff]
        %v1119 = vld [vmem:[%s1100 + $0x127] sm:$0xff]
        %v1120 = vld [vmem:[%s1100 + $0x12f] sm:$0xff]
        %v1121 = vld [vmem:[%s1100 + $0x147] sm:$0xff]
        %v1122 = vld [vmem:[%s1100 + $0x14f] sm:$0xff]
        %v1123 = vld [vmem:[%s1100 + $0x167] sm:$0xff]
        %v1124 = vld [vmem:[%s1100 + $0x16f] sm:$0xff]
        %v1125 = vld [vmem:[%s1100 + $0x187] sm:$0xff]
        %v1126 = vld [vmem:[%s1100 + $0x18f] sm:$0xff]
        %v1127 = vld [vmem:[%s1100 + $0x1a7] sm:$0xff]
        %v1128 = vld [vmem:[%s1100 + $0x1af] sm:$0xff]
        %v1129 = vld [vmem:[%s1100 + $0x1c7] sm:$0xff]
        %v1130 = vld [vmem:[%s1100 + $0x1cf] sm:$0xff]
        %v1131 = vld [vmem:[%s1100 + $0x1e7] sm:$0xff]
        %v1132 = vld [vmem:[%s1100 + $0x1ef] sm:$0xff]
        %v1133 = vpack.c.bf16 %v1102, %v1101
        %v1134 = vpack.c.bf16 %v1104, %v1103
        %v1135 = vpack.c.bf16 %v1106, %v1105
        %v1136 = vpack.c.bf16 %v1108, %v1107
        %v1137 = vpack.c.bf16 %v1110, %v1109
        %v1138 = vpack.c.bf16 %v1112, %v1111
        %v1139 = vpack.c.bf16 %v1114, %v1113
        %v1140 = vpack.c.bf16 %v1116, %v1115
        %v1141 = vpack.c.bf16 %v1118, %v1117
        %v1142 = vpack.c.bf16 %v1120, %v1119
        %v1143 = vpack.c.bf16 %v1122, %v1121
        %v1144 = vpack.c.bf16 %v1124, %v1123
        %v1145 = vpack.c.bf16 %v1126, %v1125
        %v1146 = vpack.c.bf16 %v1128, %v1127
        %v1147 = vpack.c.bf16 %v1130, %v1129
        %v1148 = vpack.c.bf16 %v1132, %v1131
        %s1149 = scalar_lea.vmem %s235, 192 [#allocation7]
        %v1150 = vld [vmem:[%s1149] sm:$0xf]
        %v1151 = vld [vmem:[%s1149 + $0x4] sm:$0xf]
        %v1152 = vld [vmem:[%s1149 + $0x8] sm:$0xf]
        %v1153 = vld [vmem:[%s1149 + $0xc] sm:$0xf]
        %v1154 = vld [vmem:[%s1149 + $0x10] sm:$0xf]
        %v1155 = vld [vmem:[%s1149 + $0x14] sm:$0xf]
        %v1156 = vld [vmem:[%s1149 + $0x18] sm:$0xf]
        %v1157 = vld [vmem:[%s1149 + $0x1c] sm:$0xf]
        %v1158 = vld [vmem:[%s1149 + $0x20] sm:$0xf]
        %v1159 = vld [vmem:[%s1149 + $0x24] sm:$0xf]
        %v1160 = vld [vmem:[%s1149 + $0x28] sm:$0xf]
        %v1161 = vld [vmem:[%s1149 + $0x2c] sm:$0xf]
        %v1162 = vld [vmem:[%s1149 + $0x30] sm:$0xf]
        %v1163 = vld [vmem:[%s1149 + $0x34] sm:$0xf]
        %v1164 = vld [vmem:[%s1149 + $0x38] sm:$0xf]
        %v1165 = vld [vmem:[%s1149 + $0x3c] sm:$0xf]
        %v1182 = vunpack.c.l.b16 %v1150
        %v1183 = vunpack.c.l.b16 %v1151
        %v1184 = vunpack.c.l.b16 %v1152
        %v1185 = vunpack.c.l.b16 %v1153
        %v1186 = vunpack.c.l.b16 %v1154
        %v1187 = vunpack.c.l.b16 %v1155
        %v1188 = vunpack.c.l.b16 %v1156
        %v1189 = vunpack.c.l.b16 %v1157
        %v1190 = vunpack.c.l.b16 %v1158
        %v1191 = vunpack.c.l.b16 %v1159
        %v1192 = vunpack.c.l.b16 %v1160
        %v1193 = vunpack.c.l.b16 %v1161
        %v1194 = vunpack.c.l.b16 %v1162
        %v1195 = vunpack.c.l.b16 %v1163
        %v1196 = vunpack.c.l.b16 %v1164
        %v1197 = vunpack.c.l.b16 %v1165
        %v1198 = vpack.c.b16 %v1183, %v1182
        %v1199 = vpack.c.b16 %v1185, %v1184
        %v1200 = vpack.c.b16 %v1187, %v1186
        %v1201 = vpack.c.b16 %v1189, %v1188
        %v1202 = vpack.c.b16 %v1191, %v1190
        %v1203 = vpack.c.b16 %v1193, %v1192
        %v1204 = vpack.c.b16 %v1195, %v1194
        %v1205 = vpack.c.b16 %v1197, %v1196
        %1214 = vmatpush.bf16.msra.mxu0 %v1205
        %1215 = vmatpush.bf16.msra.mxu0 %v1204
        %1216 = vmatpush.bf16.msra.mxu0 %v1203
        %1217 = vmatpush.bf16.msra.mxu0 %v1202
        %1218 = vmatpush.bf16.msra.mxu0 %v1201
        %1219 = vmatpush.bf16.msra.mxu0 %v1200
        %1220 = vmatpush.bf16.msra.mxu0 %v1199
        %1221 = vmatpush.bf16.msra.mxu0 %v1198
        %1222 = vmatmul.bf16.gmra.mxu0 %v1133
        %v1223 = vpop.f32.mrf.mxu0
        %v1224 = vadd.f32 0.0, %v1223
        %v1225 = vpop.f32.mrf.mxu0
        %v1226 = vadd.f32 0.0, %v1225
        %1227 = vmatmul.bf16.gmra.mxu0 %v1134
        %v1228 = vpop.f32.mrf.mxu0
        %v1229 = vadd.f32 0.0, %v1228
        %v1230 = vpop.f32.mrf.mxu0
        %v1231 = vadd.f32 0.0, %v1230
        %1232 = vmatmul.bf16.gmra.mxu0 %v1135
        %v1233 = vpop.f32.mrf.mxu0
        %v1234 = vadd.f32 0.0, %v1233
        %v1235 = vpop.f32.mrf.mxu0
        %v1236 = vadd.f32 0.0, %v1235
        %1237 = vmatmul.bf16.gmra.mxu0 %v1136
        %v1238 = vpop.f32.mrf.mxu0
        %v1239 = vadd.f32 0.0, %v1238
        %v1240 = vpop.f32.mrf.mxu0
        %v1241 = vadd.f32 0.0, %v1240
        %1242 = vmatmul.bf16.gmra.mxu0 %v1137
        %v1243 = vpop.f32.mrf.mxu0
        %v1244 = vadd.f32 0.0, %v1243
        %v1245 = vpop.f32.mrf.mxu0
        %v1246 = vadd.f32 0.0, %v1245
        %1247 = vmatmul.bf16.gmra.mxu0 %v1138
        %v1248 = vpop.f32.mrf.mxu0
        %v1249 = vadd.f32 0.0, %v1248
        %v1250 = vpop.f32.mrf.mxu0
        %v1251 = vadd.f32 0.0, %v1250
        %1252 = vmatmul.bf16.gmra.mxu0 %v1139
        %v1253 = vpop.f32.mrf.mxu0
        %v1254 = vadd.f32 0.0, %v1253
        %v1255 = vpop.f32.mrf.mxu0
        %v1256 = vadd.f32 0.0, %v1255
        %1257 = vmatmul.bf16.gmra.mxu0 %v1140
        %v1258 = vpop.f32.mrf.mxu0
        %v1259 = vadd.f32 0.0, %v1258
        %v1260 = vpop.f32.mrf.mxu0
        %v1261 = vadd.f32 0.0, %v1260
        %1262 = vmatmul.bf16.gmra.mxu0 %v1141
        %v1263 = vpop.f32.mrf.mxu0
        %v1264 = vadd.f32 0.0, %v1263
        %v1265 = vpop.f32.mrf.mxu0
        %v1266 = vadd.f32 0.0, %v1265
        %1267 = vmatmul.bf16.gmra.mxu0 %v1142
        %v1268 = vpop.f32.mrf.mxu0
        %v1269 = vadd.f32 0.0, %v1268
        %v1270 = vpop.f32.mrf.mxu0
        %v1271 = vadd.f32 0.0, %v1270
        %1272 = vmatmul.bf16.gmra.mxu0 %v1143
        %v1273 = vpop.f32.mrf.mxu0
        %v1274 = vadd.f32 0.0, %v1273
        %v1275 = vpop.f32.mrf.mxu0
        %v1276 = vadd.f32 0.0, %v1275
        %1277 = vmatmul.bf16.gmra.mxu0 %v1144
        %v1278 = vpop.f32.mrf.mxu0
        %v1279 = vadd.f32 0.0, %v1278
        %v1280 = vpop.f32.mrf.mxu0
        %v1281 = vadd.f32 0.0, %v1280
        %1282 = vmatmul.bf16.gmra.mxu0 %v1145
        %v1283 = vpop.f32.mrf.mxu0
        %v1284 = vadd.f32 0.0, %v1283
        %v1285 = vpop.f32.mrf.mxu0
        %v1286 = vadd.f32 0.0, %v1285
        %1287 = vmatmul.bf16.gmra.mxu0 %v1146
        %v1288 = vpop.f32.mrf.mxu0
        %v1289 = vadd.f32 0.0, %v1288
        %v1290 = vpop.f32.mrf.mxu0
        %v1291 = vadd.f32 0.0, %v1290
        %1292 = vmatmul.bf16.gmra.mxu0 %v1147
        %v1293 = vpop.f32.mrf.mxu0
        %v1294 = vadd.f32 0.0, %v1293
        %v1295 = vpop.f32.mrf.mxu0
        %v1296 = vadd.f32 0.0, %v1295
        %1297 = vmatmul.bf16.gmra.mxu0 %v1148
        %v1298 = vpop.f32.mrf.mxu0
        %v1299 = vadd.f32 0.0, %v1298
        %v1300 = vpop.f32.mrf.mxu0
        %v1301 = vadd.f32 0.0, %v1300
        %1302 = vdwg.mxu0
        %v1303 = vadd.f32 %v1068, %v1224
        %v1304 = vadd.f32 %v1069, %v1226
        %v1305 = vadd.f32 %v1070, %v1229
        %v1306 = vadd.f32 %v1071, %v1231
        %v1307 = vadd.f32 %v1072, %v1234
        %v1308 = vadd.f32 %v1073, %v1236
        %v1309 = vadd.f32 %v1074, %v1239
        %v1310 = vadd.f32 %v1075, %v1241
        %v1311 = vadd.f32 %v1076, %v1244
        %v1312 = vadd.f32 %v1077, %v1246
        %v1313 = vadd.f32 %v1078, %v1249
        %v1314 = vadd.f32 %v1079, %v1251
        %v1315 = vadd.f32 %v1080, %v1254
        %v1316 = vadd.f32 %v1081, %v1256
        %v1317 = vadd.f32 %v1082, %v1259
        %v1318 = vadd.f32 %v1083, %v1261
        %v1319 = vadd.f32 %v1084, %v1264
        %v1320 = vadd.f32 %v1085, %v1266
        %v1321 = vadd.f32 %v1086, %v1269
        %v1322 = vadd.f32 %v1087, %v1271
        %v1323 = vadd.f32 %v1088, %v1274
        %v1324 = vadd.f32 %v1089, %v1276
        %v1325 = vadd.f32 %v1090, %v1279
        %v1326 = vadd.f32 %v1091, %v1281
        %v1327 = vadd.f32 %v1092, %v1284
        %v1328 = vadd.f32 %v1093, %v1286
        %v1329 = vadd.f32 %v1094, %v1289
        %v1330 = vadd.f32 %v1095, %v1291
        %v1331 = vadd.f32 %v1096, %v1294
        %v1332 = vadd.f32 %v1097, %v1296
        %v1333 = vadd.f32 %v1098, %v1299
        %v1334 = vadd.f32 %v1099, %v1301
        %v1335 = vld [vmem:[%s1100 + $0x8] sm:$0xff]
        %v1336 = vld [vmem:[%s1100 + $0x10] sm:$0xff]
        %v1337 = vld [vmem:[%s1100 + $0x28] sm:$0xff]
        %v1338 = vld [vmem:[%s1100 + $0x30] sm:$0xff]
        %v1339 = vld [vmem:[%s1100 + $0x48] sm:$0xff]
        %v1340 = vld [vmem:[%s1100 + $0x50] sm:$0xff]
        %v1341 = vld [vmem:[%s1100 + $0x68] sm:$0xff]
        %v1342 = vld [vmem:[%s1100 + $0x70] sm:$0xff]
        %v1343 = vld [vmem:[%s1100 + $0x88] sm:$0xff]
        %v1344 = vld [vmem:[%s1100 + $0x90] sm:$0xff]
        %v1345 = vld [vmem:[%s1100 + $0xa8] sm:$0xff]
        %v1346 = vld [vmem:[%s1100 + $0xb0] sm:$0xff]
        %v1347 = vld [vmem:[%s1100 + $0xc8] sm:$0xff]
        %v1348 = vld [vmem:[%s1100 + $0xd0] sm:$0xff]
        %v1349 = vld [vmem:[%s1100 + $0xe8] sm:$0xff]
        %v1350 = vld [vmem:[%s1100 + $0xf0] sm:$0xff]
        %v1351 = vld [vmem:[%s1100 + $0x108] sm:$0xff]
        %v1352 = vld [vmem:[%s1100 + $0x110] sm:$0xff]
        %v1353 = vld [vmem:[%s1100 + $0x128] sm:$0xff]
        %v1354 = vld [vmem:[%s1100 + $0x130] sm:$0xff]
        %v1355 = vld [vmem:[%s1100 + $0x148] sm:$0xff]
        %v1356 = vld [vmem:[%s1100 + $0x150] sm:$0xff]
        %v1357 = vld [vmem:[%s1100 + $0x168] sm:$0xff]
        %v1358 = vld [vmem:[%s1100 + $0x170] sm:$0xff]
        %v1359 = vld [vmem:[%s1100 + $0x188] sm:$0xff]
        %v1360 = vld [vmem:[%s1100 + $0x190] sm:$0xff]
        %v1361 = vld [vmem:[%s1100 + $0x1a8] sm:$0xff]
        %v1362 = vld [vmem:[%s1100 + $0x1b0] sm:$0xff]
        %v1363 = vld [vmem:[%s1100 + $0x1c8] sm:$0xff]
        %v1364 = vld [vmem:[%s1100 + $0x1d0] sm:$0xff]
        %v1365 = vld [vmem:[%s1100 + $0x1e8] sm:$0xff]
        %v1366 = vld [vmem:[%s1100 + $0x1f0] sm:$0xff]
        %v1367 = vpack.c.bf16 %v1336, %v1335
        %v1368 = vpack.c.bf16 %v1338, %v1337
        %v1369 = vpack.c.bf16 %v1340, %v1339
        %v1370 = vpack.c.bf16 %v1342, %v1341
        %v1371 = vpack.c.bf16 %v1344, %v1343
        %v1372 = vpack.c.bf16 %v1346, %v1345
        %v1373 = vpack.c.bf16 %v1348, %v1347
        %v1374 = vpack.c.bf16 %v1350, %v1349
        %v1375 = vpack.c.bf16 %v1352, %v1351
        %v1376 = vpack.c.bf16 %v1354, %v1353
        %v1377 = vpack.c.bf16 %v1356, %v1355
        %v1378 = vpack.c.bf16 %v1358, %v1357
        %v1379 = vpack.c.bf16 %v1360, %v1359
        %v1380 = vpack.c.bf16 %v1362, %v1361
        %v1381 = vpack.c.bf16 %v1364, %v1363
        %v1382 = vpack.c.bf16 %v1366, %v1365
        %s1383 = scalar_lea.vmem %s235, 256 [#allocation7]
        %v1384 = vld [vmem:[%s1383] sm:$0xf]
        %v1385 = vld [vmem:[%s1383 + $0x4] sm:$0xf]
        %v1386 = vld [vmem:[%s1383 + $0x8] sm:$0xf]
        %v1387 = vld [vmem:[%s1383 + $0xc] sm:$0xf]
        %v1388 = vld [vmem:[%s1383 + $0x10] sm:$0xf]
        %v1389 = vld [vmem:[%s1383 + $0x14] sm:$0xf]
        %v1390 = vld [vmem:[%s1383 + $0x18] sm:$0xf]
        %v1391 = vld [vmem:[%s1383 + $0x1c] sm:$0xf]
        %v1392 = vld [vmem:[%s1383 + $0x20] sm:$0xf]
        %v1393 = vld [vmem:[%s1383 + $0x24] sm:$0xf]
        %v1394 = vld [vmem:[%s1383 + $0x28] sm:$0xf]
        %v1395 = vld [vmem:[%s1383 + $0x2c] sm:$0xf]
        %v1396 = vld [vmem:[%s1383 + $0x30] sm:$0xf]
        %v1397 = vld [vmem:[%s1383 + $0x34] sm:$0xf]
        %v1398 = vld [vmem:[%s1383 + $0x38] sm:$0xf]
        %v1399 = vld [vmem:[%s1383 + $0x3c] sm:$0xf]
        %v1416 = vunpack.c.l.b16 %v1384
        %v1417 = vunpack.c.l.b16 %v1385
        %v1418 = vunpack.c.l.b16 %v1386
        %v1419 = vunpack.c.l.b16 %v1387
        %v1420 = vunpack.c.l.b16 %v1388
        %v1421 = vunpack.c.l.b16 %v1389
        %v1422 = vunpack.c.l.b16 %v1390
        %v1423 = vunpack.c.l.b16 %v1391
        %v1424 = vunpack.c.l.b16 %v1392
        %v1425 = vunpack.c.l.b16 %v1393
        %v1426 = vunpack.c.l.b16 %v1394
        %v1427 = vunpack.c.l.b16 %v1395
        %v1428 = vunpack.c.l.b16 %v1396
        %v1429 = vunpack.c.l.b16 %v1397
        %v1430 = vunpack.c.l.b16 %v1398
        %v1431 = vunpack.c.l.b16 %v1399
        %v1432 = vpack.c.b16 %v1417, %v1416
        %v1433 = vpack.c.b16 %v1419, %v1418
        %v1434 = vpack.c.b16 %v1421, %v1420
        %v1435 = vpack.c.b16 %v1423, %v1422
        %v1436 = vpack.c.b16 %v1425, %v1424
        %v1437 = vpack.c.b16 %v1427, %v1426
        %v1438 = vpack.c.b16 %v1429, %v1428
        %v1439 = vpack.c.b16 %v1431, %v1430
        %1448 = vmatpush.bf16.msra.mxu0 %v1439
        %1449 = vmatpush.bf16.msra.mxu0 %v1438
        %1450 = vmatpush.bf16.msra.mxu0 %v1437
        %1451 = vmatpush.bf16.msra.mxu0 %v1436
        %1452 = vmatpush.bf16.msra.mxu0 %v1435
        %1453 = vmatpush.bf16.msra.mxu0 %v1434
        %1454 = vmatpush.bf16.msra.mxu0 %v1433
        %1455 = vmatpush.bf16.msra.mxu0 %v1432
        %1456 = vmatmul.bf16.gmra.mxu0 %v1367
        %v1457 = vpop.f32.mrf.mxu0
        %v1458 = vadd.f32 0.0, %v1457
        %v1459 = vpop.f32.mrf.mxu0
        %v1460 = vadd.f32 0.0, %v1459
        %1461 = vmatmul.bf16.gmra.mxu0 %v1368
        %v1462 = vpop.f32.mrf.mxu0
        %v1463 = vadd.f32 0.0, %v1462
        %v1464 = vpop.f32.mrf.mxu0
        %v1465 = vadd.f32 0.0, %v1464
        %1466 = vmatmul.bf16.gmra.mxu0 %v1369
        %v1467 = vpop.f32.mrf.mxu0
        %v1468 = vadd.f32 0.0, %v1467
        %v1469 = vpop.f32.mrf.mxu0
        %v1470 = vadd.f32 0.0, %v1469
        %1471 = vmatmul.bf16.gmra.mxu0 %v1370
        %v1472 = vpop.f32.mrf.mxu0
        %v1473 = vadd.f32 0.0, %v1472
        %v1474 = vpop.f32.mrf.mxu0
        %v1475 = vadd.f32 0.0, %v1474
        %1476 = vmatmul.bf16.gmra.mxu0 %v1371
        %v1477 = vpop.f32.mrf.mxu0
        %v1478 = vadd.f32 0.0, %v1477
        %v1479 = vpop.f32.mrf.mxu0
        %v1480 = vadd.f32 0.0, %v1479
        %1481 = vmatmul.bf16.gmra.mxu0 %v1372
        %v1482 = vpop.f32.mrf.mxu0
        %v1483 = vadd.f32 0.0, %v1482
        %v1484 = vpop.f32.mrf.mxu0
        %v1485 = vadd.f32 0.0, %v1484
        %1486 = vmatmul.bf16.gmra.mxu0 %v1373
        %v1487 = vpop.f32.mrf.mxu0
        %v1488 = vadd.f32 0.0, %v1487
        %v1489 = vpop.f32.mrf.mxu0
        %v1490 = vadd.f32 0.0, %v1489
        %1491 = vmatmul.bf16.gmra.mxu0 %v1374
        %v1492 = vpop.f32.mrf.mxu0
        %v1493 = vadd.f32 0.0, %v1492
        %v1494 = vpop.f32.mrf.mxu0
        %v1495 = vadd.f32 0.0, %v1494
        %1496 = vmatmul.bf16.gmra.mxu0 %v1375
        %v1497 = vpop.f32.mrf.mxu0
        %v1498 = vadd.f32 0.0, %v1497
        %v1499 = vpop.f32.mrf.mxu0
        %v1500 = vadd.f32 0.0, %v1499
        %1501 = vmatmul.bf16.gmra.mxu0 %v1376
        %v1502 = vpop.f32.mrf.mxu0
        %v1503 = vadd.f32 0.0, %v1502
        %v1504 = vpop.f32.mrf.mxu0
        %v1505 = vadd.f32 0.0, %v1504
        %1506 = vmatmul.bf16.gmra.mxu0 %v1377
        %v1507 = vpop.f32.mrf.mxu0
        %v1508 = vadd.f32 0.0, %v1507
        %v1509 = vpop.f32.mrf.mxu0
        %v1510 = vadd.f32 0.0, %v1509
        %1511 = vmatmul.bf16.gmra.mxu0 %v1378
        %v1512 = vpop.f32.mrf.mxu0
        %v1513 = vadd.f32 0.0, %v1512
        %v1514 = vpop.f32.mrf.mxu0
        %v1515 = vadd.f32 0.0, %v1514
        %1516 = vmatmul.bf16.gmra.mxu0 %v1379
        %v1517 = vpop.f32.mrf.mxu0
        %v1518 = vadd.f32 0.0, %v1517
        %v1519 = vpop.f32.mrf.mxu0
        %v1520 = vadd.f32 0.0, %v1519
        %1521 = vmatmul.bf16.gmra.mxu0 %v1380
        %v1522 = vpop.f32.mrf.mxu0
        %v1523 = vadd.f32 0.0, %v1522
        %v1524 = vpop.f32.mrf.mxu0
        %v1525 = vadd.f32 0.0, %v1524
        %1526 = vmatmul.bf16.gmra.mxu0 %v1381
        %v1527 = vpop.f32.mrf.mxu0
        %v1528 = vadd.f32 0.0, %v1527
        %v1529 = vpop.f32.mrf.mxu0
        %v1530 = vadd.f32 0.0, %v1529
        %1531 = vmatmul.bf16.gmra.mxu0 %v1382
        %v1532 = vpop.f32.mrf.mxu0
        %v1533 = vadd.f32 0.0, %v1532
        %v1534 = vpop.f32.mrf.mxu0
        %v1535 = vadd.f32 0.0, %v1534
        %1536 = vdwg.mxu0
        %v1537 = vadd.f32 %v1303, %v1458
        %v1538 = vadd.f32 %v1304, %v1460
        %v1539 = vadd.f32 %v1305, %v1463
        %v1540 = vadd.f32 %v1306, %v1465
        %v1541 = vadd.f32 %v1307, %v1468
        %v1542 = vadd.f32 %v1308, %v1470
        %v1543 = vadd.f32 %v1309, %v1473
        %v1544 = vadd.f32 %v1310, %v1475
        %v1545 = vadd.f32 %v1311, %v1478
        %v1546 = vadd.f32 %v1312, %v1480
        %v1547 = vadd.f32 %v1313, %v1483
        %v1548 = vadd.f32 %v1314, %v1485
        %v1549 = vadd.f32 %v1315, %v1488
        %v1550 = vadd.f32 %v1316, %v1490
        %v1551 = vadd.f32 %v1317, %v1493
        %v1552 = vadd.f32 %v1318, %v1495
        %v1553 = vadd.f32 %v1319, %v1498
        %v1554 = vadd.f32 %v1320, %v1500
        %v1555 = vadd.f32 %v1321, %v1503
        %v1556 = vadd.f32 %v1322, %v1505
        %v1557 = vadd.f32 %v1323, %v1508
        %v1558 = vadd.f32 %v1324, %v1510
        %v1559 = vadd.f32 %v1325, %v1513
        %v1560 = vadd.f32 %v1326, %v1515
        %v1561 = vadd.f32 %v1327, %v1518
        %v1562 = vadd.f32 %v1328, %v1520
        %v1563 = vadd.f32 %v1329, %v1523
        %v1564 = vadd.f32 %v1330, %v1525
        %v1565 = vadd.f32 %v1331, %v1528
        %v1566 = vadd.f32 %v1332, %v1530
        %v1567 = vadd.f32 %v1333, %v1533
        %v1568 = vadd.f32 %v1334, %v1535
        %v1569 = vld [vmem:[%s1100 + $0x9] sm:$0xff]
        %v1570 = vld [vmem:[%s1100 + $0x11] sm:$0xff]
        %v1571 = vld [vmem:[%s1100 + $0x29] sm:$0xff]
        %v1572 = vld [vmem:[%s1100 + $0x31] sm:$0xff]
        %v1573 = vld [vmem:[%s1100 + $0x49] sm:$0xff]
        %v1574 = vld [vmem:[%s1100 + $0x51] sm:$0xff]
        %v1575 = vld [vmem:[%s1100 + $0x69] sm:$0xff]
        %v1576 = vld [vmem:[%s1100 + $0x71] sm:$0xff]
        %v1577 = vld [vmem:[%s1100 + $0x89] sm:$0xff]
        %v1578 = vld [vmem:[%s1100 + $0x91] sm:$0xff]
        %v1579 = vld [vmem:[%s1100 + $0xa9] sm:$0xff]
        %v1580 = vld [vmem:[%s1100 + $0xb1] sm:$0xff]
        %v1581 = vld [vmem:[%s1100 + $0xc9] sm:$0xff]
        %v1582 = vld [vmem:[%s1100 + $0xd1] sm:$0xff]
        %v1583 = vld [vmem:[%s1100 + $0xe9] sm:$0xff]
        %v1584 = vld [vmem:[%s1100 + $0xf1] sm:$0xff]
        %v1585 = vld [vmem:[%s1100 + $0x109] sm:$0xff]
        %v1586 = vld [vmem:[%s1100 + $0x111] sm:$0xff]
        %v1587 = vld [vmem:[%s1100 + $0x129] sm:$0xff]
        %v1588 = vld [vmem:[%s1100 + $0x131] sm:$0xff]
        %v1589 = vld [vmem:[%s1100 + $0x149] sm:$0xff]
        %v1590 = vld [vmem:[%s1100 + $0x151] sm:$0xff]
        %v1591 = vld [vmem:[%s1100 + $0x169] sm:$0xff]
        %v1592 = vld [vmem:[%s1100 + $0x171] sm:$0xff]
        %v1593 = vld [vmem:[%s1100 + $0x189] sm:$0xff]
        %v1594 = vld [vmem:[%s1100 + $0x191] sm:$0xff]
        %v1595 = vld [vmem:[%s1100 + $0x1a9] sm:$0xff]
        %v1596 = vld [vmem:[%s1100 + $0x1b1] sm:$0xff]
        %v1597 = vld [vmem:[%s1100 + $0x1c9] sm:$0xff]
        %v1598 = vld [vmem:[%s1100 + $0x1d1] sm:$0xff]
        %v1599 = vld [vmem:[%s1100 + $0x1e9] sm:$0xff]
        %v1600 = vld [vmem:[%s1100 + $0x1f1] sm:$0xff]
        %v1601 = vpack.c.bf16 %v1570, %v1569
        %v1602 = vpack.c.bf16 %v1572, %v1571
        %v1603 = vpack.c.bf16 %v1574, %v1573
        %v1604 = vpack.c.bf16 %v1576, %v1575
        %v1605 = vpack.c.bf16 %v1578, %v1577
        %v1606 = vpack.c.bf16 %v1580, %v1579
        %v1607 = vpack.c.bf16 %v1582, %v1581
        %v1608 = vpack.c.bf16 %v1584, %v1583
        %v1609 = vpack.c.bf16 %v1586, %v1585
        %v1610 = vpack.c.bf16 %v1588, %v1587
        %v1611 = vpack.c.bf16 %v1590, %v1589
        %v1612 = vpack.c.bf16 %v1592, %v1591
        %v1613 = vpack.c.bf16 %v1594, %v1593
        %v1614 = vpack.c.bf16 %v1596, %v1595
        %v1615 = vpack.c.bf16 %v1598, %v1597
        %v1616 = vpack.c.bf16 %v1600, %v1599
        %s1617 = scalar_lea.vmem %s235, 320 [#allocation7]
        %v1618 = vld [vmem:[%s1617] sm:$0xf]
        %v1619 = vld [vmem:[%s1617 + $0x4] sm:$0xf]
        %v1620 = vld [vmem:[%s1617 + $0x8] sm:$0xf]
        %v1621 = vld [vmem:[%s1617 + $0xc] sm:$0xf]
        %v1622 = vld [vmem:[%s1617 + $0x10] sm:$0xf]
        %v1623 = vld [vmem:[%s1617 + $0x14] sm:$0xf]
        %v1624 = vld [vmem:[%s1617 + $0x18] sm:$0xf]
        %v1625 = vld [vmem:[%s1617 + $0x1c] sm:$0xf]
        %v1626 = vld [vmem:[%s1617 + $0x20] sm:$0xf]
        %v1627 = vld [vmem:[%s1617 + $0x24] sm:$0xf]
        %v1628 = vld [vmem:[%s1617 + $0x28] sm:$0xf]
        %v1629 = vld [vmem:[%s1617 + $0x2c] sm:$0xf]
        %v1630 = vld [vmem:[%s1617 + $0x30] sm:$0xf]
        %v1631 = vld [vmem:[%s1617 + $0x34] sm:$0xf]
        %v1632 = vld [vmem:[%s1617 + $0x38] sm:$0xf]
        %v1633 = vld [vmem:[%s1617 + $0x3c] sm:$0xf]
        %v1650 = vunpack.c.l.b16 %v1618
        %v1651 = vunpack.c.l.b16 %v1619
        %v1652 = vunpack.c.l.b16 %v1620
        %v1653 = vunpack.c.l.b16 %v1621
        %v1654 = vunpack.c.l.b16 %v1622
        %v1655 = vunpack.c.l.b16 %v1623
        %v1656 = vunpack.c.l.b16 %v1624
        %v1657 = vunpack.c.l.b16 %v1625
        %v1658 = vunpack.c.l.b16 %v1626
        %v1659 = vunpack.c.l.b16 %v1627
        %v1660 = vunpack.c.l.b16 %v1628
        %v1661 = vunpack.c.l.b16 %v1629
        %v1662 = vunpack.c.l.b16 %v1630
        %v1663 = vunpack.c.l.b16 %v1631
        %v1664 = vunpack.c.l.b16 %v1632
        %v1665 = vunpack.c.l.b16 %v1633
        %v1666 = vpack.c.b16 %v1651, %v1650
        %v1667 = vpack.c.b16 %v1653, %v1652
        %v1668 = vpack.c.b16 %v1655, %v1654
        %v1669 = vpack.c.b16 %v1657, %v1656
        %v1670 = vpack.c.b16 %v1659, %v1658
        %v1671 = vpack.c.b16 %v1661, %v1660
        %v1672 = vpack.c.b16 %v1663, %v1662
        %v1673 = vpack.c.b16 %v1665, %v1664
        %1682 = vmatpush.bf16.msra.mxu0 %v1673
        %1683 = vmatpush.bf16.msra.mxu0 %v1672
        %1684 = vmatpush.bf16.msra.mxu0 %v1671
        %1685 = vmatpush.bf16.msra.mxu0 %v1670
        %1686 = vmatpush.bf16.msra.mxu0 %v1669
        %1687 = vmatpush.bf16.msra.mxu0 %v1668
        %1688 = vmatpush.bf16.msra.mxu0 %v1667
        %1689 = vmatpush.bf16.msra.mxu0 %v1666
        %1690 = vmatmul.bf16.gmra.mxu0 %v1601
        %v1691 = vpop.f32.mrf.mxu0
        %v1692 = vadd.f32 0.0, %v1691
        %v1693 = vpop.f32.mrf.mxu0
        %v1694 = vadd.f32 0.0, %v1693
        %1695 = vmatmul.bf16.gmra.mxu0 %v1602
        %v1696 = vpop.f32.mrf.mxu0
        %v1697 = vadd.f32 0.0, %v1696
        %v1698 = vpop.f32.mrf.mxu0
        %v1699 = vadd.f32 0.0, %v1698
        %1700 = vmatmul.bf16.gmra.mxu0 %v1603
        %v1701 = vpop.f32.mrf.mxu0
        %v1702 = vadd.f32 0.0, %v1701
        %v1703 = vpop.f32.mrf.mxu0
        %v1704 = vadd.f32 0.0, %v1703
        %1705 = vmatmul.bf16.gmra.mxu0 %v1604
        %v1706 = vpop.f32.mrf.mxu0
        %v1707 = vadd.f32 0.0, %v1706
        %v1708 = vpop.f32.mrf.mxu0
        %v1709 = vadd.f32 0.0, %v1708
        %1710 = vmatmul.bf16.gmra.mxu0 %v1605
        %v1711 = vpop.f32.mrf.mxu0
        %v1712 = vadd.f32 0.0, %v1711
        %v1713 = vpop.f32.mrf.mxu0
        %v1714 = vadd.f32 0.0, %v1713
        %1715 = vmatmul.bf16.gmra.mxu0 %v1606
        %v1716 = vpop.f32.mrf.mxu0
        %v1717 = vadd.f32 0.0, %v1716
        %v1718 = vpop.f32.mrf.mxu0
        %v1719 = vadd.f32 0.0, %v1718
        %1720 = vmatmul.bf16.gmra.mxu0 %v1607
        %v1721 = vpop.f32.mrf.mxu0
        %v1722 = vadd.f32 0.0, %v1721
        %v1723 = vpop.f32.mrf.mxu0
        %v1724 = vadd.f32 0.0, %v1723
        %1725 = vmatmul.bf16.gmra.mxu0 %v1608
        %v1726 = vpop.f32.mrf.mxu0
        %v1727 = vadd.f32 0.0, %v1726
        %v1728 = vpop.f32.mrf.mxu0
        %v1729 = vadd.f32 0.0, %v1728
        %1730 = vmatmul.bf16.gmra.mxu0 %v1609
        %v1731 = vpop.f32.mrf.mxu0
        %v1732 = vadd.f32 0.0, %v1731
        %v1733 = vpop.f32.mrf.mxu0
        %v1734 = vadd.f32 0.0, %v1733
        %1735 = vmatmul.bf16.gmra.mxu0 %v1610
        %v1736 = vpop.f32.mrf.mxu0
        %v1737 = vadd.f32 0.0, %v1736
        %v1738 = vpop.f32.mrf.mxu0
        %v1739 = vadd.f32 0.0, %v1738
        %1740 = vmatmul.bf16.gmra.mxu0 %v1611
        %v1741 = vpop.f32.mrf.mxu0
        %v1742 = vadd.f32 0.0, %v1741
        %v1743 = vpop.f32.mrf.mxu0
        %v1744 = vadd.f32 0.0, %v1743
        %1745 = vmatmul.bf16.gmra.mxu0 %v1612
        %v1746 = vpop.f32.mrf.mxu0
        %v1747 = vadd.f32 0.0, %v1746
        %v1748 = vpop.f32.mrf.mxu0
        %v1749 = vadd.f32 0.0, %v1748
        %1750 = vmatmul.bf16.gmra.mxu0 %v1613
        %v1751 = vpop.f32.mrf.mxu0
        %v1752 = vadd.f32 0.0, %v1751
        %v1753 = vpop.f32.mrf.mxu0
        %v1754 = vadd.f32 0.0, %v1753
        %1755 = vmatmul.bf16.gmra.mxu0 %v1614
        %v1756 = vpop.f32.mrf.mxu0
        %v1757 = vadd.f32 0.0, %v1756
        %v1758 = vpop.f32.mrf.mxu0
        %v1759 = vadd.f32 0.0, %v1758
        %1760 = vmatmul.bf16.gmra.mxu0 %v1615
        %v1761 = vpop.f32.mrf.mxu0
        %v1762 = vadd.f32 0.0, %v1761
        %v1763 = vpop.f32.mrf.mxu0
        %v1764 = vadd.f32 0.0, %v1763
        %1765 = vmatmul.bf16.gmra.mxu0 %v1616
        %v1766 = vpop.f32.mrf.mxu0
        %v1767 = vadd.f32 0.0, %v1766
        %v1768 = vpop.f32.mrf.mxu0
        %v1769 = vadd.f32 0.0, %v1768
        %1770 = vdwg.mxu0
        %v1771 = vadd.f32 %v1537, %v1692
        %v1772 = vadd.f32 %v1538, %v1694
        %v1773 = vadd.f32 %v1539, %v1697
        %v1774 = vadd.f32 %v1540, %v1699
        %v1775 = vadd.f32 %v1541, %v1702
        %v1776 = vadd.f32 %v1542, %v1704
        %v1777 = vadd.f32 %v1543, %v1707
        %v1778 = vadd.f32 %v1544, %v1709
        %v1779 = vadd.f32 %v1545, %v1712
        %v1780 = vadd.f32 %v1546, %v1714
        %v1781 = vadd.f32 %v1547, %v1717
        %v1782 = vadd.f32 %v1548, %v1719
        %v1783 = vadd.f32 %v1549, %v1722
        %v1784 = vadd.f32 %v1550, %v1724
        %v1785 = vadd.f32 %v1551, %v1727
        %v1786 = vadd.f32 %v1552, %v1729
        %v1787 = vadd.f32 %v1553, %v1732
        %v1788 = vadd.f32 %v1554, %v1734
        %v1789 = vadd.f32 %v1555, %v1737
        %v1790 = vadd.f32 %v1556, %v1739
        %v1791 = vadd.f32 %v1557, %v1742
        %v1792 = vadd.f32 %v1558, %v1744
        %v1793 = vadd.f32 %v1559, %v1747
        %v1794 = vadd.f32 %v1560, %v1749
        %v1795 = vadd.f32 %v1561, %v1752
        %v1796 = vadd.f32 %v1562, %v1754
        %v1797 = vadd.f32 %v1563, %v1757
        %v1798 = vadd.f32 %v1564, %v1759
        %v1799 = vadd.f32 %v1565, %v1762
        %v1800 = vadd.f32 %v1566, %v1764
        %v1801 = vadd.f32 %v1567, %v1767
        %v1802 = vadd.f32 %v1568, %v1769
        %s1803 = scalar_lea.vmem [#allocation2], 64
        %v1804 = vld [vmem:[%s1803 + $0x7] sm:$0xff]
        %v1805 = vld [vmem:[%s1803 + $0xf] sm:$0xff]
        %v1806 = vld [vmem:[%s1803 + $0x27] sm:$0xff]
        %v1807 = vld [vmem:[%s1803 + $0x2f] sm:$0xff]
        %v1808 = vld [vmem:[%s1803 + $0x47] sm:$0xff]
        %v1809 = vld [vmem:[%s1803 + $0x4f] sm:$0xff]
        %v1810 = vld [vmem:[%s1803 + $0x67] sm:$0xff]
        %v1811 = vld [vmem:[%s1803 + $0x6f] sm:$0xff]
        %v1812 = vld [vmem:[%s1803 + $0x87] sm:$0xff]
        %v1813 = vld [vmem:[%s1803 + $0x8f] sm:$0xff]
        %v1814 = vld [vmem:[%s1803 + $0xa7] sm:$0xff]
        %v1815 = vld [vmem:[%s1803 + $0xaf] sm:$0xff]
        %v1816 = vld [vmem:[%s1803 + $0xc7] sm:$0xff]
        %v1817 = vld [vmem:[%s1803 + $0xcf] sm:$0xff]
        %v1818 = vld [vmem:[%s1803 + $0xe7] sm:$0xff]
        %v1819 = vld [vmem:[%s1803 + $0xef] sm:$0xff]
        %v1820 = vld [vmem:[%s1803 + $0x107] sm:$0xff]
        %v1821 = vld [vmem:[%s1803 + $0x10f] sm:$0xff]
        %v1822 = vld [vmem:[%s1803 + $0x127] sm:$0xff]
        %v1823 = vld [vmem:[%s1803 + $0x12f] sm:$0xff]
        %v1824 = vld [vmem:[%s1803 + $0x147] sm:$0xff]
        %v1825 = vld [vmem:[%s1803 + $0x14f] sm:$0xff]
        %v1826 = vld [vmem:[%s1803 + $0x167] sm:$0xff]
        %v1827 = vld [vmem:[%s1803 + $0x16f] sm:$0xff]
        %v1828 = vld [vmem:[%s1803 + $0x187] sm:$0xff]
        %v1829 = vld [vmem:[%s1803 + $0x18f] sm:$0xff]
        %v1830 = vld [vmem:[%s1803 + $0x1a7] sm:$0xff]
        %v1831 = vld [vmem:[%s1803 + $0x1af] sm:$0xff]
        %v1832 = vld [vmem:[%s1803 + $0x1c7] sm:$0xff]
        %v1833 = vld [vmem:[%s1803 + $0x1cf] sm:$0xff]
        %v1834 = vld [vmem:[%s1803 + $0x1e7] sm:$0xff]
        %v1835 = vld [vmem:[%s1803 + $0x1ef] sm:$0xff]
        %v1836 = vpack.c.bf16 %v1805, %v1804
        %v1837 = vpack.c.bf16 %v1807, %v1806
        %v1838 = vpack.c.bf16 %v1809, %v1808
        %v1839 = vpack.c.bf16 %v1811, %v1810
        %v1840 = vpack.c.bf16 %v1813, %v1812
        %v1841 = vpack.c.bf16 %v1815, %v1814
        %v1842 = vpack.c.bf16 %v1817, %v1816
        %v1843 = vpack.c.bf16 %v1819, %v1818
        %v1844 = vpack.c.bf16 %v1821, %v1820
        %v1845 = vpack.c.bf16 %v1823, %v1822
        %v1846 = vpack.c.bf16 %v1825, %v1824
        %v1847 = vpack.c.bf16 %v1827, %v1826
        %v1848 = vpack.c.bf16 %v1829, %v1828
        %v1849 = vpack.c.bf16 %v1831, %v1830
        %v1850 = vpack.c.bf16 %v1833, %v1832
        %v1851 = vpack.c.bf16 %v1835, %v1834
        %s1852 = scalar_lea.vmem %s235, 384 [#allocation7]
        %v1853 = vld [vmem:[%s1852] sm:$0xf]
        %v1854 = vld [vmem:[%s1852 + $0x4] sm:$0xf]
        %v1855 = vld [vmem:[%s1852 + $0x8] sm:$0xf]
        %v1856 = vld [vmem:[%s1852 + $0xc] sm:$0xf]
        %v1857 = vld [vmem:[%s1852 + $0x10] sm:$0xf]
        %v1858 = vld [vmem:[%s1852 + $0x14] sm:$0xf]
        %v1859 = vld [vmem:[%s1852 + $0x18] sm:$0xf]
        %v1860 = vld [vmem:[%s1852 + $0x1c] sm:$0xf]
        %v1861 = vld [vmem:[%s1852 + $0x20] sm:$0xf]
        %v1862 = vld [vmem:[%s1852 + $0x24] sm:$0xf]
        %v1863 = vld [vmem:[%s1852 + $0x28] sm:$0xf]
        %v1864 = vld [vmem:[%s1852 + $0x2c] sm:$0xf]
        %v1865 = vld [vmem:[%s1852 + $0x30] sm:$0xf]
        %v1866 = vld [vmem:[%s1852 + $0x34] sm:$0xf]
        %v1867 = vld [vmem:[%s1852 + $0x38] sm:$0xf]
        %v1868 = vld [vmem:[%s1852 + $0x3c] sm:$0xf]
        %v1885 = vunpack.c.l.b16 %v1853
        %v1886 = vunpack.c.l.b16 %v1854
        %v1887 = vunpack.c.l.b16 %v1855
        %v1888 = vunpack.c.l.b16 %v1856
        %v1889 = vunpack.c.l.b16 %v1857
        %v1890 = vunpack.c.l.b16 %v1858
        %v1891 = vunpack.c.l.b16 %v1859
        %v1892 = vunpack.c.l.b16 %v1860
        %v1893 = vunpack.c.l.b16 %v1861
        %v1894 = vunpack.c.l.b16 %v1862
        %v1895 = vunpack.c.l.b16 %v1863
        %v1896 = vunpack.c.l.b16 %v1864
        %v1897 = vunpack.c.l.b16 %v1865
        %v1898 = vunpack.c.l.b16 %v1866
        %v1899 = vunpack.c.l.b16 %v1867
        %v1900 = vunpack.c.l.b16 %v1868
        %v1901 = vpack.c.b16 %v1886, %v1885
        %v1902 = vpack.c.b16 %v1888, %v1887
        %v1903 = vpack.c.b16 %v1890, %v1889
        %v1904 = vpack.c.b16 %v1892, %v1891
        %v1905 = vpack.c.b16 %v1894, %v1893
        %v1906 = vpack.c.b16 %v1896, %v1895
        %v1907 = vpack.c.b16 %v1898, %v1897
        %v1908 = vpack.c.b16 %v1900, %v1899
        %1917 = vmatpush.bf16.msra.mxu0 %v1908
        %1918 = vmatpush.bf16.msra.mxu0 %v1907
        %1919 = vmatpush.bf16.msra.mxu0 %v1906
        %1920 = vmatpush.bf16.msra.mxu0 %v1905
        %1921 = vmatpush.bf16.msra.mxu0 %v1904
        %1922 = vmatpush.bf16.msra.mxu0 %v1903
        %1923 = vmatpush.bf16.msra.mxu0 %v1902
        %1924 = vmatpush.bf16.msra.mxu0 %v1901
        %1925 = vmatmul.bf16.gmra.mxu0 %v1836
        %v1926 = vpop.f32.mrf.mxu0
        %v1927 = vadd.f32 0.0, %v1926
        %v1928 = vpop.f32.mrf.mxu0
        %v1929 = vadd.f32 0.0, %v1928
        %1930 = vmatmul.bf16.gmra.mxu0 %v1837
        %v1931 = vpop.f32.mrf.mxu0
        %v1932 = vadd.f32 0.0, %v1931
        %v1933 = vpop.f32.mrf.mxu0
        %v1934 = vadd.f32 0.0, %v1933
        %1935 = vmatmul.bf16.gmra.mxu0 %v1838
        %v1936 = vpop.f32.mrf.mxu0
        %v1937 = vadd.f32 0.0, %v1936
        %v1938 = vpop.f32.mrf.mxu0
        %v1939 = vadd.f32 0.0, %v1938
        %1940 = vmatmul.bf16.gmra.mxu0 %v1839
        %v1941 = vpop.f32.mrf.mxu0
        %v1942 = vadd.f32 0.0, %v1941
        %v1943 = vpop.f32.mrf.mxu0
        %v1944 = vadd.f32 0.0, %v1943
        %1945 = vmatmul.bf16.gmra.mxu0 %v1840
        %v1946 = vpop.f32.mrf.mxu0
        %v1947 = vadd.f32 0.0, %v1946
        %v1948 = vpop.f32.mrf.mxu0
        %v1949 = vadd.f32 0.0, %v1948
        %1950 = vmatmul.bf16.gmra.mxu0 %v1841
        %v1951 = vpop.f32.mrf.mxu0
        %v1952 = vadd.f32 0.0, %v1951
        %v1953 = vpop.f32.mrf.mxu0
        %v1954 = vadd.f32 0.0, %v1953
        %1955 = vmatmul.bf16.gmra.mxu0 %v1842
        %v1956 = vpop.f32.mrf.mxu0
        %v1957 = vadd.f32 0.0, %v1956
        %v1958 = vpop.f32.mrf.mxu0
        %v1959 = vadd.f32 0.0, %v1958
        %1960 = vmatmul.bf16.gmra.mxu0 %v1843
        %v1961 = vpop.f32.mrf.mxu0
        %v1962 = vadd.f32 0.0, %v1961
        %v1963 = vpop.f32.mrf.mxu0
        %v1964 = vadd.f32 0.0, %v1963
        %1965 = vmatmul.bf16.gmra.mxu0 %v1844
        %v1966 = vpop.f32.mrf.mxu0
        %v1967 = vadd.f32 0.0, %v1966
        %v1968 = vpop.f32.mrf.mxu0
        %v1969 = vadd.f32 0.0, %v1968
        %1970 = vmatmul.bf16.gmra.mxu0 %v1845
        %v1971 = vpop.f32.mrf.mxu0
        %v1972 = vadd.f32 0.0, %v1971
        %v1973 = vpop.f32.mrf.mxu0
        %v1974 = vadd.f32 0.0, %v1973
        %1975 = vmatmul.bf16.gmra.mxu0 %v1846
        %v1976 = vpop.f32.mrf.mxu0
        %v1977 = vadd.f32 0.0, %v1976
        %v1978 = vpop.f32.mrf.mxu0
        %v1979 = vadd.f32 0.0, %v1978
        %1980 = vmatmul.bf16.gmra.mxu0 %v1847
        %v1981 = vpop.f32.mrf.mxu0
        %v1982 = vadd.f32 0.0, %v1981
        %v1983 = vpop.f32.mrf.mxu0
        %v1984 = vadd.f32 0.0, %v1983
        %1985 = vmatmul.bf16.gmra.mxu0 %v1848
        %v1986 = vpop.f32.mrf.mxu0
        %v1987 = vadd.f32 0.0, %v1986
        %v1988 = vpop.f32.mrf.mxu0
        %v1989 = vadd.f32 0.0, %v1988
        %1990 = vmatmul.bf16.gmra.mxu0 %v1849
        %v1991 = vpop.f32.mrf.mxu0
        %v1992 = vadd.f32 0.0, %v1991
        %v1993 = vpop.f32.mrf.mxu0
        %v1994 = vadd.f32 0.0, %v1993
        %1995 = vmatmul.bf16.gmra.mxu0 %v1850
        %v1996 = vpop.f32.mrf.mxu0
        %v1997 = vadd.f32 0.0, %v1996
        %v1998 = vpop.f32.mrf.mxu0
        %v1999 = vadd.f32 0.0, %v1998
        %2000 = vmatmul.bf16.gmra.mxu0 %v1851
        %v2001 = vpop.f32.mrf.mxu0
        %v2002 = vadd.f32 0.0, %v2001
        %v2003 = vpop.f32.mrf.mxu0
        %v2004 = vadd.f32 0.0, %v2003
        %2005 = vdwg.mxu0
        %v2006 = vadd.f32 %v1771, %v1927
        %v2007 = vadd.f32 %v1772, %v1929
        %v2008 = vadd.f32 %v1773, %v1932
        %v2009 = vadd.f32 %v1774, %v1934
        %v2010 = vadd.f32 %v1775, %v1937
        %v2011 = vadd.f32 %v1776, %v1939
        %v2012 = vadd.f32 %v1777, %v1942
        %v2013 = vadd.f32 %v1778, %v1944
        %v2014 = vadd.f32 %v1779, %v1947
        %v2015 = vadd.f32 %v1780, %v1949
        %v2016 = vadd.f32 %v1781, %v1952
        %v2017 = vadd.f32 %v1782, %v1954
        %v2018 = vadd.f32 %v1783, %v1957
        %v2019 = vadd.f32 %v1784, %v1959
        %v2020 = vadd.f32 %v1785, %v1962
        %v2021 = vadd.f32 %v1786, %v1964
        %v2022 = vadd.f32 %v1787, %v1967
        %v2023 = vadd.f32 %v1788, %v1969
        %v2024 = vadd.f32 %v1789, %v1972
        %v2025 = vadd.f32 %v1790, %v1974
        %v2026 = vadd.f32 %v1791, %v1977
        %v2027 = vadd.f32 %v1792, %v1979
        %v2028 = vadd.f32 %v1793, %v1982
        %v2029 = vadd.f32 %v1794, %v1984
        %v2030 = vadd.f32 %v1795, %v1987
        %v2031 = vadd.f32 %v1796, %v1989
        %v2032 = vadd.f32 %v1797, %v1992
        %v2033 = vadd.f32 %v1798, %v1994
        %v2034 = vadd.f32 %v1799, %v1997
        %v2035 = vadd.f32 %v1800, %v1999
        %v2036 = vadd.f32 %v1801, %v2002
        %v2037 = vadd.f32 %v1802, %v2004
        %v2038 = vld [vmem:[%s1803 + $0x8] sm:$0xff]
        %v2039 = vld [vmem:[%s1803 + $0x10] sm:$0xff]
        %v2040 = vld [vmem:[%s1803 + $0x28] sm:$0xff]
        %v2041 = vld [vmem:[%s1803 + $0x30] sm:$0xff]
        %v2042 = vld [vmem:[%s1803 + $0x48] sm:$0xff]
        %v2043 = vld [vmem:[%s1803 + $0x50] sm:$0xff]
        %v2044 = vld [vmem:[%s1803 + $0x68] sm:$0xff]
        %v2045 = vld [vmem:[%s1803 + $0x70] sm:$0xff]
        %v2046 = vld [vmem:[%s1803 + $0x88] sm:$0xff]
        %v2047 = vld [vmem:[%s1803 + $0x90] sm:$0xff]
        %v2048 = vld [vmem:[%s1803 + $0xa8] sm:$0xff]
        %v2049 = vld [vmem:[%s1803 + $0xb0] sm:$0xff]
        %v2050 = vld [vmem:[%s1803 + $0xc8] sm:$0xff]
        %v2051 = vld [vmem:[%s1803 + $0xd0] sm:$0xff]
        %v2052 = vld [vmem:[%s1803 + $0xe8] sm:$0xff]
        %v2053 = vld [vmem:[%s1803 + $0xf0] sm:$0xff]
        %v2054 = vld [vmem:[%s1803 + $0x108] sm:$0xff]
        %v2055 = vld [vmem:[%s1803 + $0x110] sm:$0xff]
        %v2056 = vld [vmem:[%s1803 + $0x128] sm:$0xff]
        %v2057 = vld [vmem:[%s1803 + $0x130] sm:$0xff]
        %v2058 = vld [vmem:[%s1803 + $0x148] sm:$0xff]
        %v2059 = vld [vmem:[%s1803 + $0x150] sm:$0xff]
        %v2060 = vld [vmem:[%s1803 + $0x168] sm:$0xff]
        %v2061 = vld [vmem:[%s1803 + $0x170] sm:$0xff]
        %v2062 = vld [vmem:[%s1803 + $0x188] sm:$0xff]
        %v2063 = vld [vmem:[%s1803 + $0x190] sm:$0xff]
        %v2064 = vld [vmem:[%s1803 + $0x1a8] sm:$0xff]
        %v2065 = vld [vmem:[%s1803 + $0x1b0] sm:$0xff]
        %v2066 = vld [vmem:[%s1803 + $0x1c8] sm:$0xff]
        %v2067 = vld [vmem:[%s1803 + $0x1d0] sm:$0xff]
        %v2068 = vld [vmem:[%s1803 + $0x1e8] sm:$0xff]
        %v2069 = vld [vmem:[%s1803 + $0x1f0] sm:$0xff]
        %v2070 = vpack.c.bf16 %v2039, %v2038
        %v2071 = vpack.c.bf16 %v2041, %v2040
        %v2072 = vpack.c.bf16 %v2043, %v2042
        %v2073 = vpack.c.bf16 %v2045, %v2044
        %v2074 = vpack.c.bf16 %v2047, %v2046
        %v2075 = vpack.c.bf16 %v2049, %v2048
        %v2076 = vpack.c.bf16 %v2051, %v2050
        %v2077 = vpack.c.bf16 %v2053, %v2052
        %v2078 = vpack.c.bf16 %v2055, %v2054
        %v2079 = vpack.c.bf16 %v2057, %v2056
        %v2080 = vpack.c.bf16 %v2059, %v2058
        %v2081 = vpack.c.bf16 %v2061, %v2060
        %v2082 = vpack.c.bf16 %v2063, %v2062
        %v2083 = vpack.c.bf16 %v2065, %v2064
        %v2084 = vpack.c.bf16 %v2067, %v2066
        %v2085 = vpack.c.bf16 %v2069, %v2068
        %s2086 = scalar_lea.vmem %s235, 448 [#allocation7]
        %v2087 = vld [vmem:[%s2086] sm:$0xf]
        %v2088 = vld [vmem:[%s2086 + $0x4] sm:$0xf]
        %v2089 = vld [vmem:[%s2086 + $0x8] sm:$0xf]
        %v2090 = vld [vmem:[%s2086 + $0xc] sm:$0xf]
        %v2091 = vld [vmem:[%s2086 + $0x10] sm:$0xf]
        %v2092 = vld [vmem:[%s2086 + $0x14] sm:$0xf]
        %v2093 = vld [vmem:[%s2086 + $0x18] sm:$0xf]
        %v2094 = vld [vmem:[%s2086 + $0x1c] sm:$0xf]
        %v2095 = vld [vmem:[%s2086 + $0x20] sm:$0xf]
        %v2096 = vld [vmem:[%s2086 + $0x24] sm:$0xf]
        %v2097 = vld [vmem:[%s2086 + $0x28] sm:$0xf]
        %v2098 = vld [vmem:[%s2086 + $0x2c] sm:$0xf]
        %v2099 = vld [vmem:[%s2086 + $0x30] sm:$0xf]
        %v2100 = vld [vmem:[%s2086 + $0x34] sm:$0xf]
        %v2101 = vld [vmem:[%s2086 + $0x38] sm:$0xf]
        %v2102 = vld [vmem:[%s2086 + $0x3c] sm:$0xf]
        %v2119 = vunpack.c.l.b16 %v2087
        %v2120 = vunpack.c.l.b16 %v2088
        %v2121 = vunpack.c.l.b16 %v2089
        %v2122 = vunpack.c.l.b16 %v2090
        %v2123 = vunpack.c.l.b16 %v2091
        %v2124 = vunpack.c.l.b16 %v2092
        %v2125 = vunpack.c.l.b16 %v2093
        %v2126 = vunpack.c.l.b16 %v2094
        %v2127 = vunpack.c.l.b16 %v2095
        %v2128 = vunpack.c.l.b16 %v2096
        %v2129 = vunpack.c.l.b16 %v2097
        %v2130 = vunpack.c.l.b16 %v2098
        %v2131 = vunpack.c.l.b16 %v2099
        %v2132 = vunpack.c.l.b16 %v2100
        %v2133 = vunpack.c.l.b16 %v2101
        %v2134 = vunpack.c.l.b16 %v2102
        %v2135 = vpack.c.b16 %v2120, %v2119
        %v2136 = vpack.c.b16 %v2122, %v2121
        %v2137 = vpack.c.b16 %v2124, %v2123
        %v2138 = vpack.c.b16 %v2126, %v2125
        %v2139 = vpack.c.b16 %v2128, %v2127
        %v2140 = vpack.c.b16 %v2130, %v2129
        %v2141 = vpack.c.b16 %v2132, %v2131
        %v2142 = vpack.c.b16 %v2134, %v2133
        %2151 = vmatpush.bf16.msra.mxu0 %v2142
        %2152 = vmatpush.bf16.msra.mxu0 %v2141
        %2153 = vmatpush.bf16.msra.mxu0 %v2140
        %2154 = vmatpush.bf16.msra.mxu0 %v2139
        %2155 = vmatpush.bf16.msra.mxu0 %v2138
        %2156 = vmatpush.bf16.msra.mxu0 %v2137
        %2157 = vmatpush.bf16.msra.mxu0 %v2136
        %2158 = vmatpush.bf16.msra.mxu0 %v2135
        %2159 = vmatmul.bf16.gmra.mxu0 %v2070
        %v2160 = vpop.f32.mrf.mxu0
        %v2161 = vadd.f32 0.0, %v2160
        %v2162 = vpop.f32.mrf.mxu0
        %v2163 = vadd.f32 0.0, %v2162
        %2164 = vmatmul.bf16.gmra.mxu0 %v2071
        %v2165 = vpop.f32.mrf.mxu0
        %v2166 = vadd.f32 0.0, %v2165
        %v2167 = vpop.f32.mrf.mxu0
        %v2168 = vadd.f32 0.0, %v2167
        %2169 = vmatmul.bf16.gmra.mxu0 %v2072
        %v2170 = vpop.f32.mrf.mxu0
        %v2171 = vadd.f32 0.0, %v2170
        %v2172 = vpop.f32.mrf.mxu0
        %v2173 = vadd.f32 0.0, %v2172
        %2174 = vmatmul.bf16.gmra.mxu0 %v2073
        %v2175 = vpop.f32.mrf.mxu0
        %v2176 = vadd.f32 0.0, %v2175
        %v2177 = vpop.f32.mrf.mxu0
        %v2178 = vadd.f32 0.0, %v2177
        %2179 = vmatmul.bf16.gmra.mxu0 %v2074
        %v2180 = vpop.f32.mrf.mxu0
        %v2181 = vadd.f32 0.0, %v2180
        %v2182 = vpop.f32.mrf.mxu0
        %v2183 = vadd.f32 0.0, %v2182
        %2184 = vmatmul.bf16.gmra.mxu0 %v2075
        %v2185 = vpop.f32.mrf.mxu0
        %v2186 = vadd.f32 0.0, %v2185
        %v2187 = vpop.f32.mrf.mxu0
        %v2188 = vadd.f32 0.0, %v2187
        %2189 = vmatmul.bf16.gmra.mxu0 %v2076
        %v2190 = vpop.f32.mrf.mxu0
        %v2191 = vadd.f32 0.0, %v2190
        %v2192 = vpop.f32.mrf.mxu0
        %v2193 = vadd.f32 0.0, %v2192
        %2194 = vmatmul.bf16.gmra.mxu0 %v2077
        %v2195 = vpop.f32.mrf.mxu0
        %v2196 = vadd.f32 0.0, %v2195
        %v2197 = vpop.f32.mrf.mxu0
        %v2198 = vadd.f32 0.0, %v2197
        %2199 = vmatmul.bf16.gmra.mxu0 %v2078
        %v2200 = vpop.f32.mrf.mxu0
        %v2201 = vadd.f32 0.0, %v2200
        %v2202 = vpop.f32.mrf.mxu0
        %v2203 = vadd.f32 0.0, %v2202
        %2204 = vmatmul.bf16.gmra.mxu0 %v2079
        %v2205 = vpop.f32.mrf.mxu0
        %v2206 = vadd.f32 0.0, %v2205
        %v2207 = vpop.f32.mrf.mxu0
        %v2208 = vadd.f32 0.0, %v2207
        %2209 = vmatmul.bf16.gmra.mxu0 %v2080
        %v2210 = vpop.f32.mrf.mxu0
        %v2211 = vadd.f32 0.0, %v2210
        %v2212 = vpop.f32.mrf.mxu0
        %v2213 = vadd.f32 0.0, %v2212
        %2214 = vmatmul.bf16.gmra.mxu0 %v2081
        %v2215 = vpop.f32.mrf.mxu0
        %v2216 = vadd.f32 0.0, %v2215
        %v2217 = vpop.f32.mrf.mxu0
        %v2218 = vadd.f32 0.0, %v2217
        %2219 = vmatmul.bf16.gmra.mxu0 %v2082
        %v2220 = vpop.f32.mrf.mxu0
        %v2221 = vadd.f32 0.0, %v2220
        %v2222 = vpop.f32.mrf.mxu0
        %v2223 = vadd.f32 0.0, %v2222
        %2224 = vmatmul.bf16.gmra.mxu0 %v2083
        %v2225 = vpop.f32.mrf.mxu0
        %v2226 = vadd.f32 0.0, %v2225
        %v2227 = vpop.f32.mrf.mxu0
        %v2228 = vadd.f32 0.0, %v2227
        %2229 = vmatmul.bf16.gmra.mxu0 %v2084
        %v2230 = vpop.f32.mrf.mxu0
        %v2231 = vadd.f32 0.0, %v2230
        %v2232 = vpop.f32.mrf.mxu0
        %v2233 = vadd.f32 0.0, %v2232
        %2234 = vmatmul.bf16.gmra.mxu0 %v2085
        %v2235 = vpop.f32.mrf.mxu0
        %v2236 = vadd.f32 0.0, %v2235
        %v2237 = vpop.f32.mrf.mxu0
        %v2238 = vadd.f32 0.0, %v2237
        %2239 = vdwg.mxu0
        %v2240 = vadd.f32 %v2006, %v2161
        %v2241 = vadd.f32 %v2007, %v2163
        %v2242 = vadd.f32 %v2008, %v2166
        %v2243 = vadd.f32 %v2009, %v2168
        %v2244 = vadd.f32 %v2010, %v2171
        %v2245 = vadd.f32 %v2011, %v2173
        %v2246 = vadd.f32 %v2012, %v2176
        %v2247 = vadd.f32 %v2013, %v2178
        %v2248 = vadd.f32 %v2014, %v2181
        %v2249 = vadd.f32 %v2015, %v2183
        %v2250 = vadd.f32 %v2016, %v2186
        %v2251 = vadd.f32 %v2017, %v2188
        %v2252 = vadd.f32 %v2018, %v2191
        %v2253 = vadd.f32 %v2019, %v2193
        %v2254 = vadd.f32 %v2020, %v2196
        %v2255 = vadd.f32 %v2021, %v2198
        %v2256 = vadd.f32 %v2022, %v2201
        %v2257 = vadd.f32 %v2023, %v2203
        %v2258 = vadd.f32 %v2024, %v2206
        %v2259 = vadd.f32 %v2025, %v2208
        %v2260 = vadd.f32 %v2026, %v2211
        %v2261 = vadd.f32 %v2027, %v2213
        %v2262 = vadd.f32 %v2028, %v2216
        %v2263 = vadd.f32 %v2029, %v2218
        %v2264 = vadd.f32 %v2030, %v2221
        %v2265 = vadd.f32 %v2031, %v2223
        %v2266 = vadd.f32 %v2032, %v2226
        %v2267 = vadd.f32 %v2033, %v2228
        %v2268 = vadd.f32 %v2034, %v2231
        %v2269 = vadd.f32 %v2035, %v2233
        %v2270 = vadd.f32 %v2036, %v2236
        %v2271 = vadd.f32 %v2037, %v2238
        %v2272 = vld [vmem:[%s1803 + $0x9] sm:$0xff]
        %v2273 = vld [vmem:[%s1803 + $0x11] sm:$0xff]
        %v2274 = vld [vmem:[%s1803 + $0x29] sm:$0xff]
        %v2275 = vld [vmem:[%s1803 + $0x31] sm:$0xff]
        %v2276 = vld [vmem:[%s1803 + $0x49] sm:$0xff]
        %v2277 = vld [vmem:[%s1803 + $0x51] sm:$0xff]
        %v2278 = vld [vmem:[%s1803 + $0x69] sm:$0xff]
        %v2279 = vld [vmem:[%s1803 + $0x71] sm:$0xff]
        %v2280 = vld [vmem:[%s1803 + $0x89] sm:$0xff]
        %v2281 = vld [vmem:[%s1803 + $0x91] sm:$0xff]
        %v2282 = vld [vmem:[%s1803 + $0xa9] sm:$0xff]
        %v2283 = vld [vmem:[%s1803 + $0xb1] sm:$0xff]
        %v2284 = vld [vmem:[%s1803 + $0xc9] sm:$0xff]
        %v2285 = vld [vmem:[%s1803 + $0xd1] sm:$0xff]
        %v2286 = vld [vmem:[%s1803 + $0xe9] sm:$0xff]
        %v2287 = vld [vmem:[%s1803 + $0xf1] sm:$0xff]
        %v2288 = vld [vmem:[%s1803 + $0x109] sm:$0xff]
        %v2289 = vld [vmem:[%s1803 + $0x111] sm:$0xff]
        %v2290 = vld [vmem:[%s1803 + $0x129] sm:$0xff]
        %v2291 = vld [vmem:[%s1803 + $0x131] sm:$0xff]
        %v2292 = vld [vmem:[%s1803 + $0x149] sm:$0xff]
        %v2293 = vld [vmem:[%s1803 + $0x151] sm:$0xff]
        %v2294 = vld [vmem:[%s1803 + $0x169] sm:$0xff]
        %v2295 = vld [vmem:[%s1803 + $0x171] sm:$0xff]
        %v2296 = vld [vmem:[%s1803 + $0x189] sm:$0xff]
        %v2297 = vld [vmem:[%s1803 + $0x191] sm:$0xff]
        %v2298 = vld [vmem:[%s1803 + $0x1a9] sm:$0xff]
        %v2299 = vld [vmem:[%s1803 + $0x1b1] sm:$0xff]
        %v2300 = vld [vmem:[%s1803 + $0x1c9] sm:$0xff]
        %v2301 = vld [vmem:[%s1803 + $0x1d1] sm:$0xff]
        %v2302 = vld [vmem:[%s1803 + $0x1e9] sm:$0xff]
        %v2303 = vld [vmem:[%s1803 + $0x1f1] sm:$0xff]
        %v2304 = vpack.c.bf16 %v2273, %v2272
        %v2305 = vpack.c.bf16 %v2275, %v2274
        %v2306 = vpack.c.bf16 %v2277, %v2276
        %v2307 = vpack.c.bf16 %v2279, %v2278
        %v2308 = vpack.c.bf16 %v2281, %v2280
        %v2309 = vpack.c.bf16 %v2283, %v2282
        %v2310 = vpack.c.bf16 %v2285, %v2284
        %v2311 = vpack.c.bf16 %v2287, %v2286
        %v2312 = vpack.c.bf16 %v2289, %v2288
        %v2313 = vpack.c.bf16 %v2291, %v2290
        %v2314 = vpack.c.bf16 %v2293, %v2292
        %v2315 = vpack.c.bf16 %v2295, %v2294
        %v2316 = vpack.c.bf16 %v2297, %v2296
        %v2317 = vpack.c.bf16 %v2299, %v2298
        %v2318 = vpack.c.bf16 %v2301, %v2300
        %v2319 = vpack.c.bf16 %v2303, %v2302
        %s2320 = scalar_lea.vmem %s235, 512 [#allocation7]
        %v2321 = vld [vmem:[%s2320] sm:$0xf]
        %v2322 = vld [vmem:[%s2320 + $0x4] sm:$0xf]
        %v2323 = vld [vmem:[%s2320 + $0x8] sm:$0xf]
        %v2324 = vld [vmem:[%s2320 + $0xc] sm:$0xf]
        %v2325 = vld [vmem:[%s2320 + $0x10] sm:$0xf]
        %v2326 = vld [vmem:[%s2320 + $0x14] sm:$0xf]
        %v2327 = vld [vmem:[%s2320 + $0x18] sm:$0xf]
        %v2328 = vld [vmem:[%s2320 + $0x1c] sm:$0xf]
        %v2329 = vld [vmem:[%s2320 + $0x20] sm:$0xf]
        %v2330 = vld [vmem:[%s2320 + $0x24] sm:$0xf]
        %v2331 = vld [vmem:[%s2320 + $0x28] sm:$0xf]
        %v2332 = vld [vmem:[%s2320 + $0x2c] sm:$0xf]
        %v2333 = vld [vmem:[%s2320 + $0x30] sm:$0xf]
        %v2334 = vld [vmem:[%s2320 + $0x34] sm:$0xf]
        %v2335 = vld [vmem:[%s2320 + $0x38] sm:$0xf]
        %v2336 = vld [vmem:[%s2320 + $0x3c] sm:$0xf]
        %v2353 = vunpack.c.l.b16 %v2321
        %v2354 = vunpack.c.l.b16 %v2322
        %v2355 = vunpack.c.l.b16 %v2323
        %v2356 = vunpack.c.l.b16 %v2324
        %v2357 = vunpack.c.l.b16 %v2325
        %v2358 = vunpack.c.l.b16 %v2326
        %v2359 = vunpack.c.l.b16 %v2327
        %v2360 = vunpack.c.l.b16 %v2328
        %v2361 = vunpack.c.l.b16 %v2329
        %v2362 = vunpack.c.l.b16 %v2330
        %v2363 = vunpack.c.l.b16 %v2331
        %v2364 = vunpack.c.l.b16 %v2332
        %v2365 = vunpack.c.l.b16 %v2333
        %v2366 = vunpack.c.l.b16 %v2334
        %v2367 = vunpack.c.l.b16 %v2335
        %v2368 = vunpack.c.l.b16 %v2336
        %v2369 = vpack.c.b16 %v2354, %v2353
        %v2370 = vpack.c.b16 %v2356, %v2355
        %v2371 = vpack.c.b16 %v2358, %v2357
        %v2372 = vpack.c.b16 %v2360, %v2359
        %v2373 = vpack.c.b16 %v2362, %v2361
        %v2374 = vpack.c.b16 %v2364, %v2363
        %v2375 = vpack.c.b16 %v2366, %v2365
        %v2376 = vpack.c.b16 %v2368, %v2367
        %2385 = vmatpush.bf16.msra.mxu0 %v2376
        %2386 = vmatpush.bf16.msra.mxu0 %v2375
        %2387 = vmatpush.bf16.msra.mxu0 %v2374
        %2388 = vmatpush.bf16.msra.mxu0 %v2373
        %2389 = vmatpush.bf16.msra.mxu0 %v2372
        %2390 = vmatpush.bf16.msra.mxu0 %v2371
        %2391 = vmatpush.bf16.msra.mxu0 %v2370
        %2392 = vmatpush.bf16.msra.mxu0 %v2369
        %2393 = vmatmul.bf16.gmra.mxu0 %v2304
        %v2394 = vpop.f32.mrf.mxu0
        %v2395 = vadd.f32 0.0, %v2394
        %v2396 = vpop.f32.mrf.mxu0
        %v2397 = vadd.f32 0.0, %v2396
        %2398 = vmatmul.bf16.gmra.mxu0 %v2305
        %v2399 = vpop.f32.mrf.mxu0
        %v2400 = vadd.f32 0.0, %v2399
        %v2401 = vpop.f32.mrf.mxu0
        %v2402 = vadd.f32 0.0, %v2401
        %2403 = vmatmul.bf16.gmra.mxu0 %v2306
        %v2404 = vpop.f32.mrf.mxu0
        %v2405 = vadd.f32 0.0, %v2404
        %v2406 = vpop.f32.mrf.mxu0
        %v2407 = vadd.f32 0.0, %v2406
        %2408 = vmatmul.bf16.gmra.mxu0 %v2307
        %v2409 = vpop.f32.mrf.mxu0
        %v2410 = vadd.f32 0.0, %v2409
        %v2411 = vpop.f32.mrf.mxu0
        %v2412 = vadd.f32 0.0, %v2411
        %2413 = vmatmul.bf16.gmra.mxu0 %v2308
        %v2414 = vpop.f32.mrf.mxu0
        %v2415 = vadd.f32 0.0, %v2414
        %v2416 = vpop.f32.mrf.mxu0
        %v2417 = vadd.f32 0.0, %v2416
        %2418 = vmatmul.bf16.gmra.mxu0 %v2309
        %v2419 = vpop.f32.mrf.mxu0
        %v2420 = vadd.f32 0.0, %v2419
        %v2421 = vpop.f32.mrf.mxu0
        %v2422 = vadd.f32 0.0, %v2421
        %2423 = vmatmul.bf16.gmra.mxu0 %v2310
        %v2424 = vpop.f32.mrf.mxu0
        %v2425 = vadd.f32 0.0, %v2424
        %v2426 = vpop.f32.mrf.mxu0
        %v2427 = vadd.f32 0.0, %v2426
        %2428 = vmatmul.bf16.gmra.mxu0 %v2311
        %v2429 = vpop.f32.mrf.mxu0
        %v2430 = vadd.f32 0.0, %v2429
        %v2431 = vpop.f32.mrf.mxu0
        %v2432 = vadd.f32 0.0, %v2431
        %2433 = vmatmul.bf16.gmra.mxu0 %v2312
        %v2434 = vpop.f32.mrf.mxu0
        %v2435 = vadd.f32 0.0, %v2434
        %v2436 = vpop.f32.mrf.mxu0
        %v2437 = vadd.f32 0.0, %v2436
        %2438 = vmatmul.bf16.gmra.mxu0 %v2313
        %v2439 = vpop.f32.mrf.mxu0
        %v2440 = vadd.f32 0.0, %v2439
        %v2441 = vpop.f32.mrf.mxu0
        %v2442 = vadd.f32 0.0, %v2441
        %2443 = vmatmul.bf16.gmra.mxu0 %v2314
        %v2444 = vpop.f32.mrf.mxu0
        %v2445 = vadd.f32 0.0, %v2444
        %v2446 = vpop.f32.mrf.mxu0
        %v2447 = vadd.f32 0.0, %v2446
        %2448 = vmatmul.bf16.gmra.mxu0 %v2315
        %v2449 = vpop.f32.mrf.mxu0
        %v2450 = vadd.f32 0.0, %v2449
        %v2451 = vpop.f32.mrf.mxu0
        %v2452 = vadd.f32 0.0, %v2451
        %2453 = vmatmul.bf16.gmra.mxu0 %v2316
        %v2454 = vpop.f32.mrf.mxu0
        %v2455 = vadd.f32 0.0, %v2454
        %v2456 = vpop.f32.mrf.mxu0
        %v2457 = vadd.f32 0.0, %v2456
        %2458 = vmatmul.bf16.gmra.mxu0 %v2317
        %v2459 = vpop.f32.mrf.mxu0
        %v2460 = vadd.f32 0.0, %v2459
        %v2461 = vpop.f32.mrf.mxu0
        %v2462 = vadd.f32 0.0, %v2461
        %2463 = vmatmul.bf16.gmra.mxu0 %v2318
        %v2464 = vpop.f32.mrf.mxu0
        %v2465 = vadd.f32 0.0, %v2464
        %v2466 = vpop.f32.mrf.mxu0
        %v2467 = vadd.f32 0.0, %v2466
        %2468 = vmatmul.bf16.gmra.mxu0 %v2319
        %v2469 = vpop.f32.mrf.mxu0
        %v2470 = vadd.f32 0.0, %v2469
        %v2471 = vpop.f32.mrf.mxu0
        %v2472 = vadd.f32 0.0, %v2471
        %2473 = vdwg.mxu0
        %v2474 = vadd.f32 %v2240, %v2395
        %v2475 = vadd.f32 %v2241, %v2397
        %v2476 = vadd.f32 %v2242, %v2400
        %v2477 = vadd.f32 %v2243, %v2402
        %v2478 = vadd.f32 %v2244, %v2405
        %v2479 = vadd.f32 %v2245, %v2407
        %v2480 = vadd.f32 %v2246, %v2410
        %v2481 = vadd.f32 %v2247, %v2412
        %v2482 = vadd.f32 %v2248, %v2415
        %v2483 = vadd.f32 %v2249, %v2417
        %v2484 = vadd.f32 %v2250, %v2420
        %v2485 = vadd.f32 %v2251, %v2422
        %v2486 = vadd.f32 %v2252, %v2425
        %v2487 = vadd.f32 %v2253, %v2427
        %v2488 = vadd.f32 %v2254, %v2430
        %v2489 = vadd.f32 %v2255, %v2432
        %v2490 = vadd.f32 %v2256, %v2435
        %v2491 = vadd.f32 %v2257, %v2437
        %v2492 = vadd.f32 %v2258, %v2440
        %v2493 = vadd.f32 %v2259, %v2442
        %v2494 = vadd.f32 %v2260, %v2445
        %v2495 = vadd.f32 %v2261, %v2447
        %v2496 = vadd.f32 %v2262, %v2450
        %v2497 = vadd.f32 %v2263, %v2452
        %v2498 = vadd.f32 %v2264, %v2455
        %v2499 = vadd.f32 %v2265, %v2457
        %v2500 = vadd.f32 %v2266, %v2460
        %v2501 = vadd.f32 %v2267, %v2462
        %v2502 = vadd.f32 %v2268, %v2465
        %v2503 = vadd.f32 %v2269, %v2467
        %v2504 = vadd.f32 %v2270, %v2470
        %v2505 = vadd.f32 %v2271, %v2472
        %v2506 = vld [vmem:[%s244] sm:$0x1]
        %v2508 = vperm.slane %v2506, 0
        %v2510 = vadd.f32 %v2474, %v2508
        %v2511 = vadd.f32 %v2475, %v2508
        %v2512 = vadd.f32 %v2476, %v2508
        %v2513 = vadd.f32 %v2477, %v2508
        %v2514 = vadd.f32 %v2478, %v2508
        %v2515 = vadd.f32 %v2479, %v2508
        %v2516 = vadd.f32 %v2480, %v2508
        %v2517 = vadd.f32 %v2481, %v2508
        %v2518 = vadd.f32 %v2482, %v2508
        %v2519 = vadd.f32 %v2483, %v2508
        %v2520 = vadd.f32 %v2484, %v2508
        %v2521 = vadd.f32 %v2485, %v2508
        %v2522 = vadd.f32 %v2486, %v2508
        %v2523 = vadd.f32 %v2487, %v2508
        %v2524 = vadd.f32 %v2488, %v2508
        %v2525 = vadd.f32 %v2489, %v2508
        %v2526 = vadd.f32 %v2490, %v2508
        %v2527 = vadd.f32 %v2491, %v2508
        %v2528 = vadd.f32 %v2492, %v2508
        %v2529 = vadd.f32 %v2493, %v2508
        %v2530 = vadd.f32 %v2494, %v2508
        %v2531 = vadd.f32 %v2495, %v2508
        %v2532 = vadd.f32 %v2496, %v2508
        %v2533 = vadd.f32 %v2497, %v2508
        %v2534 = vadd.f32 %v2498, %v2508
        %v2535 = vadd.f32 %v2499, %v2508
        %v2536 = vadd.f32 %v2500, %v2508
        %v2537 = vadd.f32 %v2501, %v2508
        %v2538 = vadd.f32 %v2502, %v2508
        %v2539 = vadd.f32 %v2503, %v2508
        %v2540 = vadd.f32 %v2504, %v2508
        %v2541 = vadd.f32 %v2505, %v2508
        %v2542 = vadd.f32 %v2510, %v2511
        %v2543 = vadd.f32 %v2542, %v2512
        %v2544 = vadd.f32 %v2543, %v2513
        %v2545 = vadd.f32 %v2544, %v2514
        %v2546 = vadd.f32 %v2545, %v2515
        %v2547 = vadd.f32 %v2546, %v2516
        %v2548 = vadd.f32 %v2547, %v2517
        %v2549 = vadd.f32 %v2548, %v2518
        %v2550 = vadd.f32 %v2549, %v2519
        %v2551 = vadd.f32 %v2550, %v2520
        %v2552 = vadd.f32 %v2551, %v2521
        %v2553 = vadd.f32 %v2552, %v2522
        %v2554 = vadd.f32 %v2553, %v2523
        %v2555 = vadd.f32 %v2554, %v2524
        %v2556 = vadd.f32 %v2555, %v2525
        %v2557 = vadd.f32 %v2556, %v2526
        %v2558 = vadd.f32 %v2557, %v2527
        %v2559 = vadd.f32 %v2558, %v2528
        %v2560 = vadd.f32 %v2559, %v2529
        %v2561 = vadd.f32 %v2560, %v2530
        %v2562 = vadd.f32 %v2561, %v2531
        %v2563 = vadd.f32 %v2562, %v2532
        %v2564 = vadd.f32 %v2563, %v2533
        %v2565 = vadd.f32 %v2564, %v2534
        %v2566 = vadd.f32 %v2565, %v2535
        %v2567 = vadd.f32 %v2566, %v2536
        %v2568 = vadd.f32 %v2567, %v2537
        %v2569 = vadd.f32 %v2568, %v2538
        %v2570 = vadd.f32 %v2569, %v2539
        %v2571 = vadd.f32 %v2570, %v2540
        %v2572 = vadd.f32 %v2571, %v2541
        %v2573 = vrot.slane %v2572, 4
        %v2574 = vadd.f32 %v2572, %v2573
        %v2575 = vrot.slane %v2574, 2
        %v2576 = vadd.f32 %v2574, %v2575
        %v2577 = vrot.slane %v2576, 1
        %v2578 = vadd.f32 %v2576, %v2577
        %v2579 = vrcp.pop 256.0
        %v2580 = vmul.f32 256.0, %v2579
        %v2581 = vsub.f32 1.0, %v2580
        %v2582 = vmul.f32 %v2579, %v2581
        %v2583 = vadd.f32 %v2579, %v2582
        %vm2584 = vweird.f32 %v2579
        %v2585 = vsel %vm2584, %v2579, %v2583
        %v2586 = vmul.f32 %v2578, %v2585
        %v2587 = vsub.f32 %v2510, %v2586
        %v2588 = vsub.f32 %v2511, %v2586
        %v2589 = vsub.f32 %v2512, %v2586
        %v2590 = vsub.f32 %v2513, %v2586
        %v2591 = vsub.f32 %v2514, %v2586
        %v2592 = vsub.f32 %v2515, %v2586
        %v2593 = vsub.f32 %v2516, %v2586
        %v2594 = vsub.f32 %v2517, %v2586
        %v2595 = vsub.f32 %v2518, %v2586
        %v2596 = vsub.f32 %v2519, %v2586
        %v2597 = vsub.f32 %v2520, %v2586
        %v2598 = vsub.f32 %v2521, %v2586
        %v2599 = vsub.f32 %v2522, %v2586
        %v2600 = vsub.f32 %v2523, %v2586
        %v2601 = vsub.f32 %v2524, %v2586
        %v2602 = vsub.f32 %v2525, %v2586
        %v2603 = vsub.f32 %v2526, %v2586
        %v2604 = vsub.f32 %v2527, %v2586
        %v2605 = vsub.f32 %v2528, %v2586
        %v2606 = vsub.f32 %v2529, %v2586
        %v2607 = vsub.f32 %v2530, %v2586
        %v2608 = vsub.f32 %v2531, %v2586
        %v2609 = vsub.f32 %v2532, %v2586
        %v2610 = vsub.f32 %v2533, %v2586
        %v2611 = vsub.f32 %v2534, %v2586
        %v2612 = vsub.f32 %v2535, %v2586
        %v2613 = vsub.f32 %v2536, %v2586
        %v2614 = vsub.f32 %v2537, %v2586
        %v2615 = vsub.f32 %v2538, %v2586
        %v2616 = vsub.f32 %v2539, %v2586
        %v2617 = vsub.f32 %v2540, %v2586
        %v2618 = vsub.f32 %v2541, %v2586
        %v2619 = vmul.f32 %v2587, %v2587
        %v2620 = vmul.f32 %v2588, %v2588
        %v2621 = vmul.f32 %v2589, %v2589
        %v2622 = vmul.f32 %v2590, %v2590
        %v2623 = vmul.f32 %v2591, %v2591
        %v2624 = vmul.f32 %v2592, %v2592
        %v2625 = vmul.f32 %v2593, %v2593
        %v2626 = vmul.f32 %v2594, %v2594
        %v2627 = vmul.f32 %v2595, %v2595
        %v2628 = vmul.f32 %v2596, %v2596
        %v2629 = vmul.f32 %v2597, %v2597
        %v2630 = vmul.f32 %v2598, %v2598
        %v2631 = vmul.f32 %v2599, %v2599
        %v2632 = vmul.f32 %v2600, %v2600
        %v2633 = vmul.f32 %v2601, %v2601
        %v2634 = vmul.f32 %v2602, %v2602
        %v2635 = vmul.f32 %v2603, %v2603
        %v2636 = vmul.f32 %v2604, %v2604
        %v2637 = vmul.f32 %v2605, %v2605
        %v2638 = vmul.f32 %v2606, %v2606
        %v2639 = vmul.f32 %v2607, %v2607
        %v2640 = vmul.f32 %v2608, %v2608
        %v2641 = vmul.f32 %v2609, %v2609
        %v2642 = vmul.f32 %v2610, %v2610
        %v2643 = vmul.f32 %v2611, %v2611
        %v2644 = vmul.f32 %v2612, %v2612
        %v2645 = vmul.f32 %v2613, %v2613
        %v2646 = vmul.f32 %v2614, %v2614
        %v2647 = vmul.f32 %v2615, %v2615
        %v2648 = vmul.f32 %v2616, %v2616
        %v2649 = vmul.f32 %v2617, %v2617
        %v2650 = vmul.f32 %v2618, %v2618
        %v2651 = vadd.f32 %v2619, %v2620
        %v2652 = vadd.f32 %v2651, %v2621
        %v2653 = vadd.f32 %v2652, %v2622
        %v2654 = vadd.f32 %v2653, %v2623
        %v2655 = vadd.f32 %v2654, %v2624
        %v2656 = vadd.f32 %v2655, %v2625
        %v2657 = vadd.f32 %v2656, %v2626
        %v2658 = vadd.f32 %v2657, %v2627
        %v2659 = vadd.f32 %v2658, %v2628
        %v2660 = vadd.f32 %v2659, %v2629
        %v2661 = vadd.f32 %v2660, %v2630
        %v2662 = vadd.f32 %v2661, %v2631
        %v2663 = vadd.f32 %v2662, %v2632
        %v2664 = vadd.f32 %v2663, %v2633
        %v2665 = vadd.f32 %v2664, %v2634
        %v2666 = vadd.f32 %v2665, %v2635
        %v2667 = vadd.f32 %v2666, %v2636
        %v2668 = vadd.f32 %v2667, %v2637
        %v2669 = vadd.f32 %v2668, %v2638
        %v2670 = vadd.f32 %v2669, %v2639
        %v2671 = vadd.f32 %v2670, %v2640
        %v2672 = vadd.f32 %v2671, %v2641
        %v2673 = vadd.f32 %v2672, %v2642
        %v2674 = vadd.f32 %v2673, %v2643
        %v2675 = vadd.f32 %v2674, %v2644
        %v2676 = vadd.f32 %v2675, %v2645
        %v2677 = vadd.f32 %v2676, %v2646
        %v2678 = vadd.f32 %v2677, %v2647
        %v2679 = vadd.f32 %v2678, %v2648
        %v2680 = vadd.f32 %v2679, %v2649
        %v2681 = vadd.f32 %v2680, %v2650
        %v2682 = vrot.slane %v2681, 4
        %v2683 = vadd.f32 %v2681, %v2682
        %v2684 = vrot.slane %v2683, 2
        %v2685 = vadd.f32 %v2683, %v2684
        %v2686 = vrot.slane %v2685, 1
        %v2687 = vadd.f32 %v2685, %v2686
        %v2688 = vmul.f32 %v2687, %v2585
        %v2689 = vadd.f32 %v2688, 1e-05
        %v2690 = vrsqrt.pop %v2689
        %v2691 = vmul.f32 %v2690, %v2689
        %v2692 = vmul.f32 %v2691, %v2690
        %v2693 = vmul.f32 0.5, %v2692
        %v2694 = vsub.f32 1.5, %v2693
        %v2695 = vmul.f32 %v2690, %v2694
        %vm2696 = vweird.f32 %v2689
        %vm2697 = vweird.f32 %v2690
        %vm2698 = vmor %vm2696, %vm2697
        %v2699 = vsel %vm2698, %v2690, %v2695
        %v2700 = vmul.f32 %v2587, %v2699
        %v2701 = vmul.f32 %v2588, %v2699
        %v2702 = vmul.f32 %v2589, %v2699
        %v2703 = vmul.f32 %v2590, %v2699
        %v2704 = vmul.f32 %v2591, %v2699
        %v2705 = vmul.f32 %v2592, %v2699
        %v2706 = vmul.f32 %v2593, %v2699
        %v2707 = vmul.f32 %v2594, %v2699
        %v2708 = vmul.f32 %v2595, %v2699
        %v2709 = vmul.f32 %v2596, %v2699
        %v2710 = vmul.f32 %v2597, %v2699
        %v2711 = vmul.f32 %v2598, %v2699
        %v2712 = vmul.f32 %v2599, %v2699
        %v2713 = vmul.f32 %v2600, %v2699
        %v2714 = vmul.f32 %v2601, %v2699
        %v2715 = vmul.f32 %v2602, %v2699
        %v2716 = vmul.f32 %v2603, %v2699
        %v2717 = vmul.f32 %v2604, %v2699
        %v2718 = vmul.f32 %v2605, %v2699
        %v2719 = vmul.f32 %v2606, %v2699
        %v2720 = vmul.f32 %v2607, %v2699
        %v2721 = vmul.f32 %v2608, %v2699
        %v2722 = vmul.f32 %v2609, %v2699
        %v2723 = vmul.f32 %v2610, %v2699
        %v2724 = vmul.f32 %v2611, %v2699
        %v2725 = vmul.f32 %v2612, %v2699
        %v2726 = vmul.f32 %v2613, %v2699
        %v2727 = vmul.f32 %v2614, %v2699
        %v2728 = vmul.f32 %v2615, %v2699
        %v2729 = vmul.f32 %v2616, %v2699
        %v2730 = vmul.f32 %v2617, %v2699
        %v2731 = vmul.f32 %v2618, %v2699
        %v2732 = vmax.f32 %v2700, 0.0
        %v2733 = vmax.f32 %v2701, 0.0
        %v2734 = vmax.f32 %v2702, 0.0
        %v2735 = vmax.f32 %v2703, 0.0
        %v2736 = vmax.f32 %v2704, 0.0
        %v2737 = vmax.f32 %v2705, 0.0
        %v2738 = vmax.f32 %v2706, 0.0
        %v2739 = vmax.f32 %v2707, 0.0
        %v2740 = vmax.f32 %v2708, 0.0
        %v2741 = vmax.f32 %v2709, 0.0
        %v2742 = vmax.f32 %v2710, 0.0
        %v2743 = vmax.f32 %v2711, 0.0
        %v2744 = vmax.f32 %v2712, 0.0
        %v2745 = vmax.f32 %v2713, 0.0
        %v2746 = vmax.f32 %v2714, 0.0
        %v2747 = vmax.f32 %v2715, 0.0
        %v2748 = vmax.f32 %v2716, 0.0
        %v2749 = vmax.f32 %v2717, 0.0
        %v2750 = vmax.f32 %v2718, 0.0
        %v2751 = vmax.f32 %v2719, 0.0
        %v2752 = vmax.f32 %v2720, 0.0
        %v2753 = vmax.f32 %v2721, 0.0
        %v2754 = vmax.f32 %v2722, 0.0
        %v2755 = vmax.f32 %v2723, 0.0
        %v2756 = vmax.f32 %v2724, 0.0
        %v2757 = vmax.f32 %v2725, 0.0
        %v2758 = vmax.f32 %v2726, 0.0
        %v2759 = vmax.f32 %v2727, 0.0
        %v2760 = vmax.f32 %v2728, 0.0
        %v2761 = vmax.f32 %v2729, 0.0
        %v2762 = vmax.f32 %v2730, 0.0
        %v2763 = vmax.f32 %v2731, 0.0
        %s2764 = scalar_select %p289, 1, 0
        %v2765 = vstv %s2764
        %vm2766 = vcmp.eq.s32.totalorder %v2765, 1
        %v2767 = vsel %vm2766, %v2732, %v2700
        %v2768 = vsel %vm2766, %v2733, %v2701
        %v2769 = vsel %vm2766, %v2734, %v2702
        %v2770 = vsel %vm2766, %v2735, %v2703
        %v2771 = vsel %vm2766, %v2736, %v2704
        %v2772 = vsel %vm2766, %v2737, %v2705
        %v2773 = vsel %vm2766, %v2738, %v2706
        %v2774 = vsel %vm2766, %v2739, %v2707
        %v2775 = vsel %vm2766, %v2740, %v2708
        %v2776 = vsel %vm2766, %v2741, %v2709
        %v2777 = vsel %vm2766, %v2742, %v2710
        %v2778 = vsel %vm2766, %v2743, %v2711
        %v2779 = vsel %vm2766, %v2744, %v2712
        %v2780 = vsel %vm2766, %v2745, %v2713
        %v2781 = vsel %vm2766, %v2746, %v2714
        %v2782 = vsel %vm2766, %v2747, %v2715
        %v2783 = vsel %vm2766, %v2748, %v2716
        %v2784 = vsel %vm2766, %v2749, %v2717
        %v2785 = vsel %vm2766, %v2750, %v2718
        %v2786 = vsel %vm2766, %v2751, %v2719
        %v2787 = vsel %vm2766, %v2752, %v2720
        %v2788 = vsel %vm2766, %v2753, %v2721
        %v2789 = vsel %vm2766, %v2754, %v2722
        %v2790 = vsel %vm2766, %v2755, %v2723
        %v2791 = vsel %vm2766, %v2756, %v2724
        %v2792 = vsel %vm2766, %v2757, %v2725
        %v2793 = vsel %vm2766, %v2758, %v2726
        %v2794 = vsel %vm2766, %v2759, %v2727
        %v2795 = vsel %vm2766, %v2760, %v2728
        %v2796 = vsel %vm2766, %v2761, %v2729
        %v2797 = vsel %vm2766, %v2762, %v2730
        %v2798 = vsel %vm2766, %v2763, %v2731
        // Predicated region
        $region49: #{tpu_custom_call.1} parent=31 // pred_check
          %p2799 = pneg %p289
        $region50: #{tpu_custom_call.1} parent=31 // pred_check_branch
          %2801 = sbr.rel (%p2799) target = $region52
        $region51: #{tpu_custom_call.1} parent=31 // pred_region
          %2802 = vst [vmem:[%s1100 + $0x8] sm:$0xff] %v2767
          %2803 = vst [vmem:[%s1100 + $0x10] sm:$0xff] %v2768
          %2804 = vst [vmem:[%s1100 + $0x28] sm:$0xff] %v2769
          %2805 = vst [vmem:[%s1100 + $0x30] sm:$0xff] %v2770
          %2806 = vst [vmem:[%s1100 + $0x48] sm:$0xff] %v2771
          %2807 = vst [vmem:[%s1100 + $0x50] sm:$0xff] %v2772
          %2808 = vst [vmem:[%s1100 + $0x68] sm:$0xff] %v2773
          %2809 = vst [vmem:[%s1100 + $0x70] sm:$0xff] %v2774
          %2810 = vst [vmem:[%s1100 + $0x88] sm:$0xff] %v2775
          %2811 = vst [vmem:[%s1100 + $0x90] sm:$0xff] %v2776
          %2812 = vst [vmem:[%s1100 + $0xa8] sm:$0xff] %v2777
          %2813 = vst [vmem:[%s1100 + $0xb0] sm:$0xff] %v2778
          %2814 = vst [vmem:[%s1100 + $0xc8] sm:$0xff] %v2779
          %2815 = vst [vmem:[%s1100 + $0xd0] sm:$0xff] %v2780
          %2816 = vst [vmem:[%s1100 + $0xe8] sm:$0xff] %v2781
          %2817 = vst [vmem:[%s1100 + $0xf0] sm:$0xff] %v2782
          %2818 = vst [vmem:[%s1100 + $0x108] sm:$0xff] %v2783
          %2819 = vst [vmem:[%s1100 + $0x110] sm:$0xff] %v2784
          %2820 = vst [vmem:[%s1100 + $0x128] sm:$0xff] %v2785
          %2821 = vst [vmem:[%s1100 + $0x130] sm:$0xff] %v2786
          %2822 = vst [vmem:[%s1100 + $0x148] sm:$0xff] %v2787
          %2823 = vst [vmem:[%s1100 + $0x150] sm:$0xff] %v2788
          %2824 = vst [vmem:[%s1100 + $0x168] sm:$0xff] %v2789
          %2825 = vst [vmem:[%s1100 + $0x170] sm:$0xff] %v2790
          %2826 = vst [vmem:[%s1100 + $0x188] sm:$0xff] %v2791
          %2827 = vst [vmem:[%s1100 + $0x190] sm:$0xff] %v2792
          %2828 = vst [vmem:[%s1100 + $0x1a8] sm:$0xff] %v2793
          %2829 = vst [vmem:[%s1100 + $0x1b0] sm:$0xff] %v2794
          %2830 = vst [vmem:[%s1100 + $0x1c8] sm:$0xff] %v2795
          %2831 = vst [vmem:[%s1100 + $0x1d0] sm:$0xff] %v2796
          %2832 = vst [vmem:[%s1100 + $0x1e8] sm:$0xff] %v2797
          %2833 = vst [vmem:[%s1100 + $0x1f0] sm:$0xff] %v2798
        $region52: #{tpu_custom_call.1} parent=31 // pred_fallthru
          _
        %p2834 = scmp.ne.s32.totalorder %s288, 0
        // Predicated region
        $region53: #{tpu_custom_call.1} parent=31 // pred_check
          %p2835 = pneg %p2834
        $region54: #{tpu_custom_call.1} parent=31 // pred_check_branch
          %2837 = sbr.rel (%p2835) target = $region56
        $region55: #{tpu_custom_call.1} parent=31 // pred_region
          %v2838 = vld [vmem:[#allocation3] sm:$0xff]
          %v2839 = vld [vmem:[#allocation3 + $0x8] sm:$0xff]
          %v2840 = vld [vmem:[#allocation3 + $0x10] sm:$0xff]
          %v2841 = vld [vmem:[#allocation3 + $0x18] sm:$0xff]
          %v2842 = vld [vmem:[#allocation3 + $0x20] sm:$0xff]
          %v2843 = vld [vmem:[#allocation3 + $0x28] sm:$0xff]
          %v2844 = vld [vmem:[#allocation3 + $0x30] sm:$0xff]
          %v2845 = vld [vmem:[#allocation3 + $0x38] sm:$0xff]
          %v2846 = vld [vmem:[#allocation3 + $0x40] sm:$0xff]
          %v2847 = vld [vmem:[#allocation3 + $0x48] sm:$0xff]
          %v2848 = vld [vmem:[#allocation3 + $0x50] sm:$0xff]
          %v2849 = vld [vmem:[#allocation3 + $0x58] sm:$0xff]
          %v2850 = vld [vmem:[#allocation3 + $0x60] sm:$0xff]
          %v2851 = vld [vmem:[#allocation3 + $0x68] sm:$0xff]
          %v2852 = vld [vmem:[#allocation3 + $0x70] sm:$0xff]
          %v2853 = vld [vmem:[#allocation3 + $0x78] sm:$0xff]
          %v2854 = vld [vmem:[#allocation3 + $0x80] sm:$0xff]
          %v2855 = vld [vmem:[#allocation3 + $0x88] sm:$0xff]
          %v2856 = vld [vmem:[#allocation3 + $0x90] sm:$0xff]
          %v2857 = vld [vmem:[#allocation3 + $0x98] sm:$0xff]
          %v2858 = vld [vmem:[#allocation3 + $0xa0] sm:$0xff]
          %v2859 = vld [vmem:[#allocation3 + $0xa8] sm:$0xff]
          %v2860 = vld [vmem:[#allocation3 + $0xb0] sm:$0xff]
          %v2861 = vld [vmem:[#allocation3 + $0xb8] sm:$0xff]
          %v2862 = vld [vmem:[#allocation3 + $0xc0] sm:$0xff]
          %v2863 = vld [vmem:[#allocation3 + $0xc8] sm:$0xff]
          %v2864 = vld [vmem:[#allocation3 + $0xd0] sm:$0xff]
          %v2865 = vld [vmem:[#allocation3 + $0xd8] sm:$0xff]
          %v2866 = vld [vmem:[#allocation3 + $0xe0] sm:$0xff]
          %v2867 = vld [vmem:[#allocation3 + $0xe8] sm:$0xff]
          %v2868 = vld [vmem:[#allocation3 + $0xf0] sm:$0xff]
          %v2869 = vld [vmem:[#allocation3 + $0xf8] sm:$0xff]
          %v2870 = vadd.f32 %v2838, %v2767
          %v2871 = vadd.f32 %v2839, %v2768
          %v2872 = vadd.f32 %v2840, %v2769
          %v2873 = vadd.f32 %v2841, %v2770
          %v2874 = vadd.f32 %v2842, %v2771
          %v2875 = vadd.f32 %v2843, %v2772
          %v2876 = vadd.f32 %v2844, %v2773
          %v2877 = vadd.f32 %v2845, %v2774
          %v2878 = vadd.f32 %v2846, %v2775
          %v2879 = vadd.f32 %v2847, %v2776
          %v2880 = vadd.f32 %v2848, %v2777
          %v2881 = vadd.f32 %v2849, %v2778
          %v2882 = vadd.f32 %v2850, %v2779
          %v2883 = vadd.f32 %v2851, %v2780
          %v2884 = vadd.f32 %v2852, %v2781
          %v2885 = vadd.f32 %v2853, %v2782
          %v2886 = vadd.f32 %v2854, %v2783
          %v2887 = vadd.f32 %v2855, %v2784
          %v2888 = vadd.f32 %v2856, %v2785
          %v2889 = vadd.f32 %v2857, %v2786
          %v2890 = vadd.f32 %v2858, %v2787
          %v2891 = vadd.f32 %v2859, %v2788
          %v2892 = vadd.f32 %v2860, %v2789
          %v2893 = vadd.f32 %v2861, %v2790
          %v2894 = vadd.f32 %v2862, %v2791
          %v2895 = vadd.f32 %v2863, %v2792
          %v2896 = vadd.f32 %v2864, %v2793
          %v2897 = vadd.f32 %v2865, %v2794
          %v2898 = vadd.f32 %v2866, %v2795
          %v2899 = vadd.f32 %v2867, %v2796
          %v2900 = vadd.f32 %v2868, %v2797
          %v2901 = vadd.f32 %v2869, %v2798
          %2902 = vst [vmem:[#allocation3] sm:$0xff] %v2870
          %2903 = vst [vmem:[#allocation3 + $0x8] sm:$0xff] %v2871
          %2904 = vst [vmem:[#allocation3 + $0x10] sm:$0xff] %v2872
          %2905 = vst [vmem:[#allocation3 + $0x18] sm:$0xff] %v2873
          %2906 = vst [vmem:[#allocation3 + $0x20] sm:$0xff] %v2874
          %2907 = vst [vmem:[#allocation3 + $0x28] sm:$0xff] %v2875
          %2908 = vst [vmem:[#allocation3 + $0x30] sm:$0xff] %v2876
          %2909 = vst [vmem:[#allocation3 + $0x38] sm:$0xff] %v2877
          %2910 = vst [vmem:[#allocation3 + $0x40] sm:$0xff] %v2878
          %2911 = vst [vmem:[#allocation3 + $0x48] sm:$0xff] %v2879
          %2912 = vst [vmem:[#allocation3 + $0x50] sm:$0xff] %v2880
          %2913 = vst [vmem:[#allocation3 + $0x58] sm:$0xff] %v2881
          %2914 = vst [vmem:[#allocation3 + $0x60] sm:$0xff] %v2882
          %2915 = vst [vmem:[#allocation3 + $0x68] sm:$0xff] %v2883
          %2916 = vst [vmem:[#allocation3 + $0x70] sm:$0xff] %v2884
          %2917 = vst [vmem:[#allocation3 + $0x78] sm:$0xff] %v2885
          %2918 = vst [vmem:[#allocation3 + $0x80] sm:$0xff] %v2886
          %2919 = vst [vmem:[#allocation3 + $0x88] sm:$0xff] %v2887
          %2920 = vst [vmem:[#allocation3 + $0x90] sm:$0xff] %v2888
          %2921 = vst [vmem:[#allocation3 + $0x98] sm:$0xff] %v2889
          %2922 = vst [vmem:[#allocation3 + $0xa0] sm:$0xff] %v2890
          %2923 = vst [vmem:[#allocation3 + $0xa8] sm:$0xff] %v2891
          %2924 = vst [vmem:[#allocation3 + $0xb0] sm:$0xff] %v2892
          %2925 = vst [vmem:[#allocation3 + $0xb8] sm:$0xff] %v2893
          %2926 = vst [vmem:[#allocation3 + $0xc0] sm:$0xff] %v2894
          %2927 = vst [vmem:[#allocation3 + $0xc8] sm:$0xff] %v2895
          %2928 = vst [vmem:[#allocation3 + $0xd0] sm:$0xff] %v2896
          %2929 = vst [vmem:[#allocation3 + $0xd8] sm:$0xff] %v2897
          %2930 = vst [vmem:[#allocation3 + $0xe0] sm:$0xff] %v2898
          %2931 = vst [vmem:[#allocation3 + $0xe8] sm:$0xff] %v2899
          %2932 = vst [vmem:[#allocation3 + $0xf0] sm:$0xff] %v2900
          %2933 = vst [vmem:[#allocation3 + $0xf8] sm:$0xff] %v2901
          %2934 = vst [vmem:[%s1100 + $0x8] sm:$0xff] %v2870
          %2935 = vst [vmem:[%s1100 + $0x10] sm:$0xff] %v2871
          %2936 = vst [vmem:[%s1100 + $0x28] sm:$0xff] %v2872
          %2937 = vst [vmem:[%s1100 + $0x30] sm:$0xff] %v2873
          %2938 = vst [vmem:[%s1100 + $0x48] sm:$0xff] %v2874
          %2939 = vst [vmem:[%s1100 + $0x50] sm:$0xff] %v2875
          %2940 = vst [vmem:[%s1100 + $0x68] sm:$0xff] %v2876
          %2941 = vst [vmem:[%s1100 + $0x70] sm:$0xff] %v2877
          %2942 = vst [vmem:[%s1100 + $0x88] sm:$0xff] %v2878
          %2943 = vst [vmem:[%s1100 + $0x90] sm:$0xff] %v2879
          %2944 = vst [vmem:[%s1100 + $0xa8] sm:$0xff] %v2880
          %2945 = vst [vmem:[%s1100 + $0xb0] sm:$0xff] %v2881
          %2946 = vst [vmem:[%s1100 + $0xc8] sm:$0xff] %v2882
          %2947 = vst [vmem:[%s1100 + $0xd0] sm:$0xff] %v2883
          %2948 = vst [vmem:[%s1100 + $0xe8] sm:$0xff] %v2884
          %2949 = vst [vmem:[%s1100 + $0xf0] sm:$0xff] %v2885
          %2950 = vst [vmem:[%s1100 + $0x108] sm:$0xff] %v2886
          %2951 = vst [vmem:[%s1100 + $0x110] sm:$0xff] %v2887
          %2952 = vst [vmem:[%s1100 + $0x128] sm:$0xff] %v2888
          %2953 = vst [vmem:[%s1100 + $0x130] sm:$0xff] %v2889
          %2954 = vst [vmem:[%s1100 + $0x148] sm:$0xff] %v2890
          %2955 = vst [vmem:[%s1100 + $0x150] sm:$0xff] %v2891
          %2956 = vst [vmem:[%s1100 + $0x168] sm:$0xff] %v2892
          %2957 = vst [vmem:[%s1100 + $0x170] sm:$0xff] %v2893
          %2958 = vst [vmem:[%s1100 + $0x188] sm:$0xff] %v2894
          %2959 = vst [vmem:[%s1100 + $0x190] sm:$0xff] %v2895
          %2960 = vst [vmem:[%s1100 + $0x1a8] sm:$0xff] %v2896
          %2961 = vst [vmem:[%s1100 + $0x1b0] sm:$0xff] %v2897
          %2962 = vst [vmem:[%s1100 + $0x1c8] sm:$0xff] %v2898
          %2963 = vst [vmem:[%s1100 + $0x1d0] sm:$0xff] %v2899
          %2964 = vst [vmem:[%s1100 + $0x1e8] sm:$0xff] %v2900
          %2965 = vst [vmem:[%s1100 + $0x1f0] sm:$0xff] %v2901
          %p2966 = scmp.eq.s32.totalorder %s28, 3
          // Predicated region
          $region57: #{tpu_custom_call.1} parent=55 // pred_check
            %p2967 = pneg %p2966
          $region58: #{tpu_custom_call.1} parent=55 // pred_check_branch
            %2969 = sbr.rel (%p2967) target = $region60
          $region59: #{tpu_custom_call.1} parent=55 // pred_region
            %2970 = vst [vmem:[%s276] sm:$0xff] %v2870
            %2971 = vst [vmem:[%s276 + $0x8] sm:$0xff] %v2871
            %2972 = vst [vmem:[%s276 + $0x10] sm:$0xff] %v2872
            %2973 = vst [vmem:[%s276 + $0x18] sm:$0xff] %v2873
            %2974 = vst [vmem:[%s276 + $0x20] sm:$0xff] %v2874
            %2975 = vst [vmem:[%s276 + $0x28] sm:$0xff] %v2875
            %2976 = vst [vmem:[%s276 + $0x30] sm:$0xff] %v2876
            %2977 = vst [vmem:[%s276 + $0x38] sm:$0xff] %v2877
            %2978 = vst [vmem:[%s276 + $0x40] sm:$0xff] %v2878
            %2979 = vst [vmem:[%s276 + $0x48] sm:$0xff] %v2879
            %2980 = vst [vmem:[%s276 + $0x50] sm:$0xff] %v2880
            %2981 = vst [vmem:[%s276 + $0x58] sm:$0xff] %v2881
            %2982 = vst [vmem:[%s276 + $0x60] sm:$0xff] %v2882
            %2983 = vst [vmem:[%s276 + $0x68] sm:$0xff] %v2883
            %2984 = vst [vmem:[%s276 + $0x70] sm:$0xff] %v2884
            %2985 = vst [vmem:[%s276 + $0x78] sm:$0xff] %v2885
            %2986 = vst [vmem:[%s276 + $0x80] sm:$0xff] %v2886
            %2987 = vst [vmem:[%s276 + $0x88] sm:$0xff] %v2887
            %2988 = vst [vmem:[%s276 + $0x90] sm:$0xff] %v2888
            %2989 = vst [vmem:[%s276 + $0x98] sm:$0xff] %v2889
            %2990 = vst [vmem:[%s276 + $0xa0] sm:$0xff] %v2890
            %2991 = vst [vmem:[%s276 + $0xa8] sm:$0xff] %v2891
            %2992 = vst [vmem:[%s276 + $0xb0] sm:$0xff] %v2892
            %2993 = vst [vmem:[%s276 + $0xb8] sm:$0xff] %v2893
            %2994 = vst [vmem:[%s276 + $0xc0] sm:$0xff] %v2894
            %2995 = vst [vmem:[%s276 + $0xc8] sm:$0xff] %v2895
            %2996 = vst [vmem:[%s276 + $0xd0] sm:$0xff] %v2896
            %2997 = vst [vmem:[%s276 + $0xd8] sm:$0xff] %v2897
            %2998 = vst [vmem:[%s276 + $0xe0] sm:$0xff] %v2898
            %2999 = vst [vmem:[%s276 + $0xe8] sm:$0xff] %v2899
            %3000 = vst [vmem:[%s276 + $0xf0] sm:$0xff] %v2900
            %3001 = vst [vmem:[%s276 + $0xf8] sm:$0xff] %v2901
          $region60: #{tpu_custom_call.1} parent=55 // pred_fallthru
            _
        $region56: #{tpu_custom_call.1} parent=31 // pred_fallthru
          _
        %s3002 = sand.u32 %s121, 1
        %s3003 = scalar_lea.sflag [#allocation6], %s3002
        %s3004 = sand.u32 %s121, 1
        %s3005 = smul.addr %s3004, 256
        %s3006 = scalar_lea.vmem [#allocation10], %s3005
        // Predicated region
        $region61: #{tpu_custom_call.1} parent=31 // pred_check
          %p3007 = pneg %p131
        $region62: #{tpu_custom_call.1} parent=31 // pred_check_branch
          %3009 = sbr.rel (%p3007) target = $region64
        $region63: #{tpu_custom_call.1} parent=31 // pred_region
          %3011 = vsyncadd %s3003, 0
          %s3012 = smul.addr %s27, 32
          %s3013 = smul.addr %s3012, 8
          %s3014 = scalar_lea.hbm %s3, %s3013
          %s3015 = sshll.u32 %s3006, 4
          %s3016 = int_to_ptr.vmem [resolvable:$true] %s3015
          %s3017 = sshll.u32 %s3014, 4
          %s3018 = int_to_ptr.hbm [resolvable:$true] %s3017
          %3023 = dma.vmem_to_hbm [thread:$0]  %s3016, 4096, %s3018, %s3003, 128, 128, 8
        $region64: #{tpu_custom_call.1} parent=31 // pred_fallthru
          _
      $region32: #{tpu_custom_call.1} parent=5 // pred_fallthru
        _
      %p3024 = scmp.le.s32.totalorder 2, %s18
      // Predicated region
      $region65: #{tpu_custom_call.1} parent=5 // pred_check
        %p3025 = pneg %p3024
      $region66: #{tpu_custom_call.1} parent=5 // pred_check_branch
        %3027 = sbr.rel (%p3025) target = $region68
      $region67: #{tpu_custom_call.1} parent=5 // pred_region
        %s3028 = ssub.s32 %s18, 2
        // Predicated region
        $region69: #{tpu_custom_call.1} parent=67 // pred_check
          %p3029 = pneg %p137
        $region70: #{tpu_custom_call.1} parent=67 // pred_check_branch
          %3031 = sbr.rel (%p3029) target = $region72
        $region71: #{tpu_custom_call.1} parent=67 // pred_region
          %s3032 = sand.u32 %s122, 1
          %s3033 = scalar_lea.sflag [#allocation6], %s3032
          %s3034 = sand.u32 %s122, 1
          %s3035 = smul.addr %s3034, 256
          %s3036 = scalar_lea.vmem [#allocation10], %s3035
          %3038 = dma.done %s3033, 4096
        $region72: #{tpu_custom_call.1} parent=67 // pred_fallthru
          _
      $region68: #{tpu_custom_call.1} parent=5 // pred_fallthru
        _
    $region6: #{tpu_custom_call.1} parent=1 // loop_footer
      %s22 = sadd.s32 1, %s18
    $region7: #{tpu_custom_call.1} parent=1 // loop_footer_branch
      %17 = sbr.rel target = $region3
    $region8: #{tpu_custom_call.1} parent=1 // loop_exit
      _
    %3039 = vsyncpa [#allocation5], 1
    %s3040 = scalar_lea.sflag [#allocation5], 1
    %3041 = vsyncpa %s3040, 1
    %3042 = vsyncpa [#allocation8], 1
    %s3043 = scalar_lea.sflag [#allocation8], 1
    %3044 = vsyncpa %s3043, 1
    %3045 = vsyncpa [#allocation6], 1
    %s3046 = scalar_lea.sflag [#allocation6], 1
    %3047 = vsyncpa %s3046, 1

</llo_original>
